<compile_context>
chip_gen: v7x
topology: tpu7x:2x2x1
jax: 0.10.0
libtpu: 0.0.40
codegen_flags: <defaults>
</compile_context>

<pallas_src>
import jax
import jax.numpy as jnp
from jax import lax
from jax.experimental import pallas as pl
from jax.experimental.pallas import tpu as pltpu


def _pick_seq_tile(seq_len: int, max_tile: int = 512) -> int:
    """Largest tile TS with S % TS == 0 and (TS % 8 == 0 or TS == S)."""
    if seq_len <= max_tile:
        return seq_len
    start = max_tile - (max_tile % 8)
    for ts in range(start, 7, -8):
        if seq_len % ts == 0:
            return ts
    return seq_len


def _vmem_capacity_bytes() -> int:
    """Generation-aware VMEM capacity (128 MiB v5e/v6e, 64 MiB per-TC v7x)."""
    try:
        return int(pltpu.get_tpu_info().vmem_capacity_bytes)
    except Exception:
        return 64 << 20  # conservative fallback (v7x per-TensorCore budget)


def _embed_kernel(ids_ref, word_ref, pos_ref, out_ref):
    """One grid step produces a lane/sublane-dense (TS, Dpad) output tile.

    ids_ref : SMEM [B*S] int32   (scalar prefetch, flat -> no 2-D SMEM padding)
    word_ref: VMEM [V, Dpad]     (whole word table, resident, fetched once)
    pos_ref : VMEM [TS, Dpad]    (per-step positional slice, auto-pipelined)
    out_ref : VMEM [1, TS, Dpad]
    """
    b = pl.program_id(0)
    sc = pl.program_id(1)
    ts = out_ref.shape[1]
    seq_len = pl.num_programs(1) * ts
    base = b * seq_len + sc * ts

    num_groups = ts // 8
    rem = ts - num_groups * 8

    def gather_group(g, carry):
        # Gather 8 rows, assemble one (8, Dpad) block, add pos, then issue a
        # single aligned store instead of 8 masked single-sublane stores.
        g0 = pl.multiple_of(g * 8, 8)
        rows = [word_ref[pl.ds(ids_ref[base + g0 + j], 1), :] for j in range(8)]
        block = jnp.concatenate(rows, axis=0)
        out_ref[0, pl.ds(g0, 8), :] = block + pos_ref[pl.ds(g0, 8), :]
        return carry

    if num_groups > 0:
        # Unroll so the scheduler can overlap the independent sld/vld chains.
        unroll = True if num_groups <= 16 else 8
        lax.fori_loop(0, num_groups, gather_group, 0, unroll=unroll)

    # Remainder rows when TS is not a multiple of 8 (static, usually empty).
    for j in range(rem):
        t = num_groups * 8 + j
        tok = ids_ref[base + t]
        out_ref[0, pl.ds(t, 1), :] = (
            word_ref[pl.ds(tok, 1), :] + pos_ref[pl.ds(t, 1), :]
        )


def main_embedding(ids, word_emb, pos_emb):
    """ids: [B, S] int; word_emb: [V, D]; pos_emb: [L, D] with L == S."""
    B, S = ids.shape
    V, D = word_emb.shape
    L, Dp = pos_emb.shape
    assert D == Dp and L == S, "forward requires seq_len == max_seq_length"

    # Match jnp/PyTorch dtype promotion of word_emb(x) + pos_emb(...).
    out_dtype = jnp.result_type(word_emb.dtype, pos_emb.dtype)
    word_emb = word_emb.astype(out_dtype)
    pos_emb = pos_emb.astype(out_dtype)

    # Lane-dense layout: pad D to a multiple of 128 (sliced back off below).
    Dpad = ((D + 127) // 128) * 128
    if Dpad != D:
        word_emb = jnp.pad(word_emb, ((0, 0), (0, Dpad - D)))
        pos_emb = jnp.pad(pos_emb, ((0, 0), (0, Dpad - D)))

    TS = _pick_seq_tile(S)
    num_chunks = S // TS

    # Flat 1-D ids for SMEM; clamp guards untrusted out-of-range ids (PyTorch
    # nn.Embedding would raise instead -- documented behavioural difference).
    ids_flat = jnp.clip(ids.astype(jnp.int32), 0, V - 1).reshape(B * S)

    itemsize = jnp.dtype(out_dtype).itemsize
    vmem_cap = _vmem_capacity_bytes()

    def vmem_needed(word_bufs):
        return (
            word_bufs * V * Dpad      # resident word table
            + 2 * TS * Dpad           # double-buffered positional slice
            + 2 * TS * Dpad           # double-buffered output tile
        ) * itemsize + (2 << 20)

    if vmem_needed(1) > vmem_cap - (4 << 20):
        # TODO(synk): implement HBM-resident word table + manual per-row DMA
        # gather for vocab tables that do not fit VMEM (esp. v7x 64 MiB/TC).
        raise NotImplementedError(
            "word-embedding table does not fit in VMEM; HBM-gather path not "
            "implemented"
        )

    cost = pl.CostEstimate(
        flops=B * S * Dpad,  # one add per output element
        transcendentals=0,
        bytes_accessed=(2 * B * S * Dpad + V * Dpad + S * Dpad) * itemsize
        + B * S * 4,
    )

    def build(word_pipeline_mode, word_bufs):
        word_idx = lambda b, sc, ids_ref: (0, 0)
        if word_pipeline_mode is None:
            word_spec = pl.BlockSpec((V, Dpad), word_idx)
        else:
            word_spec = pl.BlockSpec(
                (V, Dpad), word_idx, pipeline_mode=word_pipeline_mode
            )
        grid_spec = pltpu.PrefetchScalarGridSpec(
            num_scalar_prefetch=1,  # flat token ids land in SMEM before the grid
            grid=(B, num_chunks),
            in_specs=[
                # Whole word table, constant block index -> DMA'd once, resident.
                word_spec,
                # Per-step positional slice (no resident S*Dpad copy needed).
                pl.BlockSpec((TS, Dpad), lambda b, sc, ids_ref: (sc, 0)),
            ],
            out_specs=pl.BlockSpec(
                (1, TS, Dpad), lambda b, sc, ids_ref: (b, sc, 0)
            ),
        )
        vmem_limit = int(
            min(max(vmem_needed(word_bufs), 16 << 20), vmem_cap - (4 << 20))
        )
        return pl.pallas_call(
            _embed_kernel,
            out_shape=jax.ShapeDtypeStruct((B, S, Dpad), out_dtype),
            grid_spec=grid_spec,
            compiler_params=pltpu.CompilerParams(
                dimension_semantics=("parallel", "parallel"),
                vmem_limit_bytes=vmem_limit,
            ),
            cost_estimate=cost,
        )

    try:
        # Constant-index resident table: single-buffering saves V*Dpad of VMEM
        # with zero overlap cost (its block index never changes).
        out = build(pl.Buffered(1), 1)(ids_flat, word_emb, pos_emb)
    except Exception:
        # Graceful fallback if single-buffered resident blocks are unsupported.
        out = build(None, 2)(ids_flat, word_emb, pos_emb)

    return out[..., :D] if Dpad != D else out


if __name__ == "__main__":
    # Shapes taken directly from the PyTorch module constants.
    d_emb = 100
    max_seq_length = 80
    vocab_size = 10000
    batch = 2

    key = jax.random.PRNGKey(0)
    k_word, k_pos, k_ids = jax.random.split(key, 3)

    # nn.Embedding default init: N(0, 1)
    word_emb = jax.random.normal(k_word, (vocab_size, d_emb), dtype=jnp.float32)
    pos_emb = jax.random.normal(k_pos, (max_seq_length, d_emb), dtype=jnp.float32)
    ids = jax.random.randint(
        k_ids, (batch, max_seq_length), 0, vocab_size, dtype=jnp.int32
    )

    out = jax.block_until_ready(main_embedding(ids, word_emb, pos_emb))

    # Pure-JAX reference of the PyTorch forward.
    ref = jnp.take(word_emb, ids, axis=0) + pos_emb[None, :, :]
    assert out.shape == (batch, max_seq_length, d_emb)
    assert jnp.allclose(out, ref, atol=1e-6), "mismatch vs reference"

    print("KERNEL_OK")
</pallas_src>

<mosaic_0001>
module attributes {stable_mosaic.version = 11 : i64} {
  func.func @_embed_kernel(%arg0: i32, %arg1: i32, %arg2: memref<160xi32, #tpu.memory_space<smem>>, %arg3: memref<10000x128xf32, #tpu.memory_space<vmem>>, %arg4: memref<80x128xf32, #tpu.memory_space<vmem>>, %arg5: memref<1x80x128xf32, #tpu.memory_space<vmem>>) attributes {dimension_semantics = [#tpu.dimension_semantics<parallel>, #tpu.dimension_semantics<parallel>], iteration_bounds = array<i64: 2, 1>, scalar_prefetch = 1 : i64, scratch_operands = 0 : i64, tpu.core_type = #tpu.core_type<tc>, window_params = [{pipeline_mode = #tpu.pipeline_mode<synchronous>, transform_indices = @transform_0, window_bounds = array<i64: 10000, 128>}, {transform_indices = @transform_1, window_bounds = array<i64: 80, 128>}, {transform_indices = @transform_2, window_bounds = array<i64: 1, 80, 128>}]} {
    %c80_i32 = arith.constant 80 : i32
    %0 = arith.muli %arg0, %c80_i32 : i32
    %c80_i32_0 = arith.constant 80 : i32
    %1 = arith.muli %arg1, %c80_i32_0 : i32
    %2 = arith.addi %0, %1 : i32
    %c0_i32 = arith.constant 0 : i32
    %c8_i32 = arith.constant 8 : i32
    %3 = arith.muli %c0_i32, %c8_i32 : i32
    %4 = tpu.assume_multiple %3, 8 : i32
    %5 = arith.addi %2, %4 : i32
    %c0_i32_1 = arith.constant 0 : i32
    %6 = arith.addi %5, %c0_i32_1 : i32
    %7 = arith.index_cast %6 : i32 to index
    %8 = memref.load %arg2[%7] : memref<160xi32, #tpu.memory_space<smem>>
    %9 = arith.index_cast %8 : i32 to index
    %c0 = arith.constant 0 : index
    %10 = vector.load %arg3[%9, %c0] : memref<10000x128xf32, #tpu.memory_space<vmem>>, vector<1x128xf32>
    %11 = arith.addi %2, %4 : i32
    %c1_i32 = arith.constant 1 : i32
    %12 = arith.addi %11, %c1_i32 : i32
    %13 = arith.index_cast %12 : i32 to index
    %14 = memref.load %arg2[%13] : memref<160xi32, #tpu.memory_space<smem>>
    %15 = arith.index_cast %14 : i32 to index
    %c0_2 = arith.constant 0 : index
    %16 = vector.load %arg3[%15, %c0_2] : memref<10000x128xf32, #tpu.memory_space<vmem>>, vector<1x128xf32>
    %17 = arith.addi %2, %4 : i32
    %c2_i32 = arith.constant 2 : i32
    %18 = arith.addi %17, %c2_i32 : i32
    %19 = arith.index_cast %18 : i32 to index
    %20 = memref.load %arg2[%19] : memref<160xi32, #tpu.memory_space<smem>>
    %21 = arith.index_cast %20 : i32 to index
    %c0_3 = arith.constant 0 : index
    %22 = vector.load %arg3[%21, %c0_3] : memref<10000x128xf32, #tpu.memory_space<vmem>>, vector<1x128xf32>
    %23 = arith.addi %2, %4 : i32
    %c3_i32 = arith.constant 3 : i32
    %24 = arith.addi %23, %c3_i32 : i32
    %25 = arith.index_cast %24 : i32 to index
    %26 = memref.load %arg2[%25] : memref<160xi32, #tpu.memory_space<smem>>
    %27 = arith.index_cast %26 : i32 to index
    %c0_4 = arith.constant 0 : index
    %28 = vector.load %arg3[%27, %c0_4] : memref<10000x128xf32, #tpu.memory_space<vmem>>, vector<1x128xf32>
    %29 = arith.addi %2, %4 : i32
    %c4_i32 = arith.constant 4 : i32
    %30 = arith.addi %29, %c4_i32 : i32
    %31 = arith.index_cast %30 : i32 to index
    %32 = memref.load %arg2[%31] : memref<160xi32, #tpu.memory_space<smem>>
    %33 = arith.index_cast %32 : i32 to index
    %c0_5 = arith.constant 0 : index
    %34 = vector.load %arg3[%33, %c0_5] : memref<10000x128xf32, #tpu.memory_space<vmem>>, vector<1x128xf32>
    %35 = arith.addi %2, %4 : i32
    %c5_i32 = arith.constant 5 : i32
    %36 = arith.addi %35, %c5_i32 : i32
    %37 = arith.index_cast %36 : i32 to index
    %38 = memref.load %arg2[%37] : memref<160xi32, #tpu.memory_space<smem>>
    %39 = arith.index_cast %38 : i32 to index
    %c0_6 = arith.constant 0 : index
    %40 = vector.load %arg3[%39, %c0_6] : memref<10000x128xf32, #tpu.memory_space<vmem>>, vector<1x128xf32>
    %41 = arith.addi %2, %4 : i32
    %c6_i32 = arith.constant 6 : i32
    %42 = arith.addi %41, %c6_i32 : i32
    %43 = arith.index_cast %42 : i32 to index
    %44 = memref.load %arg2[%43] : memref<160xi32, #tpu.memory_space<smem>>
    %45 = arith.index_cast %44 : i32 to index
    %c0_7 = arith.constant 0 : index
    %46 = vector.load %arg3[%45, %c0_7] : memref<10000x128xf32, #tpu.memory_space<vmem>>, vector<1x128xf32>
    %47 = arith.addi %2, %4 : i32
    %c7_i32 = arith.constant 7 : i32
    %48 = arith.addi %47, %c7_i32 : i32
    %49 = arith.index_cast %48 : i32 to index
    %50 = memref.load %arg2[%49] : memref<160xi32, #tpu.memory_space<smem>>
    %51 = arith.index_cast %50 : i32 to index
    %c0_8 = arith.constant 0 : index
    %52 = vector.load %arg3[%51, %c0_8] : memref<10000x128xf32, #tpu.memory_space<vmem>>, vector<1x128xf32>
    %53 = tpu.concatenate %10, %16, %22, %28, %34, %40, %46, %52 in 0 : vector<1x128xf32>, vector<1x128xf32>, vector<1x128xf32>, vector<1x128xf32>, vector<1x128xf32>, vector<1x128xf32>, vector<1x128xf32>, vector<1x128xf32> -> vector<8x128xf32>
    %54 = arith.index_cast %4 : i32 to index
    %c0_9 = arith.constant 0 : index
    %55 = vector.load %arg4[%54, %c0_9] : memref<80x128xf32, #tpu.memory_space<vmem>>, vector<8x128xf32>
    %56 = arith.addf %53, %55 : vector<8x128xf32>
    %c0_10 = arith.constant 0 : index
    %57 = arith.index_cast %4 : i32 to index
    %c0_11 = arith.constant 0 : index
    %58 = vector.load %arg5[%c0_10, %57, %c0_11] : memref<1x80x128xf32, #tpu.memory_space<vmem>>, vector<1x8x128xf32>
    %59 = vector.shape_cast %58 : vector<1x8x128xf32> to vector<8x128xf32>
    %60 = vector.shape_cast %56 : vector<8x128xf32> to vector<1x8x128xf32>
    tpu.vector_store %arg5[%c0_10, %57, %c0_11], %60 {strides = array<i32>} : memref<1x80x128xf32, #tpu.memory_space<vmem>>, vector<1x8x128xf32>,
    %c1_i32_12 = arith.constant 1 : i32
    %c8_i32_13 = arith.constant 8 : i32
    %61 = arith.muli %c1_i32_12, %c8_i32_13 : i32
    %62 = tpu.assume_multiple %61, 8 : i32
    %63 = arith.addi %2, %62 : i32
    %c0_i32_14 = arith.constant 0 : i32
    %64 = arith.addi %63, %c0_i32_14 : i32
    %65 = arith.index_cast %64 : i32 to index
    %66 = memref.load %arg2[%65] : memref<160xi32, #tpu.memory_space<smem>>
    %67 = arith.index_cast %66 : i32 to index
    %c0_15 = arith.constant 0 : index
    %68 = vector.load %arg3[%67, %c0_15] : memref<10000x128xf32, #tpu.memory_space<vmem>>, vector<1x128xf32>
    %69 = arith.addi %2, %62 : i32
    %c1_i32_16 = arith.constant 1 : i32
    %70 = arith.addi %69, %c1_i32_16 : i32
    %71 = arith.index_cast %70 : i32 to index
    %72 = memref.load %arg2[%71] : memref<160xi32, #tpu.memory_space<smem>>
    %73 = arith.index_cast %72 : i32 to index
    %c0_17 = arith.constant 0 : index
    %74 = vector.load %arg3[%73, %c0_17] : memref<10000x128xf32, #tpu.memory_space<vmem>>, vector<1x128xf32>
    %75 = arith.addi %2, %62 : i32
    %c2_i32_18 = arith.constant 2 : i32
    %76 = arith.addi %75, %c2_i32_18 : i32
    %77 = arith.index_cast %76 : i32 to index
    %78 = memref.load %arg2[%77] : memref<160xi32, #tpu.memory_space<smem>>
    %79 = arith.index_cast %78 : i32 to index
    %c0_19 = arith.constant 0 : index
    %80 = vector.load %arg3[%79, %c0_19] : memref<10000x128xf32, #tpu.memory_space<vmem>>, vector<1x128xf32>
    %81 = arith.addi %2, %62 : i32
    %c3_i32_20 = arith.constant 3 : i32
    %82 = arith.addi %81, %c3_i32_20 : i32
    %83 = arith.index_cast %82 : i32 to index
    %84 = memref.load %arg2[%83] : memref<160xi32, #tpu.memory_space<smem>>
    %85 = arith.index_cast %84 : i32 to index
    %c0_21 = arith.constant 0 : index
    %86 = vector.load %arg3[%85, %c0_21] : memref<10000x128xf32, #tpu.memory_space<vmem>>, vector<1x128xf32>
    %87 = arith.addi %2, %62 : i32
    %c4_i32_22 = arith.constant 4 : i32
    %88 = arith.addi %87, %c4_i32_22 : i32
    %89 = arith.index_cast %88 : i32 to index
    %90 = memref.load %arg2[%89] : memref<160xi32, #tpu.memory_space<smem>>
    %91 = arith.index_cast %90 : i32 to index
    %c0_23 = arith.constant 0 : index
    %92 = vector.load %arg3[%91, %c0_23] : memref<10000x128xf32, #tpu.memory_space<vmem>>, vector<1x128xf32>
    %93 = arith.addi %2, %62 : i32
    %c5_i32_24 = arith.constant 5 : i32
    %94 = arith.addi %93, %c5_i32_24 : i32
    %95 = arith.index_cast %94 : i32 to index
    %96 = memref.load %arg2[%95] : memref<160xi32, #tpu.memory_space<smem>>
    %97 = arith.index_cast %96 : i32 to index
    %c0_25 = arith.constant 0 : index
    %98 = vector.load %arg3[%97, %c0_25] : memref<10000x128xf32, #tpu.memory_space<vmem>>, vector<1x128xf32>
    %99 = arith.addi %2, %62 : i32
    %c6_i32_26 = arith.constant 6 : i32
    %100 = arith.addi %99, %c6_i32_26 : i32
    %101 = arith.index_cast %100 : i32 to index
    %102 = memref.load %arg2[%101] : memref<160xi32, #tpu.memory_space<smem>>
    %103 = arith.index_cast %102 : i32 to index
    %c0_27 = arith.constant 0 : index
    %104 = vector.load %arg3[%103, %c0_27] : memref<10000x128xf32, #tpu.memory_space<vmem>>, vector<1x128xf32>
    %105 = arith.addi %2, %62 : i32
    %c7_i32_28 = arith.constant 7 : i32
    %106 = arith.addi %105, %c7_i32_28 : i32
    %107 = arith.index_cast %106 : i32 to index
    %108 = memref.load %arg2[%107] : memref<160xi32, #tpu.memory_space<smem>>
    %109 = arith.index_cast %108 : i32 to index
    %c0_29 = arith.constant 0 : index
    %110 = vector.load %arg3[%109, %c0_29] : memref<10000x128xf32, #tpu.memory_space<vmem>>, vector<1x128xf32>
    %111 = tpu.concatenate %68, %74, %80, %86, %92, %98, %104, %110 in 0 : vector<1x128xf32>, vector<1x128xf32>, vector<1x128xf32>, vector<1x128xf32>, vector<1x128xf32>, vector<1x128xf32>, vector<1x128xf32>, vector<1x128xf32> -> vector<8x128xf32>
    %112 = arith.index_cast %62 : i32 to index
    %c0_30 = arith.constant 0 : index
    %113 = vector.load %arg4[%112, %c0_30] : memref<80x128xf32, #tpu.memory_space<vmem>>, vector<8x128xf32>
    %114 = arith.addf %111, %113 : vector<8x128xf32>
    %c0_31 = arith.constant 0 : index
    %115 = arith.index_cast %62 : i32 to index
    %c0_32 = arith.constant 0 : index
    %116 = vector.load %arg5[%c0_31, %115, %c0_32] : memref<1x80x128xf32, #tpu.memory_space<vmem>>, vector<1x8x128xf32>
    %117 = vector.shape_cast %116 : vector<1x8x128xf32> to vector<8x128xf32>
    %118 = vector.shape_cast %114 : vector<8x128xf32> to vector<1x8x128xf32>
    tpu.vector_store %arg5[%c0_31, %115, %c0_32], %118 {strides = array<i32>} : memref<1x80x128xf32, #tpu.memory_space<vmem>>, vector<1x8x128xf32>,
    %c2_i32_33 = arith.constant 2 : i32
    %c8_i32_34 = arith.constant 8 : i32
    %119 = arith.muli %c2_i32_33, %c8_i32_34 : i32
    %120 = tpu.assume_multiple %119, 8 : i32
    %121 = arith.addi %2, %120 : i32
    %c0_i32_35 = arith.constant 0 : i32
    %122 = arith.addi %121, %c0_i32_35 : i32
    %123 = arith.index_cast %122 : i32 to index
    %124 = memref.load %arg2[%123] : memref<160xi32, #tpu.memory_space<smem>>
    %125 = arith.index_cast %124 : i32 to index
    %c0_36 = arith.constant 0 : index
    %126 = vector.load %arg3[%125, %c0_36] : memref<10000x128xf32, #tpu.memory_space<vmem>>, vector<1x128xf32>
    %127 = arith.addi %2, %120 : i32
    %c1_i32_37 = arith.constant 1 : i32
    %128 = arith.addi %127, %c1_i32_37 : i32
    %129 = arith.index_cast %128 : i32 to index
    %130 = memref.load %arg2[%129] : memref<160xi32, #tpu.memory_space<smem>>
    %131 = arith.index_cast %130 : i32 to index
    %c0_38 = arith.constant 0 : index
    %132 = vector.load %arg3[%131, %c0_38] : memref<10000x128xf32, #tpu.memory_space<vmem>>, vector<1x128xf32>
    %133 = arith.addi %2, %120 : i32
    %c2_i32_39 = arith.constant 2 : i32
    %134 = arith.addi %133, %c2_i32_39 : i32
    %135 = arith.index_cast %134 : i32 to index
    %136 = memref.load %arg2[%135] : memref<160xi32, #tpu.memory_space<smem>>
    %137 = arith.index_cast %136 : i32 to index
    %c0_40 = arith.constant 0 : index
    %138 = vector.load %arg3[%137, %c0_40] : memref<10000x128xf32, #tpu.memory_space<vmem>>, vector<1x128xf32>
    %139 = arith.addi %2, %120 : i32
    %c3_i32_41 = arith.constant 3 : i32
    %140 = arith.addi %139, %c3_i32_41 : i32
    %141 = arith.index_cast %140 : i32 to index
    %142 = memref.load %arg2[%141] : memref<160xi32, #tpu.memory_space<smem>>
    %143 = arith.index_cast %142 : i32 to index
    %c0_42 = arith.constant 0 : index
    %144 = vector.load %arg3[%143, %c0_42] : memref<10000x128xf32, #tpu.memory_space<vmem>>, vector<1x128xf32>
    %145 = arith.addi %2, %120 : i32
    %c4_i32_43 = arith.constant 4 : i32
    %146 = arith.addi %145, %c4_i32_43 : i32
    %147 = arith.index_cast %146 : i32 to index
    %148 = memref.load %arg2[%147] : memref<160xi32, #tpu.memory_space<smem>>
    %149 = arith.index_cast %148 : i32 to index
    %c0_44 = arith.constant 0 : index
    %150 = vector.load %arg3[%149, %c0_44] : memref<10000x128xf32, #tpu.memory_space<vmem>>, vector<1x128xf32>
    %151 = arith.addi %2, %120 : i32
    %c5_i32_45 = arith.constant 5 : i32
    %152 = arith.addi %151, %c5_i32_45 : i32
    %153 = arith.index_cast %152 : i32 to index
    %154 = memref.load %arg2[%153] : memref<160xi32, #tpu.memory_space<smem>>
    %155 = arith.index_cast %154 : i32 to index
    %c0_46 = arith.constant 0 : index
    %156 = vector.load %arg3[%155, %c0_46] : memref<10000x128xf32, #tpu.memory_space<vmem>>, vector<1x128xf32>
    %157 = arith.addi %2, %120 : i32
    %c6_i32_47 = arith.constant 6 : i32
    %158 = arith.addi %157, %c6_i32_47 : i32
    %159 = arith.index_cast %158 : i32 to index
    %160 = memref.load %arg2[%159] : memref<160xi32, #tpu.memory_space<smem>>
    %161 = arith.index_cast %160 : i32 to index
    %c0_48 = arith.constant 0 : index
    %162 = vector.load %arg3[%161, %c0_48] : memref<10000x128xf32, #tpu.memory_space<vmem>>, vector<1x128xf32>
    %163 = arith.addi %2, %120 : i32
    %c7_i32_49 = arith.constant 7 : i32
    %164 = arith.addi %163, %c7_i32_49 : i32
    %165 = arith.index_cast %164 : i32 to index
    %166 = memref.load %arg2[%165] : memref<160xi32, #tpu.memory_space<smem>>
    %167 = arith.index_cast %166 : i32 to index
    %c0_50 = arith.constant 0 : index
    %168 = vector.load %arg3[%167, %c0_50] : memref<10000x128xf32, #tpu.memory_space<vmem>>, vector<1x128xf32>
    %169 = tpu.concatenate %126, %132, %138, %144, %150, %156, %162, %168 in 0 : vector<1x128xf32>, vector<1x128xf32>, vector<1x128xf32>, vector<1x128xf32>, vector<1x128xf32>, vector<1x128xf32>, vector<1x128xf32>, vector<1x128xf32> -> vector<8x128xf32>
    %170 = arith.index_cast %120 : i32 to index
    %c0_51 = arith.constant 0 : index
    %171 = vector.load %arg4[%170, %c0_51] : memref<80x128xf32, #tpu.memory_space<vmem>>, vector<8x128xf32>
    %172 = arith.addf %169, %171 : vector<8x128xf32>
    %c0_52 = arith.constant 0 : index
    %173 = arith.index_cast %120 : i32 to index
    %c0_53 = arith.constant 0 : index
    %174 = vector.load %arg5[%c0_52, %173, %c0_53] : memref<1x80x128xf32, #tpu.memory_space<vmem>>, vector<1x8x128xf32>
    %175 = vector.shape_cast %174 : vector<1x8x128xf32> to vector<8x128xf32>
    %176 = vector.shape_cast %172 : vector<8x128xf32> to vector<1x8x128xf32>
    tpu.vector_store %arg5[%c0_52, %173, %c0_53], %176 {strides = array<i32>} : memref<1x80x128xf32, #tpu.memory_space<vmem>>, vector<1x8x128xf32>,
    %c3_i32_54 = arith.constant 3 : i32
    %c8_i32_55 = arith.constant 8 : i32
    %177 = arith.muli %c3_i32_54, %c8_i32_55 : i32
    %178 = tpu.assume_multiple %177, 8 : i32
    %179 = arith.addi %2, %178 : i32
    %c0_i32_56 = arith.constant 0 : i32
    %180 = arith.addi %179, %c0_i32_56 : i32
    %181 = arith.index_cast %180 : i32 to index
    %182 = memref.load %arg2[%181] : memref<160xi32, #tpu.memory_space<smem>>
    %183 = arith.index_cast %182 : i32 to index
    %c0_57 = arith.constant 0 : index
    %184 = vector.load %arg3[%183, %c0_57] : memref<10000x128xf32, #tpu.memory_space<vmem>>, vector<1x128xf32>
    %185 = arith.addi %2, %178 : i32
    %c1_i32_58 = arith.constant 1 : i32
    %186 = arith.addi %185, %c1_i32_58 : i32
    %187 = arith.index_cast %186 : i32 to index
    %188 = memref.load %arg2[%187] : memref<160xi32, #tpu.memory_space<smem>>
    %189 = arith.index_cast %188 : i32 to index
    %c0_59 = arith.constant 0 : index
    %190 = vector.load %arg3[%189, %c0_59] : memref<10000x128xf32, #tpu.memory_space<vmem>>, vector<1x128xf32>
    %191 = arith.addi %2, %178 : i32
    %c2_i32_60 = arith.constant 2 : i32
    %192 = arith.addi %191, %c2_i32_60 : i32
    %193 = arith.index_cast %192 : i32 to index
    %194 = memref.load %arg2[%193] : memref<160xi32, #tpu.memory_space<smem>>
    %195 = arith.index_cast %194 : i32 to index
    %c0_61 = arith.constant 0 : index
    %196 = vector.load %arg3[%195, %c0_61] : memref<10000x128xf32, #tpu.memory_space<vmem>>, vector<1x128xf32>
    %197 = arith.addi %2, %178 : i32
    %c3_i32_62 = arith.constant 3 : i32
    %198 = arith.addi %197, %c3_i32_62 : i32
    %199 = arith.index_cast %198 : i32 to index
    %200 = memref.load %arg2[%199] : memref<160xi32, #tpu.memory_space<smem>>
    %201 = arith.index_cast %200 : i32 to index
    %c0_63 = arith.constant 0 : index
    %202 = vector.load %arg3[%201, %c0_63] : memref<10000x128xf32, #tpu.memory_space<vmem>>, vector<1x128xf32>
    %203 = arith.addi %2, %178 : i32
    %c4_i32_64 = arith.constant 4 : i32
    %204 = arith.addi %203, %c4_i32_64 : i32
    %205 = arith.index_cast %204 : i32 to index
    %206 = memref.load %arg2[%205] : memref<160xi32, #tpu.memory_space<smem>>
    %207 = arith.index_cast %206 : i32 to index
    %c0_65 = arith.constant 0 : index
    %208 = vector.load %arg3[%207, %c0_65] : memref<10000x128xf32, #tpu.memory_space<vmem>>, vector<1x128xf32>
    %209 = arith.addi %2, %178 : i32
    %c5_i32_66 = arith.constant 5 : i32
    %210 = arith.addi %209, %c5_i32_66 : i32
    %211 = arith.index_cast %210 : i32 to index
    %212 = memref.load %arg2[%211] : memref<160xi32, #tpu.memory_space<smem>>
    %213 = arith.index_cast %212 : i32 to index
    %c0_67 = arith.constant 0 : index
    %214 = vector.load %arg3[%213, %c0_67] : memref<10000x128xf32, #tpu.memory_space<vmem>>, vector<1x128xf32>
    %215 = arith.addi %2, %178 : i32
    %c6_i32_68 = arith.constant 6 : i32
    %216 = arith.addi %215, %c6_i32_68 : i32
    %217 = arith.index_cast %216 : i32 to index
    %218 = memref.load %arg2[%217] : memref<160xi32, #tpu.memory_space<smem>>
    %219 = arith.index_cast %218 : i32 to index
    %c0_69 = arith.constant 0 : index
    %220 = vector.load %arg3[%219, %c0_69] : memref<10000x128xf32, #tpu.memory_space<vmem>>, vector<1x128xf32>
    %221 = arith.addi %2, %178 : i32
    %c7_i32_70 = arith.constant 7 : i32
    %222 = arith.addi %221, %c7_i32_70 : i32
    %223 = arith.index_cast %222 : i32 to index
    %224 = memref.load %arg2[%223] : memref<160xi32, #tpu.memory_space<smem>>
    %225 = arith.index_cast %224 : i32 to index
    %c0_71 = arith.constant 0 : index
    %226 = vector.load %arg3[%225, %c0_71] : memref<10000x128xf32, #tpu.memory_space<vmem>>, vector<1x128xf32>
    %227 = tpu.concatenate %184, %190, %196, %202, %208, %214, %220, %226 in 0 : vector<1x128xf32>, vector<1x128xf32>, vector<1x128xf32>, vector<1x128xf32>, vector<1x128xf32>, vector<1x128xf32>, vector<1x128xf32>, vector<1x128xf32> -> vector<8x128xf32>
    %228 = arith.index_cast %178 : i32 to index
    %c0_72 = arith.constant 0 : index
    %229 = vector.load %arg4[%228, %c0_72] : memref<80x128xf32, #tpu.memory_space<vmem>>, vector<8x128xf32>
    %230 = arith.addf %227, %229 : vector<8x128xf32>
    %c0_73 = arith.constant 0 : index
    %231 = arith.index_cast %178 : i32 to index
    %c0_74 = arith.constant 0 : index
    %232 = vector.load %arg5[%c0_73, %231, %c0_74] : memref<1x80x128xf32, #tpu.memory_space<vmem>>, vector<1x8x128xf32>
    %233 = vector.shape_cast %232 : vector<1x8x128xf32> to vector<8x128xf32>
    %234 = vector.shape_cast %230 : vector<8x128xf32> to vector<1x8x128xf32>
    tpu.vector_store %arg5[%c0_73, %231, %c0_74], %234 {strides = array<i32>} : memref<1x80x128xf32, #tpu.memory_space<vmem>>, vector<1x8x128xf32>,
    %c4_i32_75 = arith.constant 4 : i32
    %c8_i32_76 = arith.constant 8 : i32
    %235 = arith.muli %c4_i32_75, %c8_i32_76 : i32
    %236 = tpu.assume_multiple %235, 8 : i32
    %237 = arith.addi %2, %236 : i32
    %c0_i32_77 = arith.constant 0 : i32
    %238 = arith.addi %237, %c0_i32_77 : i32
    %239 = arith.index_cast %238 : i32 to index
    %240 = memref.load %arg2[%239] : memref<160xi32, #tpu.memory_space<smem>>
    %241 = arith.index_cast %240 : i32 to index
    %c0_78 = arith.constant 0 : index
    %242 = vector.load %arg3[%241, %c0_78] : memref<10000x128xf32, #tpu.memory_space<vmem>>, vector<1x128xf32>
    %243 = arith.addi %2, %236 : i32
    %c1_i32_79 = arith.constant 1 : i32
    %244 = arith.addi %243, %c1_i32_79 : i32
    %245 = arith.index_cast %244 : i32 to index
    %246 = memref.load %arg2[%245] : memref<160xi32, #tpu.memory_space<smem>>
    %247 = arith.index_cast %246 : i32 to index
    %c0_80 = arith.constant 0 : index
    %248 = vector.load %arg3[%247, %c0_80] : memref<10000x128xf32, #tpu.memory_space<vmem>>, vector<1x128xf32>
    %249 = arith.addi %2, %236 : i32
    %c2_i32_81 = arith.constant 2 : i32
    %250 = arith.addi %249, %c2_i32_81 : i32
    %251 = arith.index_cast %250 : i32 to index
    %252 = memref.load %arg2[%251] : memref<160xi32, #tpu.memory_space<smem>>
    %253 = arith.index_cast %252 : i32 to index
    %c0_82 = arith.constant 0 : index
    %254 = vector.load %arg3[%253, %c0_82] : memref<10000x128xf32, #tpu.memory_space<vmem>>, vector<1x128xf32>
    %255 = arith.addi %2, %236 : i32
    %c3_i32_83 = arith.constant 3 : i32
    %256 = arith.addi %255, %c3_i32_83 : i32
    %257 = arith.index_cast %256 : i32 to index
    %258 = memref.load %arg2[%257] : memref<160xi32, #tpu.memory_space<smem>>
    %259 = arith.index_cast %258 : i32 to index
    %c0_84 = arith.constant 0 : index
    %260 = vector.load %arg3[%259, %c0_84] : memref<10000x128xf32, #tpu.memory_space<vmem>>, vector<1x128xf32>
    %261 = arith.addi %2, %236 : i32
    %c4_i32_85 = arith.constant 4 : i32
    %262 = arith.addi %261, %c4_i32_85 : i32
    %263 = arith.index_cast %262 : i32 to index
    %264 = memref.load %arg2[%263] : memref<160xi32, #tpu.memory_space<smem>>
    %265 = arith.index_cast %264 : i32 to index
    %c0_86 = arith.constant 0 : index
    %266 = vector.load %arg3[%265, %c0_86] : memref<10000x128xf32, #tpu.memory_space<vmem>>, vector<1x128xf32>
    %267 = arith.addi %2, %236 : i32
    %c5_i32_87 = arith.constant 5 : i32
    %268 = arith.addi %267, %c5_i32_87 : i32
    %269 = arith.index_cast %268 : i32 to index
    %270 = memref.load %arg2[%269] : memref<160xi32, #tpu.memory_space<smem>>
    %271 = arith.index_cast %270 : i32 to index
    %c0_88 = arith.constant 0 : index
    %272 = vector.load %arg3[%271, %c0_88] : memref<10000x128xf32, #tpu.memory_space<vmem>>, vector<1x128xf32>
    %273 = arith.addi %2, %236 : i32
    %c6_i32_89 = arith.constant 6 : i32
    %274 = arith.addi %273, %c6_i32_89 : i32
    %275 = arith.index_cast %274 : i32 to index
    %276 = memref.load %arg2[%275] : memref<160xi32, #tpu.memory_space<smem>>
    %277 = arith.index_cast %276 : i32 to index
    %c0_90 = arith.constant 0 : index
    %278 = vector.load %arg3[%277, %c0_90] : memref<10000x128xf32, #tpu.memory_space<vmem>>, vector<1x128xf32>
    %279 = arith.addi %2, %236 : i32
    %c7_i32_91 = arith.constant 7 : i32
    %280 = arith.addi %279, %c7_i32_91 : i32
    %281 = arith.index_cast %280 : i32 to index
    %282 = memref.load %arg2[%281] : memref<160xi32, #tpu.memory_space<smem>>
    %283 = arith.index_cast %282 : i32 to index
    %c0_92 = arith.constant 0 : index
    %284 = vector.load %arg3[%283, %c0_92] : memref<10000x128xf32, #tpu.memory_space<vmem>>, vector<1x128xf32>
    %285 = tpu.concatenate %242, %248, %254, %260, %266, %272, %278, %284 in 0 : vector<1x128xf32>, vector<1x128xf32>, vector<1x128xf32>, vector<1x128xf32>, vector<1x128xf32>, vector<1x128xf32>, vector<1x128xf32>, vector<1x128xf32> -> vector<8x128xf32>
    %286 = arith.index_cast %236 : i32 to index
    %c0_93 = arith.constant 0 : index
    %287 = vector.load %arg4[%286, %c0_93] : memref<80x128xf32, #tpu.memory_space<vmem>>, vector<8x128xf32>
    %288 = arith.addf %285, %287 : vector<8x128xf32>
    %c0_94 = arith.constant 0 : index
    %289 = arith.index_cast %236 : i32 to index
    %c0_95 = arith.constant 0 : index
    %290 = vector.load %arg5[%c0_94, %289, %c0_95] : memref<1x80x128xf32, #tpu.memory_space<vmem>>, vector<1x8x128xf32>
    %291 = vector.shape_cast %290 : vector<1x8x128xf32> to vector<8x128xf32>
    %292 = vector.shape_cast %288 : vector<8x128xf32> to vector<1x8x128xf32>
    tpu.vector_store %arg5[%c0_94, %289, %c0_95], %292 {strides = array<i32>} : memref<1x80x128xf32, #tpu.memory_space<vmem>>, vector<1x8x128xf32>,
    %c5_i32_96 = arith.constant 5 : i32
    %c8_i32_97 = arith.constant 8 : i32
    %293 = arith.muli %c5_i32_96, %c8_i32_97 : i32
    %294 = tpu.assume_multiple %293, 8 : i32
    %295 = arith.addi %2, %294 : i32
    %c0_i32_98 = arith.constant 0 : i32
    %296 = arith.addi %295, %c0_i32_98 : i32
    %297 = arith.index_cast %296 : i32 to index
    %298 = memref.load %arg2[%297] : memref<160xi32, #tpu.memory_space<smem>>
    %299 = arith.index_cast %298 : i32 to index
    %c0_99 = arith.constant 0 : index
    %300 = vector.load %arg3[%299, %c0_99] : memref<10000x128xf32, #tpu.memory_space<vmem>>, vector<1x128xf32>
    %301 = arith.addi %2, %294 : i32
    %c1_i32_100 = arith.constant 1 : i32
    %302 = arith.addi %301, %c1_i32_100 : i32
    %303 = arith.index_cast %302 : i32 to index
    %304 = memref.load %arg2[%303] : memref<160xi32, #tpu.memory_space<smem>>
    %305 = arith.index_cast %304 : i32 to index
    %c0_101 = arith.constant 0 : index
    %306 = vector.load %arg3[%305, %c0_101] : memref<10000x128xf32, #tpu.memory_space<vmem>>, vector<1x128xf32>
    %307 = arith.addi %2, %294 : i32
    %c2_i32_102 = arith.constant 2 : i32
    %308 = arith.addi %307, %c2_i32_102 : i32
    %309 = arith.index_cast %308 : i32 to index
    %310 = memref.load %arg2[%309] : memref<160xi32, #tpu.memory_space<smem>>
    %311 = arith.index_cast %310 : i32 to index
    %c0_103 = arith.constant 0 : index
    %312 = vector.load %arg3[%311, %c0_103] : memref<10000x128xf32, #tpu.memory_space<vmem>>, vector<1x128xf32>
    %313 = arith.addi %2, %294 : i32
    %c3_i32_104 = arith.constant 3 : i32
    %314 = arith.addi %313, %c3_i32_104 : i32
    %315 = arith.index_cast %314 : i32 to index
    %316 = memref.load %arg2[%315] : memref<160xi32, #tpu.memory_space<smem>>
    %317 = arith.index_cast %316 : i32 to index
    %c0_105 = arith.constant 0 : index
    %318 = vector.load %arg3[%317, %c0_105] : memref<10000x128xf32, #tpu.memory_space<vmem>>, vector<1x128xf32>
    %319 = arith.addi %2, %294 : i32
    %c4_i32_106 = arith.constant 4 : i32
    %320 = arith.addi %319, %c4_i32_106 : i32
    %321 = arith.index_cast %320 : i32 to index
    %322 = memref.load %arg2[%321] : memref<160xi32, #tpu.memory_space<smem>>
    %323 = arith.index_cast %322 : i32 to index
    %c0_107 = arith.constant 0 : index
    %324 = vector.load %arg3[%323, %c0_107] : memref<10000x128xf32, #tpu.memory_space<vmem>>, vector<1x128xf32>
    %325 = arith.addi %2, %294 : i32
    %c5_i32_108 = arith.constant 5 : i32
    %326 = arith.addi %325, %c5_i32_108 : i32
    %327 = arith.index_cast %326 : i32 to index
    %328 = memref.load %arg2[%327] : memref<160xi32, #tpu.memory_space<smem>>
    %329 = arith.index_cast %328 : i32 to index
    %c0_109 = arith.constant 0 : index
    %330 = vector.load %arg3[%329, %c0_109] : memref<10000x128xf32, #tpu.memory_space<vmem>>, vector<1x128xf32>
    %331 = arith.addi %2, %294 : i32
    %c6_i32_110 = arith.constant 6 : i32
    %332 = arith.addi %331, %c6_i32_110 : i32
    %333 = arith.index_cast %332 : i32 to index
    %334 = memref.load %arg2[%333] : memref<160xi32, #tpu.memory_space<smem>>
    %335 = arith.index_cast %334 : i32 to index
    %c0_111 = arith.constant 0 : index
    %336 = vector.load %arg3[%335, %c0_111] : memref<10000x128xf32, #tpu.memory_space<vmem>>, vector<1x128xf32>
    %337 = arith.addi %2, %294 : i32
    %c7_i32_112 = arith.constant 7 : i32
    %338 = arith.addi %337, %c7_i32_112 : i32
    %339 = arith.index_cast %338 : i32 to index
    %340 = memref.load %arg2[%339] : memref<160xi32, #tpu.memory_space<smem>>
    %341 = arith.index_cast %340 : i32 to index
    %c0_113 = arith.constant 0 : index
    %342 = vector.load %arg3[%341, %c0_113] : memref<10000x128xf32, #tpu.memory_space<vmem>>, vector<1x128xf32>
    %343 = tpu.concatenate %300, %306, %312, %318, %324, %330, %336, %342 in 0 : vector<1x128xf32>, vector<1x128xf32>, vector<1x128xf32>, vector<1x128xf32>, vector<1x128xf32>, vector<1x128xf32>, vector<1x128xf32>, vector<1x128xf32> -> vector<8x128xf32>
    %344 = arith.index_cast %294 : i32 to index
    %c0_114 = arith.constant 0 : index
    %345 = vector.load %arg4[%344, %c0_114] : memref<80x128xf32, #tpu.memory_space<vmem>>, vector<8x128xf32>
    %346 = arith.addf %343, %345 : vector<8x128xf32>
    %c0_115 = arith.constant 0 : index
    %347 = arith.index_cast %294 : i32 to index
    %c0_116 = arith.constant 0 : index
    %348 = vector.load %arg5[%c0_115, %347, %c0_116] : memref<1x80x128xf32, #tpu.memory_space<vmem>>, vector<1x8x128xf32>
    %349 = vector.shape_cast %348 : vector<1x8x128xf32> to vector<8x128xf32>
    %350 = vector.shape_cast %346 : vector<8x128xf32> to vector<1x8x128xf32>
    tpu.vector_store %arg5[%c0_115, %347, %c0_116], %350 {strides = array<i32>} : memref<1x80x128xf32, #tpu.memory_space<vmem>>, vector<1x8x128xf32>,
    %c6_i32_117 = arith.constant 6 : i32
    %c8_i32_118 = arith.constant 8 : i32
    %351 = arith.muli %c6_i32_117, %c8_i32_118 : i32
    %352 = tpu.assume_multiple %351, 8 : i32
    %353 = arith.addi %2, %352 : i32
    %c0_i32_119 = arith.constant 0 : i32
    %354 = arith.addi %353, %c0_i32_119 : i32
    %355 = arith.index_cast %354 : i32 to index
    %356 = memref.load %arg2[%355] : memref<160xi32, #tpu.memory_space<smem>>
    %357 = arith.index_cast %356 : i32 to index
    %c0_120 = arith.constant 0 : index
    %358 = vector.load %arg3[%357, %c0_120] : memref<10000x128xf32, #tpu.memory_space<vmem>>, vector<1x128xf32>
    %359 = arith.addi %2, %352 : i32
    %c1_i32_121 = arith.constant 1 : i32
    %360 = arith.addi %359, %c1_i32_121 : i32
    %361 = arith.index_cast %360 : i32 to index
    %362 = memref.load %arg2[%361] : memref<160xi32, #tpu.memory_space<smem>>
    %363 = arith.index_cast %362 : i32 to index
    %c0_122 = arith.constant 0 : index
    %364 = vector.load %arg3[%363, %c0_122] : memref<10000x128xf32, #tpu.memory_space<vmem>>, vector<1x128xf32>
    %365 = arith.addi %2, %352 : i32
    %c2_i32_123 = arith.constant 2 : i32
    %366 = arith.addi %365, %c2_i32_123 : i32
    %367 = arith.index_cast %366 : i32 to index
    %368 = memref.load %arg2[%367] : memref<160xi32, #tpu.memory_space<smem>>
    %369 = arith.index_cast %368 : i32 to index
    %c0_124 = arith.constant 0 : index
    %370 = vector.load %arg3[%369, %c0_124] : memref<10000x128xf32, #tpu.memory_space<vmem>>, vector<1x128xf32>
    %371 = arith.addi %2, %352 : i32
    %c3_i32_125 = arith.constant 3 : i32
    %372 = arith.addi %371, %c3_i32_125 : i32
    %373 = arith.index_cast %372 : i32 to index
    %374 = memref.load %arg2[%373] : memref<160xi32, #tpu.memory_space<smem>>
    %375 = arith.index_cast %374 : i32 to index
    %c0_126 = arith.constant 0 : index
    %376 = vector.load %arg3[%375, %c0_126] : memref<10000x128xf32, #tpu.memory_space<vmem>>, vector<1x128xf32>
    %377 = arith.addi %2, %352 : i32
    %c4_i32_127 = arith.constant 4 : i32
    %378 = arith.addi %377, %c4_i32_127 : i32
    %379 = arith.index_cast %378 : i32 to index
    %380 = memref.load %arg2[%379] : memref<160xi32, #tpu.memory_space<smem>>
    %381 = arith.index_cast %380 : i32 to index
    %c0_128 = arith.constant 0 : index
    %382 = vector.load %arg3[%381, %c0_128] : memref<10000x128xf32, #tpu.memory_space<vmem>>, vector<1x128xf32>
    %383 = arith.addi %2, %352 : i32
    %c5_i32_129 = arith.constant 5 : i32
    %384 = arith.addi %383, %c5_i32_129 : i32
    %385 = arith.index_cast %384 : i32 to index
    %386 = memref.load %arg2[%385] : memref<160xi32, #tpu.memory_space<smem>>
    %387 = arith.index_cast %386 : i32 to index
    %c0_130 = arith.constant 0 : index
    %388 = vector.load %arg3[%387, %c0_130] : memref<10000x128xf32, #tpu.memory_space<vmem>>, vector<1x128xf32>
    %389 = arith.addi %2, %352 : i32
    %c6_i32_131 = arith.constant 6 : i32
    %390 = arith.addi %389, %c6_i32_131 : i32
    %391 = arith.index_cast %390 : i32 to index
    %392 = memref.load %arg2[%391] : memref<160xi32, #tpu.memory_space<smem>>
    %393 = arith.index_cast %392 : i32 to index
    %c0_132 = arith.constant 0 : index
    %394 = vector.load %arg3[%393, %c0_132] : memref<10000x128xf32, #tpu.memory_space<vmem>>, vector<1x128xf32>
    %395 = arith.addi %2, %352 : i32
    %c7_i32_133 = arith.constant 7 : i32
    %396 = arith.addi %395, %c7_i32_133 : i32
    %397 = arith.index_cast %396 : i32 to index
    %398 = memref.load %arg2[%397] : memref<160xi32, #tpu.memory_space<smem>>
    %399 = arith.index_cast %398 : i32 to index
    %c0_134 = arith.constant 0 : index
    %400 = vector.load %arg3[%399, %c0_134] : memref<10000x128xf32, #tpu.memory_space<vmem>>, vector<1x128xf32>
    %401 = tpu.concatenate %358, %364, %370, %376, %382, %388, %394, %400 in 0 : vector<1x128xf32>, vector<1x128xf32>, vector<1x128xf32>, vector<1x128xf32>, vector<1x128xf32>, vector<1x128xf32>, vector<1x128xf32>, vector<1x128xf32> -> vector<8x128xf32>
    %402 = arith.index_cast %352 : i32 to index
    %c0_135 = arith.constant 0 : index
    %403 = vector.load %arg4[%402, %c0_135] : memref<80x128xf32, #tpu.memory_space<vmem>>, vector<8x128xf32>
    %404 = arith.addf %401, %403 : vector<8x128xf32>
    %c0_136 = arith.constant 0 : index
    %405 = arith.index_cast %352 : i32 to index
    %c0_137 = arith.constant 0 : index
    %406 = vector.load %arg5[%c0_136, %405, %c0_137] : memref<1x80x128xf32, #tpu.memory_space<vmem>>, vector<1x8x128xf32>
    %407 = vector.shape_cast %406 : vector<1x8x128xf32> to vector<8x128xf32>
    %408 = vector.shape_cast %404 : vector<8x128xf32> to vector<1x8x128xf32>
    tpu.vector_store %arg5[%c0_136, %405, %c0_137], %408 {strides = array<i32>} : memref<1x80x128xf32, #tpu.memory_space<vmem>>, vector<1x8x128xf32>,
    %c7_i32_138 = arith.constant 7 : i32
    %c8_i32_139 = arith.constant 8 : i32
    %409 = arith.muli %c7_i32_138, %c8_i32_139 : i32
    %410 = tpu.assume_multiple %409, 8 : i32
    %411 = arith.addi %2, %410 : i32
    %c0_i32_140 = arith.constant 0 : i32
    %412 = arith.addi %411, %c0_i32_140 : i32
    %413 = arith.index_cast %412 : i32 to index
    %414 = memref.load %arg2[%413] : memref<160xi32, #tpu.memory_space<smem>>
    %415 = arith.index_cast %414 : i32 to index
    %c0_141 = arith.constant 0 : index
    %416 = vector.load %arg3[%415, %c0_141] : memref<10000x128xf32, #tpu.memory_space<vmem>>, vector<1x128xf32>
    %417 = arith.addi %2, %410 : i32
    %c1_i32_142 = arith.constant 1 : i32
    %418 = arith.addi %417, %c1_i32_142 : i32
    %419 = arith.index_cast %418 : i32 to index
    %420 = memref.load %arg2[%419] : memref<160xi32, #tpu.memory_space<smem>>
    %421 = arith.index_cast %420 : i32 to index
    %c0_143 = arith.constant 0 : index
    %422 = vector.load %arg3[%421, %c0_143] : memref<10000x128xf32, #tpu.memory_space<vmem>>, vector<1x128xf32>
    %423 = arith.addi %2, %410 : i32
    %c2_i32_144 = arith.constant 2 : i32
    %424 = arith.addi %423, %c2_i32_144 : i32
    %425 = arith.index_cast %424 : i32 to index
    %426 = memref.load %arg2[%425] : memref<160xi32, #tpu.memory_space<smem>>
    %427 = arith.index_cast %426 : i32 to index
    %c0_145 = arith.constant 0 : index
    %428 = vector.load %arg3[%427, %c0_145] : memref<10000x128xf32, #tpu.memory_space<vmem>>, vector<1x128xf32>
    %429 = arith.addi %2, %410 : i32
    %c3_i32_146 = arith.constant 3 : i32
    %430 = arith.addi %429, %c3_i32_146 : i32
    %431 = arith.index_cast %430 : i32 to index
    %432 = memref.load %arg2[%431] : memref<160xi32, #tpu.memory_space<smem>>
    %433 = arith.index_cast %432 : i32 to index
    %c0_147 = arith.constant 0 : index
    %434 = vector.load %arg3[%433, %c0_147] : memref<10000x128xf32, #tpu.memory_space<vmem>>, vector<1x128xf32>
    %435 = arith.addi %2, %410 : i32
    %c4_i32_148 = arith.constant 4 : i32
    %436 = arith.addi %435, %c4_i32_148 : i32
    %437 = arith.index_cast %436 : i32 to index
    %438 = memref.load %arg2[%437] : memref<160xi32, #tpu.memory_space<smem>>
    %439 = arith.index_cast %438 : i32 to index
    %c0_149 = arith.constant 0 : index
    %440 = vector.load %arg3[%439, %c0_149] : memref<10000x128xf32, #tpu.memory_space<vmem>>, vector<1x128xf32>
    %441 = arith.addi %2, %410 : i32
    %c5_i32_150 = arith.constant 5 : i32
    %442 = arith.addi %441, %c5_i32_150 : i32
    %443 = arith.index_cast %442 : i32 to index
    %444 = memref.load %arg2[%443] : memref<160xi32, #tpu.memory_space<smem>>
    %445 = arith.index_cast %444 : i32 to index
    %c0_151 = arith.constant 0 : index
    %446 = vector.load %arg3[%445, %c0_151] : memref<10000x128xf32, #tpu.memory_space<vmem>>, vector<1x128xf32>
    %447 = arith.addi %2, %410 : i32
    %c6_i32_152 = arith.constant 6 : i32
    %448 = arith.addi %447, %c6_i32_152 : i32
    %449 = arith.index_cast %448 : i32 to index
    %450 = memref.load %arg2[%449] : memref<160xi32, #tpu.memory_space<smem>>
    %451 = arith.index_cast %450 : i32 to index
    %c0_153 = arith.constant 0 : index
    %452 = vector.load %arg3[%451, %c0_153] : memref<10000x128xf32, #tpu.memory_space<vmem>>, vector<1x128xf32>
    %453 = arith.addi %2, %410 : i32
    %c7_i32_154 = arith.constant 7 : i32
    %454 = arith.addi %453, %c7_i32_154 : i32
    %455 = arith.index_cast %454 : i32 to index
    %456 = memref.load %arg2[%455] : memref<160xi32, #tpu.memory_space<smem>>
    %457 = arith.index_cast %456 : i32 to index
    %c0_155 = arith.constant 0 : index
    %458 = vector.load %arg3[%457, %c0_155] : memref<10000x128xf32, #tpu.memory_space<vmem>>, vector<1x128xf32>
    %459 = tpu.concatenate %416, %422, %428, %434, %440, %446, %452, %458 in 0 : vector<1x128xf32>, vector<1x128xf32>, vector<1x128xf32>, vector<1x128xf32>, vector<1x128xf32>, vector<1x128xf32>, vector<1x128xf32>, vector<1x128xf32> -> vector<8x128xf32>
    %460 = arith.index_cast %410 : i32 to index
    %c0_156 = arith.constant 0 : index
    %461 = vector.load %arg4[%460, %c0_156] : memref<80x128xf32, #tpu.memory_space<vmem>>, vector<8x128xf32>
    %462 = arith.addf %459, %461 : vector<8x128xf32>
    %c0_157 = arith.constant 0 : index
    %463 = arith.index_cast %410 : i32 to index
    %c0_158 = arith.constant 0 : index
    %464 = vector.load %arg5[%c0_157, %463, %c0_158] : memref<1x80x128xf32, #tpu.memory_space<vmem>>, vector<1x8x128xf32>
    %465 = vector.shape_cast %464 : vector<1x8x128xf32> to vector<8x128xf32>
    %466 = vector.shape_cast %462 : vector<8x128xf32> to vector<1x8x128xf32>
    tpu.vector_store %arg5[%c0_157, %463, %c0_158], %466 {strides = array<i32>} : memref<1x80x128xf32, #tpu.memory_space<vmem>>, vector<1x8x128xf32>,
    %c8_i32_159 = arith.constant 8 : i32
    %c8_i32_160 = arith.constant 8 : i32
    %467 = arith.muli %c8_i32_159, %c8_i32_160 : i32
    %468 = tpu.assume_multiple %467, 8 : i32
    %469 = arith.addi %2, %468 : i32
    %c0_i32_161 = arith.constant 0 : i32
    %470 = arith.addi %469, %c0_i32_161 : i32
    %471 = arith.index_cast %470 : i32 to index
    %472 = memref.load %arg2[%471] : memref<160xi32, #tpu.memory_space<smem>>
    %473 = arith.index_cast %472 : i32 to index
    %c0_162 = arith.constant 0 : index
    %474 = vector.load %arg3[%473, %c0_162] : memref<10000x128xf32, #tpu.memory_space<vmem>>, vector<1x128xf32>
    %475 = arith.addi %2, %468 : i32
    %c1_i32_163 = arith.constant 1 : i32
    %476 = arith.addi %475, %c1_i32_163 : i32
    %477 = arith.index_cast %476 : i32 to index
    %478 = memref.load %arg2[%477] : memref<160xi32, #tpu.memory_space<smem>>
    %479 = arith.index_cast %478 : i32 to index
    %c0_164 = arith.constant 0 : index
    %480 = vector.load %arg3[%479, %c0_164] : memref<10000x128xf32, #tpu.memory_space<vmem>>, vector<1x128xf32>
    %481 = arith.addi %2, %468 : i32
    %c2_i32_165 = arith.constant 2 : i32
    %482 = arith.addi %481, %c2_i32_165 : i32
    %483 = arith.index_cast %482 : i32 to index
    %484 = memref.load %arg2[%483] : memref<160xi32, #tpu.memory_space<smem>>
    %485 = arith.index_cast %484 : i32 to index
    %c0_166 = arith.constant 0 : index
    %486 = vector.load %arg3[%485, %c0_166] : memref<10000x128xf32, #tpu.memory_space<vmem>>, vector<1x128xf32>
    %487 = arith.addi %2, %468 : i32
    %c3_i32_167 = arith.constant 3 : i32
    %488 = arith.addi %487, %c3_i32_167 : i32
    %489 = arith.index_cast %488 : i32 to index
    %490 = memref.load %arg2[%489] : memref<160xi32, #tpu.memory_space<smem>>
    %491 = arith.index_cast %490 : i32 to index
    %c0_168 = arith.constant 0 : index
    %492 = vector.load %arg3[%491, %c0_168] : memref<10000x128xf32, #tpu.memory_space<vmem>>, vector<1x128xf32>
    %493 = arith.addi %2, %468 : i32
    %c4_i32_169 = arith.constant 4 : i32
    %494 = arith.addi %493, %c4_i32_169 : i32
    %495 = arith.index_cast %494 : i32 to index
    %496 = memref.load %arg2[%495] : memref<160xi32, #tpu.memory_space<smem>>
    %497 = arith.index_cast %496 : i32 to index
    %c0_170 = arith.constant 0 : index
    %498 = vector.load %arg3[%497, %c0_170] : memref<10000x128xf32, #tpu.memory_space<vmem>>, vector<1x128xf32>
    %499 = arith.addi %2, %468 : i32
    %c5_i32_171 = arith.constant 5 : i32
    %500 = arith.addi %499, %c5_i32_171 : i32
    %501 = arith.index_cast %500 : i32 to index
    %502 = memref.load %arg2[%501] : memref<160xi32, #tpu.memory_space<smem>>
    %503 = arith.index_cast %502 : i32 to index
    %c0_172 = arith.constant 0 : index
    %504 = vector.load %arg3[%503, %c0_172] : memref<10000x128xf32, #tpu.memory_space<vmem>>, vector<1x128xf32>
    %505 = arith.addi %2, %468 : i32
    %c6_i32_173 = arith.constant 6 : i32
    %506 = arith.addi %505, %c6_i32_173 : i32
    %507 = arith.index_cast %506 : i32 to index
    %508 = memref.load %arg2[%507] : memref<160xi32, #tpu.memory_space<smem>>
    %509 = arith.index_cast %508 : i32 to index
    %c0_174 = arith.constant 0 : index
    %510 = vector.load %arg3[%509, %c0_174] : memref<10000x128xf32, #tpu.memory_space<vmem>>, vector<1x128xf32>
    %511 = arith.addi %2, %468 : i32
    %c7_i32_175 = arith.constant 7 : i32
    %512 = arith.addi %511, %c7_i32_175 : i32
    %513 = arith.index_cast %512 : i32 to index
    %514 = memref.load %arg2[%513] : memref<160xi32, #tpu.memory_space<smem>>
    %515 = arith.index_cast %514 : i32 to index
    %c0_176 = arith.constant 0 : index
    %516 = vector.load %arg3[%515, %c0_176] : memref<10000x128xf32, #tpu.memory_space<vmem>>, vector<1x128xf32>
    %517 = tpu.concatenate %474, %480, %486, %492, %498, %504, %510, %516 in 0 : vector<1x128xf32>, vector<1x128xf32>, vector<1x128xf32>, vector<1x128xf32>, vector<1x128xf32>, vector<1x128xf32>, vector<1x128xf32>, vector<1x128xf32> -> vector<8x128xf32>
    %518 = arith.index_cast %468 : i32 to index
    %c0_177 = arith.constant 0 : index
    %519 = vector.load %arg4[%518, %c0_177] : memref<80x128xf32, #tpu.memory_space<vmem>>, vector<8x128xf32>
    %520 = arith.addf %517, %519 : vector<8x128xf32>
    %c0_178 = arith.constant 0 : index
    %521 = arith.index_cast %468 : i32 to index
    %c0_179 = arith.constant 0 : index
    %522 = vector.load %arg5[%c0_178, %521, %c0_179] : memref<1x80x128xf32, #tpu.memory_space<vmem>>, vector<1x8x128xf32>
    %523 = vector.shape_cast %522 : vector<1x8x128xf32> to vector<8x128xf32>
    %524 = vector.shape_cast %520 : vector<8x128xf32> to vector<1x8x128xf32>
    tpu.vector_store %arg5[%c0_178, %521, %c0_179], %524 {strides = array<i32>} : memref<1x80x128xf32, #tpu.memory_space<vmem>>, vector<1x8x128xf32>,
    %c9_i32 = arith.constant 9 : i32
    %c8_i32_180 = arith.constant 8 : i32
    %525 = arith.muli %c9_i32, %c8_i32_180 : i32
    %526 = tpu.assume_multiple %525, 8 : i32
    %527 = arith.addi %2, %526 : i32
    %c0_i32_181 = arith.constant 0 : i32
    %528 = arith.addi %527, %c0_i32_181 : i32
    %529 = arith.index_cast %528 : i32 to index
    %530 = memref.load %arg2[%529] : memref<160xi32, #tpu.memory_space<smem>>
    %531 = arith.index_cast %530 : i32 to index
    %c0_182 = arith.constant 0 : index
    %532 = vector.load %arg3[%531, %c0_182] : memref<10000x128xf32, #tpu.memory_space<vmem>>, vector<1x128xf32>
    %533 = arith.addi %2, %526 : i32
    %c1_i32_183 = arith.constant 1 : i32
    %534 = arith.addi %533, %c1_i32_183 : i32
    %535 = arith.index_cast %534 : i32 to index
    %536 = memref.load %arg2[%535] : memref<160xi32, #tpu.memory_space<smem>>
    %537 = arith.index_cast %536 : i32 to index
    %c0_184 = arith.constant 0 : index
    %538 = vector.load %arg3[%537, %c0_184] : memref<10000x128xf32, #tpu.memory_space<vmem>>, vector<1x128xf32>
    %539 = arith.addi %2, %526 : i32
    %c2_i32_185 = arith.constant 2 : i32
    %540 = arith.addi %539, %c2_i32_185 : i32
    %541 = arith.index_cast %540 : i32 to index
    %542 = memref.load %arg2[%541] : memref<160xi32, #tpu.memory_space<smem>>
    %543 = arith.index_cast %542 : i32 to index
    %c0_186 = arith.constant 0 : index
    %544 = vector.load %arg3[%543, %c0_186] : memref<10000x128xf32, #tpu.memory_space<vmem>>, vector<1x128xf32>
    %545 = arith.addi %2, %526 : i32
    %c3_i32_187 = arith.constant 3 : i32
    %546 = arith.addi %545, %c3_i32_187 : i32
    %547 = arith.index_cast %546 : i32 to index
    %548 = memref.load %arg2[%547] : memref<160xi32, #tpu.memory_space<smem>>
    %549 = arith.index_cast %548 : i32 to index
    %c0_188 = arith.constant 0 : index
    %550 = vector.load %arg3[%549, %c0_188] : memref<10000x128xf32, #tpu.memory_space<vmem>>, vector<1x128xf32>
    %551 = arith.addi %2, %526 : i32
    %c4_i32_189 = arith.constant 4 : i32
    %552 = arith.addi %551, %c4_i32_189 : i32
    %553 = arith.index_cast %552 : i32 to index
    %554 = memref.load %arg2[%553] : memref<160xi32, #tpu.memory_space<smem>>
    %555 = arith.index_cast %554 : i32 to index
    %c0_190 = arith.constant 0 : index
    %556 = vector.load %arg3[%555, %c0_190] : memref<10000x128xf32, #tpu.memory_space<vmem>>, vector<1x128xf32>
    %557 = arith.addi %2, %526 : i32
    %c5_i32_191 = arith.constant 5 : i32
    %558 = arith.addi %557, %c5_i32_191 : i32
    %559 = arith.index_cast %558 : i32 to index
    %560 = memref.load %arg2[%559] : memref<160xi32, #tpu.memory_space<smem>>
    %561 = arith.index_cast %560 : i32 to index
    %c0_192 = arith.constant 0 : index
    %562 = vector.load %arg3[%561, %c0_192] : memref<10000x128xf32, #tpu.memory_space<vmem>>, vector<1x128xf32>
    %563 = arith.addi %2, %526 : i32
    %c6_i32_193 = arith.constant 6 : i32
    %564 = arith.addi %563, %c6_i32_193 : i32
    %565 = arith.index_cast %564 : i32 to index
    %566 = memref.load %arg2[%565] : memref<160xi32, #tpu.memory_space<smem>>
    %567 = arith.index_cast %566 : i32 to index
    %c0_194 = arith.constant 0 : index
    %568 = vector.load %arg3[%567, %c0_194] : memref<10000x128xf32, #tpu.memory_space<vmem>>, vector<1x128xf32>
    %569 = arith.addi %2, %526 : i32
    %c7_i32_195 = arith.constant 7 : i32
    %570 = arith.addi %569, %c7_i32_195 : i32
    %571 = arith.index_cast %570 : i32 to index
    %572 = memref.load %arg2[%571] : memref<160xi32, #tpu.memory_space<smem>>
    %573 = arith.index_cast %572 : i32 to index
    %c0_196 = arith.constant 0 : index
    %574 = vector.load %arg3[%573, %c0_196] : memref<10000x128xf32, #tpu.memory_space<vmem>>, vector<1x128xf32>
    %575 = tpu.concatenate %532, %538, %544, %550, %556, %562, %568, %574 in 0 : vector<1x128xf32>, vector<1x128xf32>, vector<1x128xf32>, vector<1x128xf32>, vector<1x128xf32>, vector<1x128xf32>, vector<1x128xf32>, vector<1x128xf32> -> vector<8x128xf32>
    %576 = arith.index_cast %526 : i32 to index
    %c0_197 = arith.constant 0 : index
    %577 = vector.load %arg4[%576, %c0_197] : memref<80x128xf32, #tpu.memory_space<vmem>>, vector<8x128xf32>
    %578 = arith.addf %575, %577 : vector<8x128xf32>
    %c0_198 = arith.constant 0 : index
    %579 = arith.index_cast %526 : i32 to index
    %c0_199 = arith.constant 0 : index
    %580 = vector.load %arg5[%c0_198, %579, %c0_199] : memref<1x80x128xf32, #tpu.memory_space<vmem>>, vector<1x8x128xf32>
    %581 = vector.shape_cast %580 : vector<1x8x128xf32> to vector<8x128xf32>
    %582 = vector.shape_cast %578 : vector<8x128xf32> to vector<1x8x128xf32>
    tpu.vector_store %arg5[%c0_198, %579, %c0_199], %582 {strides = array<i32>} : memref<1x80x128xf32, #tpu.memory_space<vmem>>, vector<1x8x128xf32>,
    %c10_i32 = arith.constant 10 : i32
    return
  }
  func.func @transform_0(%arg0: i32, %arg1: i32, %arg2: memref<160xi32, #tpu.memory_space<smem>>) -> (i32, i32) {
    %c0_i32 = arith.constant 0 : i32
    %c0_i32_0 = arith.constant 0 : i32
    %c0_i32_1 = arith.constant 0 : i32
    return %c0_i32, %c0_i32_0 : i32, i32
  }
  func.func @transform_1(%arg0: i32, %arg1: i32, %arg2: memref<160xi32, #tpu.memory_space<smem>>) -> (i32, i32) {
    %c0_i32 = arith.constant 0 : i32
    %c0_i32_0 = arith.constant 0 : i32
    return %arg1, %c0_i32 : i32, i32
  }
  func.func @transform_2(%arg0: i32, %arg1: i32, %arg2: memref<160xi32, #tpu.memory_space<smem>>) -> (i32, i32, i32) {
    %c0_i32 = arith.constant 0 : i32
    %c0_i32_0 = arith.constant 0 : i32
    return %arg0, %arg1, %c0_i32 : i32, i32, i32
  }
}

module attributes {stable_mosaic.version = 11 : i64} {
  func.func @_embed_kernel(%arg0: i32, %arg1: i32, %arg2: memref<160xi32, #tpu.memory_space<smem>>, %arg3: memref<10000x128xf32, #tpu.memory_space<vmem>>, %arg4: memref<80x128xf32, #tpu.memory_space<vmem>>, %arg5: memref<1x80x128xf32, #tpu.memory_space<vmem>>) attributes {dimension_semantics = [#tpu.dimension_semantics<parallel>, #tpu.dimension_semantics<parallel>], iteration_bounds = array<i64: 2, 1>, scalar_prefetch = 1 : i64, scratch_operands = 0 : i64, tpu.core_type = #tpu.core_type<tc>, window_params = [{pipeline_mode = #tpu.pipeline_mode<synchronous>, transform_indices = @transform_0, window_bounds = array<i64: 10000, 128>}, {transform_indices = @transform_1, window_bounds = array<i64: 80, 128>}, {transform_indices = @transform_2, window_bounds = array<i64: 1, 80, 128>}]} {
    %c80_i32 = arith.constant 80 : i32
    %0 = arith.muli %arg0, %c80_i32 : i32
    %c80_i32_0 = arith.constant 80 : i32
    %1 = arith.muli %arg1, %c80_i32_0 : i32
    %2 = arith.addi %0, %1 : i32
    %c0_i32 = arith.constant 0 : i32
    %c8_i32 = arith.constant 8 : i32
    %3 = arith.muli %c0_i32, %c8_i32 : i32
    %4 = tpu.assume_multiple %3, 8 : i32
    %5 = arith.addi %2, %4 : i32
    %c0_i32_1 = arith.constant 0 : i32
    %6 = arith.addi %5, %c0_i32_1 : i32
    %7 = arith.index_cast %6 : i32 to index
    %8 = memref.load %arg2[%7] : memref<160xi32, #tpu.memory_space<smem>>
    %9 = arith.index_cast %8 : i32 to index
    %c0 = arith.constant 0 : index
    %10 = vector.load %arg3[%9, %c0] : memref<10000x128xf32, #tpu.memory_space<vmem>>, vector<1x128xf32>
    %11 = arith.addi %2, %4 : i32
    %c1_i32 = arith.constant 1 : i32
    %12 = arith.addi %11, %c1_i32 : i32
    %13 = arith.index_cast %12 : i32 to index
    %14 = memref.load %arg2[%13] : memref<160xi32, #tpu.memory_space<smem>>
    %15 = arith.index_cast %14 : i32 to index
    %c0_2 = arith.constant 0 : index
    %16 = vector.load %arg3[%15, %c0_2] : memref<10000x128xf32, #tpu.memory_space<vmem>>, vector<1x128xf32>
    %17 = arith.addi %2, %4 : i32
    %c2_i32 = arith.constant 2 : i32
    %18 = arith.addi %17, %c2_i32 : i32
    %19 = arith.index_cast %18 : i32 to index
    %20 = memref.load %arg2[%19] : memref<160xi32, #tpu.memory_space<smem>>
    %21 = arith.index_cast %20 : i32 to index
    %c0_3 = arith.constant 0 : index
    %22 = vector.load %arg3[%21, %c0_3] : memref<10000x128xf32, #tpu.memory_space<vmem>>, vector<1x128xf32>
    %23 = arith.addi %2, %4 : i32
    %c3_i32 = arith.constant 3 : i32
    %24 = arith.addi %23, %c3_i32 : i32
    %25 = arith.index_cast %24 : i32 to index
    %26 = memref.load %arg2[%25] : memref<160xi32, #tpu.memory_space<smem>>
    %27 = arith.index_cast %26 : i32 to index
    %c0_4 = arith.constant 0 : index
    %28 = vector.load %arg3[%27, %c0_4] : memref<10000x128xf32, #tpu.memory_space<vmem>>, vector<1x128xf32>
    %29 = arith.addi %2, %4 : i32
    %c4_i32 = arith.constant 4 : i32
    %30 = arith.addi %29, %c4_i32 : i32
    %31 = arith.index_cast %30 : i32 to index
    %32 = memref.load %arg2[%31] : memref<160xi32, #tpu.memory_space<smem>>
    %33 = arith.index_cast %32 : i32 to index
    %c0_5 = arith.constant 0 : index
    %34 = vector.load %arg3[%33, %c0_5] : memref<10000x128xf32, #tpu.memory_space<vmem>>, vector<1x128xf32>
    %35 = arith.addi %2, %4 : i32
    %c5_i32 = arith.constant 5 : i32
    %36 = arith.addi %35, %c5_i32 : i32
    %37 = arith.index_cast %36 : i32 to index
    %38 = memref.load %arg2[%37] : memref<160xi32, #tpu.memory_space<smem>>
    %39 = arith.index_cast %38 : i32 to index
    %c0_6 = arith.constant 0 : index
    %40 = vector.load %arg3[%39, %c0_6] : memref<10000x128xf32, #tpu.memory_space<vmem>>, vector<1x128xf32>
    %41 = arith.addi %2, %4 : i32
    %c6_i32 = arith.constant 6 : i32
    %42 = arith.addi %41, %c6_i32 : i32
    %43 = arith.index_cast %42 : i32 to index
    %44 = memref.load %arg2[%43] : memref<160xi32, #tpu.memory_space<smem>>
    %45 = arith.index_cast %44 : i32 to index
    %c0_7 = arith.constant 0 : index
    %46 = vector.load %arg3[%45, %c0_7] : memref<10000x128xf32, #tpu.memory_space<vmem>>, vector<1x128xf32>
    %47 = arith.addi %2, %4 : i32
    %c7_i32 = arith.constant 7 : i32
    %48 = arith.addi %47, %c7_i32 : i32
    %49 = arith.index_cast %48 : i32 to index
    %50 = memref.load %arg2[%49] : memref<160xi32, #tpu.memory_space<smem>>
    %51 = arith.index_cast %50 : i32 to index
    %c0_8 = arith.constant 0 : index
    %52 = vector.load %arg3[%51, %c0_8] : memref<10000x128xf32, #tpu.memory_space<vmem>>, vector<1x128xf32>
    %53 = tpu.concatenate %10, %16, %22, %28, %34, %40, %46, %52 in 0 : vector<1x128xf32>, vector<1x128xf32>, vector<1x128xf32>, vector<1x128xf32>, vector<1x128xf32>, vector<1x128xf32>, vector<1x128xf32>, vector<1x128xf32> -> vector<8x128xf32>
    %54 = arith.index_cast %4 : i32 to index
    %c0_9 = arith.constant 0 : index
    %55 = vector.load %arg4[%54, %c0_9] : memref<80x128xf32, #tpu.memory_space<vmem>>, vector<8x128xf32>
    %56 = arith.addf %53, %55 : vector<8x128xf32>
    %c0_10 = arith.constant 0 : index
    %57 = arith.index_cast %4 : i32 to index
    %c0_11 = arith.constant 0 : index
    %58 = vector.load %arg5[%c0_10, %57, %c0_11] : memref<1x80x128xf32, #tpu.memory_space<vmem>>, vector<1x8x128xf32>
    %59 = vector.shape_cast %58 : vector<1x8x128xf32> to vector<8x128xf32>
    %60 = vector.shape_cast %56 : vector<8x128xf32> to vector<1x8x128xf32>
    tpu.vector_store %arg5[%c0_10, %57, %c0_11], %60 {strides = array<i32>} : memref<1x80x128xf32, #tpu.memory_space<vmem>>, vector<1x8x128xf32>,
    %c1_i32_12 = arith.constant 1 : i32
    %c8_i32_13 = arith.constant 8 : i32
    %61 = arith.muli %c1_i32_12, %c8_i32_13 : i32
    %62 = tpu.assume_multiple %61, 8 : i32
    %63 = arith.addi %2, %62 : i32
    %c0_i32_14 = arith.constant 0 : i32
    %64 = arith.addi %63, %c0_i32_14 : i32
    %65 = arith.index_cast %64 : i32 to index
    %66 = memref.load %arg2[%65] : memref<160xi32, #tpu.memory_space<smem>>
    %67 = arith.index_cast %66 : i32 to index
    %c0_15 = arith.constant 0 : index
    %68 = vector.load %arg3[%67, %c0_15] : memref<10000x128xf32, #tpu.memory_space<vmem>>, vector<1x128xf32>
    %69 = arith.addi %2, %62 : i32
    %c1_i32_16 = arith.constant 1 : i32
    %70 = arith.addi %69, %c1_i32_16 : i32
    %71 = arith.index_cast %70 : i32 to index
    %72 = memref.load %arg2[%71] : memref<160xi32, #tpu.memory_space<smem>>
    %73 = arith.index_cast %72 : i32 to index
    %c0_17 = arith.constant 0 : index
    %74 = vector.load %arg3[%73, %c0_17] : memref<10000x128xf32, #tpu.memory_space<vmem>>, vector<1x128xf32>
    %75 = arith.addi %2, %62 : i32
    %c2_i32_18 = arith.constant 2 : i32
    %76 = arith.addi %75, %c2_i32_18 : i32
    %77 = arith.index_cast %76 : i32 to index
    %78 = memref.load %arg2[%77] : memref<160xi32, #tpu.memory_space<smem>>
    %79 = arith.index_cast %78 : i32 to index
    %c0_19 = arith.constant 0 : index
    %80 = vector.load %arg3[%79, %c0_19] : memref<10000x128xf32, #tpu.memory_space<vmem>>, vector<1x128xf32>
    %81 = arith.addi %2, %62 : i32
    %c3_i32_20 = arith.constant 3 : i32
    %82 = arith.addi %81, %c3_i32_20 : i32
    %83 = arith.index_cast %82 : i32 to index
    %84 = memref.load %arg2[%83] : memref<160xi32, #tpu.memory_space<smem>>
    %85 = arith.index_cast %84 : i32 to index
    %c0_21 = arith.constant 0 : index
    %86 = vector.load %arg3[%85, %c0_21] : memref<10000x128xf32, #tpu.memory_space<vmem>>, vector<1x128xf32>
    %87 = arith.addi %2, %62 : i32
    %c4_i32_22 = arith.constant 4 : i32
    %88 = arith.addi %87, %c4_i32_22 : i32
    %89 = arith.index_cast %88 : i32 to index
    %90 = memref.load %arg2[%89] : memref<160xi32, #tpu.memory_space<smem>>
    %91 = arith.index_cast %90 : i32 to index
    %c0_23 = arith.constant 0 : index
    %92 = vector.load %arg3[%91, %c0_23] : memref<10000x128xf32, #tpu.memory_space<vmem>>, vector<1x128xf32>
    %93 = arith.addi %2, %62 : i32
    %c5_i32_24 = arith.constant 5 : i32
    %94 = arith.addi %93, %c5_i32_24 : i32
    %95 = arith.index_cast %94 : i32 to index
    %96 = memref.load %arg2[%95] : memref<160xi32, #tpu.memory_space<smem>>
    %97 = arith.index_cast %96 : i32 to index
    %c0_25 = arith.constant 0 : index
    %98 = vector.load %arg3[%97, %c0_25] : memref<10000x128xf32, #tpu.memory_space<vmem>>, vector<1x128xf32>
    %99 = arith.addi %2, %62 : i32
    %c6_i32_26 = arith.constant 6 : i32
    %100 = arith.addi %99, %c6_i32_26 : i32
    %101 = arith.index_cast %100 : i32 to index
    %102 = memref.load %arg2[%101] : memref<160xi32, #tpu.memory_space<smem>>
    %103 = arith.index_cast %102 : i32 to index
    %c0_27 = arith.constant 0 : index
    %104 = vector.load %arg3[%103, %c0_27] : memref<10000x128xf32, #tpu.memory_space<vmem>>, vector<1x128xf32>
    %105 = arith.addi %2, %62 : i32
    %c7_i32_28 = arith.constant 7 : i32
    %106 = arith.addi %105, %c7_i32_28 : i32
    %107 = arith.index_cast %106 : i32 to index
    %108 = memref.load %arg2[%107] : memref<160xi32, #tpu.memory_space<smem>>
    %109 = arith.index_cast %108 : i32 to index
    %c0_29 = arith.constant 0 : index
    %110 = vector.load %arg3[%109, %c0_29] : memref<10000x128xf32, #tpu.memory_space<vmem>>, vector<1x128xf32>
    %111 = tpu.concatenate %68, %74, %80, %86, %92, %98, %104, %110 in 0 : vector<1x128xf32>, vector<1x128xf32>, vector<1x128xf32>, vector<1x128xf32>, vector<1x128xf32>, vector<1x128xf32>, vector<1x128xf32>, vector<1x128xf32> -> vector<8x128xf32>
    %112 = arith.index_cast %62 : i32 to index
    %c0_30 = arith.constant 0 : index
    %113 = vector.load %arg4[%112, %c0_30] : memref<80x128xf32, #tpu.memory_space<vmem>>, vector<8x128xf32>
    %114 = arith.addf %111, %113 : vector<8x128xf32>
    %c0_31 = arith.constant 0 : index
    %115 = arith.index_cast %62 : i32 to index
    %c0_32 = arith.constant 0 : index
    %116 = vector.load %arg5[%c0_31, %115, %c0_32] : memref<1x80x128xf32, #tpu.memory_space<vmem>>, vector<1x8x128xf32>
    %117 = vector.shape_cast %116 : vector<1x8x128xf32> to vector<8x128xf32>
    %118 = vector.shape_cast %114 : vector<8x128xf32> to vector<1x8x128xf32>
    tpu.vector_store %arg5[%c0_31, %115, %c0_32], %118 {strides = array<i32>} : memref<1x80x128xf32, #tpu.memory_space<vmem>>, vector<1x8x128xf32>,
    %c2_i32_33 = arith.constant 2 : i32
    %c8_i32_34 = arith.constant 8 : i32
    %119 = arith.muli %c2_i32_33, %c8_i32_34 : i32
    %120 = tpu.assume_multiple %119, 8 : i32
    %121 = arith.addi %2, %120 : i32
    %c0_i32_35 = arith.constant 0 : i32
    %122 = arith.addi %121, %c0_i32_35 : i32
    %123 = arith.index_cast %122 : i32 to index
    %124 = memref.load %arg2[%123] : memref<160xi32, #tpu.memory_space<smem>>
    %125 = arith.index_cast %124 : i32 to index
    %c0_36 = arith.constant 0 : index
    %126 = vector.load %arg3[%125, %c0_36] : memref<10000x128xf32, #tpu.memory_space<vmem>>, vector<1x128xf32>
    %127 = arith.addi %2, %120 : i32
    %c1_i32_37 = arith.constant 1 : i32
    %128 = arith.addi %127, %c1_i32_37 : i32
    %129 = arith.index_cast %128 : i32 to index
    %130 = memref.load %arg2[%129] : memref<160xi32, #tpu.memory_space<smem>>
    %131 = arith.index_cast %130 : i32 to index
    %c0_38 = arith.constant 0 : index
    %132 = vector.load %arg3[%131, %c0_38] : memref<10000x128xf32, #tpu.memory_space<vmem>>, vector<1x128xf32>
    %133 = arith.addi %2, %120 : i32
    %c2_i32_39 = arith.constant 2 : i32
    %134 = arith.addi %133, %c2_i32_39 : i32
    %135 = arith.index_cast %134 : i32 to index
    %136 = memref.load %arg2[%135] : memref<160xi32, #tpu.memory_space<smem>>
    %137 = arith.index_cast %136 : i32 to index
    %c0_40 = arith.constant 0 : index
    %138 = vector.load %arg3[%137, %c0_40] : memref<10000x128xf32, #tpu.memory_space<vmem>>, vector<1x128xf32>
    %139 = arith.addi %2, %120 : i32
    %c3_i32_41 = arith.constant 3 : i32
    %140 = arith.addi %139, %c3_i32_41 : i32
    %141 = arith.index_cast %140 : i32 to index
    %142 = memref.load %arg2[%141] : memref<160xi32, #tpu.memory_space<smem>>
    %143 = arith.index_cast %142 : i32 to index
    %c0_42 = arith.constant 0 : index
    %144 = vector.load %arg3[%143, %c0_42] : memref<10000x128xf32, #tpu.memory_space<vmem>>, vector<1x128xf32>
    %145 = arith.addi %2, %120 : i32
    %c4_i32_43 = arith.constant 4 : i32
    %146 = arith.addi %145, %c4_i32_43 : i32
    %147 = arith.index_cast %146 : i32 to index
    %148 = memref.load %arg2[%147] : memref<160xi32, #tpu.memory_space<smem>>
    %149 = arith.index_cast %148 : i32 to index
    %c0_44 = arith.constant 0 : index
    %150 = vector.load %arg3[%149, %c0_44] : memref<10000x128xf32, #tpu.memory_space<vmem>>, vector<1x128xf32>
    %151 = arith.addi %2, %120 : i32
    %c5_i32_45 = arith.constant 5 : i32
    %152 = arith.addi %151, %c5_i32_45 : i32
    %153 = arith.index_cast %152 : i32 to index
    %154 = memref.load %arg2[%153] : memref<160xi32, #tpu.memory_space<smem>>
    %155 = arith.index_cast %154 : i32 to index
    %c0_46 = arith.constant 0 : index
    %156 = vector.load %arg3[%155, %c0_46] : memref<10000x128xf32, #tpu.memory_space<vmem>>, vector<1x128xf32>
    %157 = arith.addi %2, %120 : i32
    %c6_i32_47 = arith.constant 6 : i32
    %158 = arith.addi %157, %c6_i32_47 : i32
    %159 = arith.index_cast %158 : i32 to index
    %160 = memref.load %arg2[%159] : memref<160xi32, #tpu.memory_space<smem>>
    %161 = arith.index_cast %160 : i32 to index
    %c0_48 = arith.constant 0 : index
    %162 = vector.load %arg3[%161, %c0_48] : memref<10000x128xf32, #tpu.memory_space<vmem>>, vector<1x128xf32>
    %163 = arith.addi %2, %120 : i32
    %c7_i32_49 = arith.constant 7 : i32
    %164 = arith.addi %163, %c7_i32_49 : i32
    %165 = arith.index_cast %164 : i32 to index
    %166 = memref.load %arg2[%165] : memref<160xi32, #tpu.memory_space<smem>>
    %167 = arith.index_cast %166 : i32 to index
    %c0_50 = arith.constant 0 : index
    %168 = vector.load %arg3[%167, %c0_50] : memref<10000x128xf32, #tpu.memory_space<vmem>>, vector<1x128xf32>
    %169 = tpu.concatenate %126, %132, %138, %144, %150, %156, %162, %168 in 0 : vector<1x128xf32>, vector<1x128xf32>, vector<1x128xf32>, vector<1x128xf32>, vector<1x128xf32>, vector<1x128xf32>, vector<1x128xf32>, vector<1x128xf32> -> vector<8x128xf32>
    %170 = arith.index_cast %120 : i32 to index
    %c0_51 = arith.constant 0 : index
    %171 = vector.load %arg4[%170, %c0_51] : memref<80x128xf32, #tpu.memory_space<vmem>>, vector<8x128xf32>
    %172 = arith.addf %169, %171 : vector<8x128xf32>
    %c0_52 = arith.constant 0 : index
    %173 = arith.index_cast %120 : i32 to index
    %c0_53 = arith.constant 0 : index
    %174 = vector.load %arg5[%c0_52, %173, %c0_53] : memref<1x80x128xf32, #tpu.memory_space<vmem>>, vector<1x8x128xf32>
    %175 = vector.shape_cast %174 : vector<1x8x128xf32> to vector<8x128xf32>
    %176 = vector.shape_cast %172 : vector<8x128xf32> to vector<1x8x128xf32>
    tpu.vector_store %arg5[%c0_52, %173, %c0_53], %176 {strides = array<i32>} : memref<1x80x128xf32, #tpu.memory_space<vmem>>, vector<1x8x128xf32>,
    %c3_i32_54 = arith.constant 3 : i32
    %c8_i32_55 = arith.constant 8 : i32
    %177 = arith.muli %c3_i32_54, %c8_i32_55 : i32
    %178 = tpu.assume_multiple %177, 8 : i32
    %179 = arith.addi %2, %178 : i32
    %c0_i32_56 = arith.constant 0 : i32
    %180 = arith.addi %179, %c0_i32_56 : i32
    %181 = arith.index_cast %180 : i32 to index
    %182 = memref.load %arg2[%181] : memref<160xi32, #tpu.memory_space<smem>>
    %183 = arith.index_cast %182 : i32 to index
    %c0_57 = arith.constant 0 : index
    %184 = vector.load %arg3[%183, %c0_57] : memref<10000x128xf32, #tpu.memory_space<vmem>>, vector<1x128xf32>
    %185 = arith.addi %2, %178 : i32
    %c1_i32_58 = arith.constant 1 : i32
    %186 = arith.addi %185, %c1_i32_58 : i32
    %187 = arith.index_cast %186 : i32 to index
    %188 = memref.load %arg2[%187] : memref<160xi32, #tpu.memory_space<smem>>
    %189 = arith.index_cast %188 : i32 to index
    %c0_59 = arith.constant 0 : index
    %190 = vector.load %arg3[%189, %c0_59] : memref<10000x128xf32, #tpu.memory_space<vmem>>, vector<1x128xf32>
    %191 = arith.addi %2, %178 : i32
    %c2_i32_60 = arith.constant 2 : i32
    %192 = arith.addi %191, %c2_i32_60 : i32
    %193 = arith.index_cast %192 : i32 to index
    %194 = memref.load %arg2[%193] : memref<160xi32, #tpu.memory_space<smem>>
    %195 = arith.index_cast %194 : i32 to index
    %c0_61 = arith.constant 0 : index
    %196 = vector.load %arg3[%195, %c0_61] : memref<10000x128xf32, #tpu.memory_space<vmem>>, vector<1x128xf32>
    %197 = arith.addi %2, %178 : i32
    %c3_i32_62 = arith.constant 3 : i32
    %198 = arith.addi %197, %c3_i32_62 : i32
    %199 = arith.index_cast %198 : i32 to index
    %200 = memref.load %arg2[%199] : memref<160xi32, #tpu.memory_space<smem>>
    %201 = arith.index_cast %200 : i32 to index
    %c0_63 = arith.constant 0 : index
    %202 = vector.load %arg3[%201, %c0_63] : memref<10000x128xf32, #tpu.memory_space<vmem>>, vector<1x128xf32>
    %203 = arith.addi %2, %178 : i32
    %c4_i32_64 = arith.constant 4 : i32
    %204 = arith.addi %203, %c4_i32_64 : i32
    %205 = arith.index_cast %204 : i32 to index
    %206 = memref.load %arg2[%205] : memref<160xi32, #tpu.memory_space<smem>>
    %207 = arith.index_cast %206 : i32 to index
    %c0_65 = arith.constant 0 : index
    %208 = vector.load %arg3[%207, %c0_65] : memref<10000x128xf32, #tpu.memory_space<vmem>>, vector<1x128xf32>
    %209 = arith.addi %2, %178 : i32
    %c5_i32_66 = arith.constant 5 : i32
    %210 = arith.addi %209, %c5_i32_66 : i32
    %211 = arith.index_cast %210 : i32 to index
    %212 = memref.load %arg2[%211] : memref<160xi32, #tpu.memory_space<smem>>
    %213 = arith.index_cast %212 : i32 to index
    %c0_67 = arith.constant 0 : index
    %214 = vector.load %arg3[%213, %c0_67] : memref<10000x128xf32, #tpu.memory_space<vmem>>, vector<1x128xf32>
    %215 = arith.addi %2, %178 : i32
    %c6_i32_68 = arith.constant 6 : i32
    %216 = arith.addi %215, %c6_i32_68 : i32
    %217 = arith.index_cast %216 : i32 to index
    %218 = memref.load %arg2[%217] : memref<160xi32, #tpu.memory_space<smem>>
    %219 = arith.index_cast %218 : i32 to index
    %c0_69 = arith.constant 0 : index
    %220 = vector.load %arg3[%219, %c0_69] : memref<10000x128xf32, #tpu.memory_space<vmem>>, vector<1x128xf32>
    %221 = arith.addi %2, %178 : i32
    %c7_i32_70 = arith.constant 7 : i32
    %222 = arith.addi %221, %c7_i32_70 : i32
    %223 = arith.index_cast %222 : i32 to index
    %224 = memref.load %arg2[%223] : memref<160xi32, #tpu.memory_space<smem>>
    %225 = arith.index_cast %224 : i32 to index
    %c0_71 = arith.constant 0 : index
    %226 = vector.load %arg3[%225, %c0_71] : memref<10000x128xf32, #tpu.memory_space<vmem>>, vector<1x128xf32>
    %227 = tpu.concatenate %184, %190, %196, %202, %208, %214, %220, %226 in 0 : vector<1x128xf32>, vector<1x128xf32>, vector<1x128xf32>, vector<1x128xf32>, vector<1x128xf32>, vector<1x128xf32>, vector<1x128xf32>, vector<1x128xf32> -> vector<8x128xf32>
    %228 = arith.index_cast %178 : i32 to index
    %c0_72 = arith.constant 0 : index
    %229 = vector.load %arg4[%228, %c0_72] : memref<80x128xf32, #tpu.memory_space<vmem>>, vector<8x128xf32>
    %230 = arith.addf %227, %229 : vector<8x128xf32>
    %c0_73 = arith.constant 0 : index
    %231 = arith.index_cast %178 : i32 to index
    %c0_74 = arith.constant 0 : index
    %232 = vector.load %arg5[%c0_73, %231, %c0_74] : memref<1x80x128xf32, #tpu.memory_space<vmem>>, vector<1x8x128xf32>
    %233 = vector.shape_cast %232 : vector<1x8x128xf32> to vector<8x128xf32>
    %234 = vector.shape_cast %230 : vector<8x128xf32> to vector<1x8x128xf32>
    tpu.vector_store %arg5[%c0_73, %231, %c0_74], %234 {strides = array<i32>} : memref<1x80x128xf32, #tpu.memory_space<vmem>>, vector<1x8x128xf32>,
    %c4_i32_75 = arith.constant 4 : i32
    %c8_i32_76 = arith.constant 8 : i32
    %235 = arith.muli %c4_i32_75, %c8_i32_76 : i32
    %236 = tpu.assume_multiple %235, 8 : i32
    %237 = arith.addi %2, %236 : i32
    %c0_i32_77 = arith.constant 0 : i32
    %238 = arith.addi %237, %c0_i32_77 : i32
    %239 = arith.index_cast %238 : i32 to index
    %240 = memref.load %arg2[%239] : memref<160xi32, #tpu.memory_space<smem>>
    %241 = arith.index_cast %240 : i32 to index
    %c0_78 = arith.constant 0 : index
    %242 = vector.load %arg3[%241, %c0_78] : memref<10000x128xf32, #tpu.memory_space<vmem>>, vector<1x128xf32>
    %243 = arith.addi %2, %236 : i32
    %c1_i32_79 = arith.constant 1 : i32
    %244 = arith.addi %243, %c1_i32_79 : i32
    %245 = arith.index_cast %244 : i32 to index
    %246 = memref.load %arg2[%245] : memref<160xi32, #tpu.memory_space<smem>>
    %247 = arith.index_cast %246 : i32 to index
    %c0_80 = arith.constant 0 : index
    %248 = vector.load %arg3[%247, %c0_80] : memref<10000x128xf32, #tpu.memory_space<vmem>>, vector<1x128xf32>
    %249 = arith.addi %2, %236 : i32
    %c2_i32_81 = arith.constant 2 : i32
    %250 = arith.addi %249, %c2_i32_81 : i32
    %251 = arith.index_cast %250 : i32 to index
    %252 = memref.load %arg2[%251] : memref<160xi32, #tpu.memory_space<smem>>
    %253 = arith.index_cast %252 : i32 to index
    %c0_82 = arith.constant 0 : index
    %254 = vector.load %arg3[%253, %c0_82] : memref<10000x128xf32, #tpu.memory_space<vmem>>, vector<1x128xf32>
    %255 = arith.addi %2, %236 : i32
    %c3_i32_83 = arith.constant 3 : i32
    %256 = arith.addi %255, %c3_i32_83 : i32
    %257 = arith.index_cast %256 : i32 to index
    %258 = memref.load %arg2[%257] : memref<160xi32, #tpu.memory_space<smem>>
    %259 = arith.index_cast %258 : i32 to index
    %c0_84 = arith.constant 0 : index
    %260 = vector.load %arg3[%259, %c0_84] : memref<10000x128xf32, #tpu.memory_space<vmem>>, vector<1x128xf32>
    %261 = arith.addi %2, %236 : i32
    %c4_i32_85 = arith.constant 4 : i32
    %262 = arith.addi %261, %c4_i32_85 : i32
    %263 = arith.index_cast %262 : i32 to index
    %264 = memref.load %arg2[%263] : memref<160xi32, #tpu.memory_space<smem>>
    %265 = arith.index_cast %264 : i32 to index
    %c0_86 = arith.constant 0 : index
    %266 = vector.load %arg3[%265, %c0_86] : memref<10000x128xf32, #tpu.memory_space<vmem>>, vector<1x128xf32>
    %267 = arith.addi %2, %236 : i32
    %c5_i32_87 = arith.constant 5 : i32
    %268 = arith.addi %267, %c5_i32_87 : i32
    %269 = arith.index_cast %268 : i32 to index
    %270 = memref.load %arg2[%269] : memref<160xi32, #tpu.memory_space<smem>>
    %271 = arith.index_cast %270 : i32 to index
    %c0_88 = arith.constant 0 : index
    %272 = vector.load %arg3[%271, %c0_88] : memref<10000x128xf32, #tpu.memory_space<vmem>>, vector<1x128xf32>
    %273 = arith.addi %2, %236 : i32
    %c6_i32_89 = arith.constant 6 : i32
    %274 = arith.addi %273, %c6_i32_89 : i32
    %275 = arith.index_cast %274 : i32 to index
    %276 = memref.load %arg2[%275] : memref<160xi32, #tpu.memory_space<smem>>
    %277 = arith.index_cast %276 : i32 to index
    %c0_90 = arith.constant 0 : index
    %278 = vector.load %arg3[%277, %c0_90] : memref<10000x128xf32, #tpu.memory_space<vmem>>, vector<1x128xf32>
    %279 = arith.addi %2, %236 : i32
    %c7_i32_91 = arith.constant 7 : i32
    %280 = arith.addi %279, %c7_i32_91 : i32
    %281 = arith.index_cast %280 : i32 to index
    %282 = memref.load %arg2[%281] : memref<160xi32, #tpu.memory_space<smem>>
    %283 = arith.index_cast %282 : i32 to index
    %c0_92 = arith.constant 0 : index
    %284 = vector.load %arg3[%283, %c0_92] : memref<10000x128xf32, #tpu.memory_space<vmem>>, vector<1x128xf32>
    %285 = tpu.concatenate %242, %248, %254, %260, %266, %272, %278, %284 in 0 : vector<1x128xf32>, vector<1x128xf32>, vector<1x128xf32>, vector<1x128xf32>, vector<1x128xf32>, vector<1x128xf32>, vector<1x128xf32>, vector<1x128xf32> -> vector<8x128xf32>
    %286 = arith.index_cast %236 : i32 to index
    %c0_93 = arith.constant 0 : index
    %287 = vector.load %arg4[%286, %c0_93] : memref<80x128xf32, #tpu.memory_space<vmem>>, vector<8x128xf32>
    %288 = arith.addf %285, %287 : vector<8x128xf32>
    %c0_94 = arith.constant 0 : index
    %289 = arith.index_cast %236 : i32 to index
    %c0_95 = arith.constant 0 : index
    %290 = vector.load %arg5[%c0_94, %289, %c0_95] : memref<1x80x128xf32, #tpu.memory_space<vmem>>, vector<1x8x128xf32>
    %291 = vector.shape_cast %290 : vector<1x8x128xf32> to vector<8x128xf32>
    %292 = vector.shape_cast %288 : vector<8x128xf32> to vector<1x8x128xf32>
    tpu.vector_store %arg5[%c0_94, %289, %c0_95], %292 {strides = array<i32>} : memref<1x80x128xf32, #tpu.memory_space<vmem>>, vector<1x8x128xf32>,
    %c5_i32_96 = arith.constant 5 : i32
    %c8_i32_97 = arith.constant 8 : i32
    %293 = arith.muli %c5_i32_96, %c8_i32_97 : i32
    %294 = tpu.assume_multiple %293, 8 : i32
    %295 = arith.addi %2, %294 : i32
    %c0_i32_98 = arith.constant 0 : i32
    %296 = arith.addi %295, %c0_i32_98 : i32
    %297 = arith.index_cast %296 : i32 to index
    %298 = memref.load %arg2[%297] : memref<160xi32, #tpu.memory_space<smem>>
    %299 = arith.index_cast %298 : i32 to index
    %c0_99 = arith.constant 0 : index
    %300 = vector.load %arg3[%299, %c0_99] : memref<10000x128xf32, #tpu.memory_space<vmem>>, vector<1x128xf32>
    %301 = arith.addi %2, %294 : i32
    %c1_i32_100 = arith.constant 1 : i32
    %302 = arith.addi %301, %c1_i32_100 : i32
    %303 = arith.index_cast %302 : i32 to index
    %304 = memref.load %arg2[%303] : memref<160xi32, #tpu.memory_space<smem>>
    %305 = arith.index_cast %304 : i32 to index
    %c0_101 = arith.constant 0 : index
    %306 = vector.load %arg3[%305, %c0_101] : memref<10000x128xf32, #tpu.memory_space<vmem>>, vector<1x128xf32>
    %307 = arith.addi %2, %294 : i32
    %c2_i32_102 = arith.constant 2 : i32
    %308 = arith.addi %307, %c2_i32_102 : i32
    %309 = arith.index_cast %308 : i32 to index
    %310 = memref.load %arg2[%309] : memref<160xi32, #tpu.memory_space<smem>>
    %311 = arith.index_cast %310 : i32 to index
    %c0_103 = arith.constant 0 : index
    %312 = vector.load %arg3[%311, %c0_103] : memref<10000x128xf32, #tpu.memory_space<vmem>>, vector<1x128xf32>
    %313 = arith.addi %2, %294 : i32
    %c3_i32_104 = arith.constant 3 : i32
    %314 = arith.addi %313, %c3_i32_104 : i32
    %315 = arith.index_cast %314 : i32 to index
    %316 = memref.load %arg2[%315] : memref<160xi32, #tpu.memory_space<smem>>
    %317 = arith.index_cast %316 : i32 to index
    %c0_105 = arith.constant 0 : index
    %318 = vector.load %arg3[%317, %c0_105] : memref<10000x128xf32, #tpu.memory_space<vmem>>, vector<1x128xf32>
    %319 = arith.addi %2, %294 : i32
    %c4_i32_106 = arith.constant 4 : i32
    %320 = arith.addi %319, %c4_i32_106 : i32
    %321 = arith.index_cast %320 : i32 to index
    %322 = memref.load %arg2[%321] : memref<160xi32, #tpu.memory_space<smem>>
    %323 = arith.index_cast %322 : i32 to index
    %c0_107 = arith.constant 0 : index
    %324 = vector.load %arg3[%323, %c0_107] : memref<10000x128xf32, #tpu.memory_space<vmem>>, vector<1x128xf32>
    %325 = arith.addi %2, %294 : i32
    %c5_i32_108 = arith.constant 5 : i32
    %326 = arith.addi %325, %c5_i32_108 : i32
    %327 = arith.index_cast %326 : i32 to index
    %328 = memref.load %arg2[%327] : memref<160xi32, #tpu.memory_space<smem>>
    %329 = arith.index_cast %328 : i32 to index
    %c0_109 = arith.constant 0 : index
    %330 = vector.load %arg3[%329, %c0_109] : memref<10000x128xf32, #tpu.memory_space<vmem>>, vector<1x128xf32>
    %331 = arith.addi %2, %294 : i32
    %c6_i32_110 = arith.constant 6 : i32
    %332 = arith.addi %331, %c6_i32_110 : i32
    %333 = arith.index_cast %332 : i32 to index
    %334 = memref.load %arg2[%333] : memref<160xi32, #tpu.memory_space<smem>>
    %335 = arith.index_cast %334 : i32 to index
    %c0_111 = arith.constant 0 : index
    %336 = vector.load %arg3[%335, %c0_111] : memref<10000x128xf32, #tpu.memory_space<vmem>>, vector<1x128xf32>
    %337 = arith.addi %2, %294 : i32
    %c7_i32_112 = arith.constant 7 : i32
    %338 = arith.addi %337, %c7_i32_112 : i32
    %339 = arith.index_cast %338 : i32 to index
    %340 = memref.load %arg2[%339] : memref<160xi32, #tpu.memory_space<smem>>
    %341 = arith.index_cast %340 : i32 to index
    %c0_113 = arith.constant 0 : index
    %342 = vector.load %arg3[%341, %c0_113] : memref<10000x128xf32, #tpu.memory_space<vmem>>, vector<1x128xf32>
    %343 = tpu.concatenate %300, %306, %312, %318, %324, %330, %336, %342 in 0 : vector<1x128xf32>, vector<1x128xf32>, vector<1x128xf32>, vector<1x128xf32>, vector<1x128xf32>, vector<1x128xf32>, vector<1x128xf32>, vector<1x128xf32> -> vector<8x128xf32>
    %344 = arith.index_cast %294 : i32 to index
    %c0_114 = arith.constant 0 : index
    %345 = vector.load %arg4[%344, %c0_114] : memref<80x128xf32, #tpu.memory_space<vmem>>, vector<8x128xf32>
    %346 = arith.addf %343, %345 : vector<8x128xf32>
    %c0_115 = arith.constant 0 : index
    %347 = arith.index_cast %294 : i32 to index
    %c0_116 = arith.constant 0 : index
    %348 = vector.load %arg5[%c0_115, %347, %c0_116] : memref<1x80x128xf32, #tpu.memory_space<vmem>>, vector<1x8x128xf32>
    %349 = vector.shape_cast %348 : vector<1x8x128xf32> to vector<8x128xf32>
    %350 = vector.shape_cast %346 : vector<8x128xf32> to vector<1x8x128xf32>
    tpu.vector_store %arg5[%c0_115, %347, %c0_116], %350 {strides = array<i32>} : memref<1x80x128xf32, #tpu.memory_space<vmem>>, vector<1x8x128xf32>,
    %c6_i32_117 = arith.constant 6 : i32
    %c8_i32_118 = arith.constant 8 : i32
    %351 = arith.muli %c6_i32_117, %c8_i32_118 : i32
    %352 = tpu.assume_multiple %351, 8 : i32
    %353 = arith.addi %2, %352 : i32
    %c0_i32_119 = arith.constant 0 : i32
    %354 = arith.addi %353, %c0_i32_119 : i32
    %355 = arith.index_cast %354 : i32 to index
    %356 = memref.load %arg2[%355] : memref<160xi32, #tpu.memory_space<smem>>
    %357 = arith.index_cast %356 : i32 to index
    %c0_120 = arith.constant 0 : index
    %358 = vector.load %arg3[%357, %c0_120] : memref<10000x128xf32, #tpu.memory_space<vmem>>, vector<1x128xf32>
    %359 = arith.addi %2, %352 : i32
    %c1_i32_121 = arith.constant 1 : i32
    %360 = arith.addi %359, %c1_i32_121 : i32
    %361 = arith.index_cast %360 : i32 to index
    %362 = memref.load %arg2[%361] : memref<160xi32, #tpu.memory_space<smem>>
    %363 = arith.index_cast %362 : i32 to index
    %c0_122 = arith.constant 0 : index
    %364 = vector.load %arg3[%363, %c0_122] : memref<10000x128xf32, #tpu.memory_space<vmem>>, vector<1x128xf32>
    %365 = arith.addi %2, %352 : i32
    %c2_i32_123 = arith.constant 2 : i32
    %366 = arith.addi %365, %c2_i32_123 : i32
    %367 = arith.index_cast %366 : i32 to index
    %368 = memref.load %arg2[%367] : memref<160xi32, #tpu.memory_space<smem>>
    %369 = arith.index_cast %368 : i32 to index
    %c0_124 = arith.constant 0 : index
    %370 = vector.load %arg3[%369, %c0_124] : memref<10000x128xf32, #tpu.memory_space<vmem>>, vector<1x128xf32>
    %371 = arith.addi %2, %352 : i32
    %c3_i32_125 = arith.constant 3 : i32
    %372 = arith.addi %371, %c3_i32_125 : i32
    %373 = arith.index_cast %372 : i32 to index
    %374 = memref.load %arg2[%373] : memref<160xi32, #tpu.memory_space<smem>>
    %375 = arith.index_cast %374 : i32 to index
    %c0_126 = arith.constant 0 : index
    %376 = vector.load %arg3[%375, %c0_126] : memref<10000x128xf32, #tpu.memory_space<vmem>>, vector<1x128xf32>
    %377 = arith.addi %2, %352 : i32
    %c4_i32_127 = arith.constant 4 : i32
    %378 = arith.addi %377, %c4_i32_127 : i32
    %379 = arith.index_cast %378 : i32 to index
    %380 = memref.load %arg2[%379] : memref<160xi32, #tpu.memory_space<smem>>
    %381 = arith.index_cast %380 : i32 to index
    %c0_128 = arith.constant 0 : index
    %382 = vector.load %arg3[%381, %c0_128] : memref<10000x128xf32, #tpu.memory_space<vmem>>, vector<1x128xf32>
    %383 = arith.addi %2, %352 : i32
    %c5_i32_129 = arith.constant 5 : i32
    %384 = arith.addi %383, %c5_i32_129 : i32
    %385 = arith.index_cast %384 : i32 to index
    %386 = memref.load %arg2[%385] : memref<160xi32, #tpu.memory_space<smem>>
    %387 = arith.index_cast %386 : i32 to index
    %c0_130 = arith.constant 0 : index
    %388 = vector.load %arg3[%387, %c0_130] : memref<10000x128xf32, #tpu.memory_space<vmem>>, vector<1x128xf32>
    %389 = arith.addi %2, %352 : i32
    %c6_i32_131 = arith.constant 6 : i32
    %390 = arith.addi %389, %c6_i32_131 : i32
    %391 = arith.index_cast %390 : i32 to index
    %392 = memref.load %arg2[%391] : memref<160xi32, #tpu.memory_space<smem>>
    %393 = arith.index_cast %392 : i32 to index
    %c0_132 = arith.constant 0 : index
    %394 = vector.load %arg3[%393, %c0_132] : memref<10000x128xf32, #tpu.memory_space<vmem>>, vector<1x128xf32>
    %395 = arith.addi %2, %352 : i32
    %c7_i32_133 = arith.constant 7 : i32
    %396 = arith.addi %395, %c7_i32_133 : i32
    %397 = arith.index_cast %396 : i32 to index
    %398 = memref.load %arg2[%397] : memref<160xi32, #tpu.memory_space<smem>>
    %399 = arith.index_cast %398 : i32 to index
    %c0_134 = arith.constant 0 : index
    %400 = vector.load %arg3[%399, %c0_134] : memref<10000x128xf32, #tpu.memory_space<vmem>>, vector<1x128xf32>
    %401 = tpu.concatenate %358, %364, %370, %376, %382, %388, %394, %400 in 0 : vector<1x128xf32>, vector<1x128xf32>, vector<1x128xf32>, vector<1x128xf32>, vector<1x128xf32>, vector<1x128xf32>, vector<1x128xf32>, vector<1x128xf32> -> vector<8x128xf32>
    %402 = arith.index_cast %352 : i32 to index
    %c0_135 = arith.constant 0 : index
    %403 = vector.load %arg4[%402, %c0_135] : memref<80x128xf32, #tpu.memory_space<vmem>>, vector<8x128xf32>
    %404 = arith.addf %401, %403 : vector<8x128xf32>
    %c0_136 = arith.constant 0 : index
    %405 = arith.index_cast %352 : i32 to index
    %c0_137 = arith.constant 0 : index
    %406 = vector.load %arg5[%c0_136, %405, %c0_137] : memref<1x80x128xf32, #tpu.memory_space<vmem>>, vector<1x8x128xf32>
    %407 = vector.shape_cast %406 : vector<1x8x128xf32> to vector<8x128xf32>
    %408 = vector.shape_cast %404 : vector<8x128xf32> to vector<1x8x128xf32>
    tpu.vector_store %arg5[%c0_136, %405, %c0_137], %408 {strides = array<i32>} : memref<1x80x128xf32, #tpu.memory_space<vmem>>, vector<1x8x128xf32>,
    %c7_i32_138 = arith.constant 7 : i32
    %c8_i32_139 = arith.constant 8 : i32
    %409 = arith.muli %c7_i32_138, %c8_i32_139 : i32
    %410 = tpu.assume_multiple %409, 8 : i32
    %411 = arith.addi %2, %410 : i32
    %c0_i32_140 = arith.constant 0 : i32
    %412 = arith.addi %411, %c0_i32_140 : i32
    %413 = arith.index_cast %412 : i32 to index
    %414 = memref.load %arg2[%413] : memref<160xi32, #tpu.memory_space<smem>>
    %415 = arith.index_cast %414 : i32 to index
    %c0_141 = arith.constant 0 : index
    %416 = vector.load %arg3[%415, %c0_141] : memref<10000x128xf32, #tpu.memory_space<vmem>>, vector<1x128xf32>
    %417 = arith.addi %2, %410 : i32
    %c1_i32_142 = arith.constant 1 : i32
    %418 = arith.addi %417, %c1_i32_142 : i32
    %419 = arith.index_cast %418 : i32 to index
    %420 = memref.load %arg2[%419] : memref<160xi32, #tpu.memory_space<smem>>
    %421 = arith.index_cast %420 : i32 to index
    %c0_143 = arith.constant 0 : index
    %422 = vector.load %arg3[%421, %c0_143] : memref<10000x128xf32, #tpu.memory_space<vmem>>, vector<1x128xf32>
    %423 = arith.addi %2, %410 : i32
    %c2_i32_144 = arith.constant 2 : i32
    %424 = arith.addi %423, %c2_i32_144 : i32
    %425 = arith.index_cast %424 : i32 to index
    %426 = memref.load %arg2[%425] : memref<160xi32, #tpu.memory_space<smem>>
    %427 = arith.index_cast %426 : i32 to index
    %c0_145 = arith.constant 0 : index
    %428 = vector.load %arg3[%427, %c0_145] : memref<10000x128xf32, #tpu.memory_space<vmem>>, vector<1x128xf32>
    %429 = arith.addi %2, %410 : i32
    %c3_i32_146 = arith.constant 3 : i32
    %430 = arith.addi %429, %c3_i32_146 : i32
    %431 = arith.index_cast %430 : i32 to index
    %432 = memref.load %arg2[%431] : memref<160xi32, #tpu.memory_space<smem>>
    %433 = arith.index_cast %432 : i32 to index
    %c0_147 = arith.constant 0 : index
    %434 = vector.load %arg3[%433, %c0_147] : memref<10000x128xf32, #tpu.memory_space<vmem>>, vector<1x128xf32>
    %435 = arith.addi %2, %410 : i32
    %c4_i32_148 = arith.constant 4 : i32
    %436 = arith.addi %435, %c4_i32_148 : i32
    %437 = arith.index_cast %436 : i32 to index
    %438 = memref.load %arg2[%437] : memref<160xi32, #tpu.memory_space<smem>>
    %439 = arith.index_cast %438 : i32 to index
    %c0_149 = arith.constant 0 : index
    %440 = vector.load %arg3[%439, %c0_149] : memref<10000x128xf32, #tpu.memory_space<vmem>>, vector<1x128xf32>
    %441 = arith.addi %2, %410 : i32
    %c5_i32_150 = arith.constant 5 : i32
    %442 = arith.addi %441, %c5_i32_150 : i32
    %443 = arith.index_cast %442 : i32 to index
    %444 = memref.load %arg2[%443] : memref<160xi32, #tpu.memory_space<smem>>
    %445 = arith.index_cast %444 : i32 to index
    %c0_151 = arith.constant 0 : index
    %446 = vector.load %arg3[%445, %c0_151] : memref<10000x128xf32, #tpu.memory_space<vmem>>, vector<1x128xf32>
    %447 = arith.addi %2, %410 : i32
    %c6_i32_152 = arith.constant 6 : i32
    %448 = arith.addi %447, %c6_i32_152 : i32
    %449 = arith.index_cast %448 : i32 to index
    %450 = memref.load %arg2[%449] : memref<160xi32, #tpu.memory_space<smem>>
    %451 = arith.index_cast %450 : i32 to index
    %c0_153 = arith.constant 0 : index
    %452 = vector.load %arg3[%451, %c0_153] : memref<10000x128xf32, #tpu.memory_space<vmem>>, vector<1x128xf32>
    %453 = arith.addi %2, %410 : i32
    %c7_i32_154 = arith.constant 7 : i32
    %454 = arith.addi %453, %c7_i32_154 : i32
    %455 = arith.index_cast %454 : i32 to index
    %456 = memref.load %arg2[%455] : memref<160xi32, #tpu.memory_space<smem>>
    %457 = arith.index_cast %456 : i32 to index
    %c0_155 = arith.constant 0 : index
    %458 = vector.load %arg3[%457, %c0_155] : memref<10000x128xf32, #tpu.memory_space<vmem>>, vector<1x128xf32>
    %459 = tpu.concatenate %416, %422, %428, %434, %440, %446, %452, %458 in 0 : vector<1x128xf32>, vector<1x128xf32>, vector<1x128xf32>, vector<1x128xf32>, vector<1x128xf32>, vector<1x128xf32>, vector<1x128xf32>, vector<1x128xf32> -> vector<8x128xf32>
    %460 = arith.index_cast %410 : i32 to index
    %c0_156 = arith.constant 0 : index
    %461 = vector.load %arg4[%460, %c0_156] : memref<80x128xf32, #tpu.memory_space<vmem>>, vector<8x128xf32>
    %462 = arith.addf %459, %461 : vector<8x128xf32>
    %c0_157 = arith.constant 0 : index
    %463 = arith.index_cast %410 : i32 to index
    %c0_158 = arith.constant 0 : index
    %464 = vector.load %arg5[%c0_157, %463, %c0_158] : memref<1x80x128xf32, #tpu.memory_space<vmem>>, vector<1x8x128xf32>
    %465 = vector.shape_cast %464 : vector<1x8x128xf32> to vector<8x128xf32>
    %466 = vector.shape_cast %462 : vector<8x128xf32> to vector<1x8x128xf32>
    tpu.vector_store %arg5[%c0_157, %463, %c0_158], %466 {strides = array<i32>} : memref<1x80x128xf32, #tpu.memory_space<vmem>>, vector<1x8x128xf32>,
    %c8_i32_159 = arith.constant 8 : i32
    %c8_i32_160 = arith.constant 8 : i32
    %467 = arith.muli %c8_i32_159, %c8_i32_160 : i32
    %468 = tpu.assume_multiple %467, 8 : i32
    %469 = arith.addi %2, %468 : i32
    %c0_i32_161 = arith.constant 0 : i32
    %470 = arith.addi %469, %c0_i32_161 : i32
    %471 = arith.index_cast %470 : i32 to index
    %472 = memref.load %arg2[%471] : memref<160xi32, #tpu.memory_space<smem>>
    %473 = arith.index_cast %472 : i32 to index
    %c0_162 = arith.constant 0 : index
    %474 = vector.load %arg3[%473, %c0_162] : memref<10000x128xf32, #tpu.memory_space<vmem>>, vector<1x128xf32>
    %475 = arith.addi %2, %468 : i32
    %c1_i32_163 = arith.constant 1 : i32
    %476 = arith.addi %475, %c1_i32_163 : i32
    %477 = arith.index_cast %476 : i32 to index
    %478 = memref.load %arg2[%477] : memref<160xi32, #tpu.memory_space<smem>>
    %479 = arith.index_cast %478 : i32 to index
    %c0_164 = arith.constant 0 : index
    %480 = vector.load %arg3[%479, %c0_164] : memref<10000x128xf32, #tpu.memory_space<vmem>>, vector<1x128xf32>
    %481 = arith.addi %2, %468 : i32
    %c2_i32_165 = arith.constant 2 : i32
    %482 = arith.addi %481, %c2_i32_165 : i32
    %483 = arith.index_cast %482 : i32 to index
    %484 = memref.load %arg2[%483] : memref<160xi32, #tpu.memory_space<smem>>
    %485 = arith.index_cast %484 : i32 to index
    %c0_166 = arith.constant 0 : index
    %486 = vector.load %arg3[%485, %c0_166] : memref<10000x128xf32, #tpu.memory_space<vmem>>, vector<1x128xf32>
    %487 = arith.addi %2, %468 : i32
    %c3_i32_167 = arith.constant 3 : i32
    %488 = arith.addi %487, %c3_i32_167 : i32
    %489 = arith.index_cast %488 : i32 to index
    %490 = memref.load %arg2[%489] : memref<160xi32, #tpu.memory_space<smem>>
    %491 = arith.index_cast %490 : i32 to index
    %c0_168 = arith.constant 0 : index
    %492 = vector.load %arg3[%491, %c0_168] : memref<10000x128xf32, #tpu.memory_space<vmem>>, vector<1x128xf32>
    %493 = arith.addi %2, %468 : i32
    %c4_i32_169 = arith.constant 4 : i32
    %494 = arith.addi %493, %c4_i32_169 : i32
    %495 = arith.index_cast %494 : i32 to index
    %496 = memref.load %arg2[%495] : memref<160xi32, #tpu.memory_space<smem>>
    %497 = arith.index_cast %496 : i32 to index
    %c0_170 = arith.constant 0 : index
    %498 = vector.load %arg3[%497, %c0_170] : memref<10000x128xf32, #tpu.memory_space<vmem>>, vector<1x128xf32>
    %499 = arith.addi %2, %468 : i32
    %c5_i32_171 = arith.constant 5 : i32
    %500 = arith.addi %499, %c5_i32_171 : i32
    %501 = arith.index_cast %500 : i32 to index
    %502 = memref.load %arg2[%501] : memref<160xi32, #tpu.memory_space<smem>>
    %503 = arith.index_cast %502 : i32 to index
    %c0_172 = arith.constant 0 : index
    %504 = vector.load %arg3[%503, %c0_172] : memref<10000x128xf32, #tpu.memory_space<vmem>>, vector<1x128xf32>
    %505 = arith.addi %2, %468 : i32
    %c6_i32_173 = arith.constant 6 : i32
    %506 = arith.addi %505, %c6_i32_173 : i32
    %507 = arith.index_cast %506 : i32 to index
    %508 = memref.load %arg2[%507] : memref<160xi32, #tpu.memory_space<smem>>
    %509 = arith.index_cast %508 : i32 to index
    %c0_174 = arith.constant 0 : index
    %510 = vector.load %arg3[%509, %c0_174] : memref<10000x128xf32, #tpu.memory_space<vmem>>, vector<1x128xf32>
    %511 = arith.addi %2, %468 : i32
    %c7_i32_175 = arith.constant 7 : i32
    %512 = arith.addi %511, %c7_i32_175 : i32
    %513 = arith.index_cast %512 : i32 to index
    %514 = memref.load %arg2[%513] : memref<160xi32, #tpu.memory_space<smem>>
    %515 = arith.index_cast %514 : i32 to index
    %c0_176 = arith.constant 0 : index
    %516 = vector.load %arg3[%515, %c0_176] : memref<10000x128xf32, #tpu.memory_space<vmem>>, vector<1x128xf32>
    %517 = tpu.concatenate %474, %480, %486, %492, %498, %504, %510, %516 in 0 : vector<1x128xf32>, vector<1x128xf32>, vector<1x128xf32>, vector<1x128xf32>, vector<1x128xf32>, vector<1x128xf32>, vector<1x128xf32>, vector<1x128xf32> -> vector<8x128xf32>
    %518 = arith.index_cast %468 : i32 to index
    %c0_177 = arith.constant 0 : index
    %519 = vector.load %arg4[%518, %c0_177] : memref<80x128xf32, #tpu.memory_space<vmem>>, vector<8x128xf32>
    %520 = arith.addf %517, %519 : vector<8x128xf32>
    %c0_178 = arith.constant 0 : index
    %521 = arith.index_cast %468 : i32 to index
    %c0_179 = arith.constant 0 : index
    %522 = vector.load %arg5[%c0_178, %521, %c0_179] : memref<1x80x128xf32, #tpu.memory_space<vmem>>, vector<1x8x128xf32>
    %523 = vector.shape_cast %522 : vector<1x8x128xf32> to vector<8x128xf32>
    %524 = vector.shape_cast %520 : vector<8x128xf32> to vector<1x8x128xf32>
    tpu.vector_store %arg5[%c0_178, %521, %c0_179], %524 {strides = array<i32>} : memref<1x80x128xf32, #tpu.memory_space<vmem>>, vector<1x8x128xf32>,
    %c9_i32 = arith.constant 9 : i32
    %c8_i32_180 = arith.constant 8 : i32
    %525 = arith.muli %c9_i32, %c8_i32_180 : i32
    %526 = tpu.assume_multiple %525, 8 : i32
    %527 = arith.addi %2, %526 : i32
    %c0_i32_181 = arith.constant 0 : i32
    %528 = arith.addi %527, %c0_i32_181 : i32
    %529 = arith.index_cast %528 : i32 to index
    %530 = memref.load %arg2[%529] : memref<160xi32, #tpu.memory_space<smem>>
    %531 = arith.index_cast %530 : i32 to index
    %c0_182 = arith.constant 0 : index
    %532 = vector.load %arg3[%531, %c0_182] : memref<10000x128xf32, #tpu.memory_space<vmem>>, vector<1x128xf32>
    %533 = arith.addi %2, %526 : i32
    %c1_i32_183 = arith.constant 1 : i32
    %534 = arith.addi %533, %c1_i32_183 : i32
    %535 = arith.index_cast %534 : i32 to index
    %536 = memref.load %arg2[%535] : memref<160xi32, #tpu.memory_space<smem>>
    %537 = arith.index_cast %536 : i32 to index
    %c0_184 = arith.constant 0 : index
    %538 = vector.load %arg3[%537, %c0_184] : memref<10000x128xf32, #tpu.memory_space<vmem>>, vector<1x128xf32>
    %539 = arith.addi %2, %526 : i32
    %c2_i32_185 = arith.constant 2 : i32
    %540 = arith.addi %539, %c2_i32_185 : i32
    %541 = arith.index_cast %540 : i32 to index
    %542 = memref.load %arg2[%541] : memref<160xi32, #tpu.memory_space<smem>>
    %543 = arith.index_cast %542 : i32 to index
    %c0_186 = arith.constant 0 : index
    %544 = vector.load %arg3[%543, %c0_186] : memref<10000x128xf32, #tpu.memory_space<vmem>>, vector<1x128xf32>
    %545 = arith.addi %2, %526 : i32
    %c3_i32_187 = arith.constant 3 : i32
    %546 = arith.addi %545, %c3_i32_187 : i32
    %547 = arith.index_cast %546 : i32 to index
    %548 = memref.load %arg2[%547] : memref<160xi32, #tpu.memory_space<smem>>
    %549 = arith.index_cast %548 : i32 to index
    %c0_188 = arith.constant 0 : index
    %550 = vector.load %arg3[%549, %c0_188] : memref<10000x128xf32, #tpu.memory_space<vmem>>, vector<1x128xf32>
    %551 = arith.addi %2, %526 : i32
    %c4_i32_189 = arith.constant 4 : i32
    %552 = arith.addi %551, %c4_i32_189 : i32
    %553 = arith.index_cast %552 : i32 to index
    %554 = memref.load %arg2[%553] : memref<160xi32, #tpu.memory_space<smem>>
    %555 = arith.index_cast %554 : i32 to index
    %c0_190 = arith.constant 0 : index
    %556 = vector.load %arg3[%555, %c0_190] : memref<10000x128xf32, #tpu.memory_space<vmem>>, vector<1x128xf32>
    %557 = arith.addi %2, %526 : i32
    %c5_i32_191 = arith.constant 5 : i32
    %558 = arith.addi %557, %c5_i32_191 : i32
    %559 = arith.index_cast %558 : i32 to index
    %560 = memref.load %arg2[%559] : memref<160xi32, #tpu.memory_space<smem>>
    %561 = arith.index_cast %560 : i32 to index
    %c0_192 = arith.constant 0 : index
    %562 = vector.load %arg3[%561, %c0_192] : memref<10000x128xf32, #tpu.memory_space<vmem>>, vector<1x128xf32>
    %563 = arith.addi %2, %526 : i32
    %c6_i32_193 = arith.constant 6 : i32
    %564 = arith.addi %563, %c6_i32_193 : i32
    %565 = arith.index_cast %564 : i32 to index
    %566 = memref.load %arg2[%565] : memref<160xi32, #tpu.memory_space<smem>>
    %567 = arith.index_cast %566 : i32 to index
    %c0_194 = arith.constant 0 : index
    %568 = vector.load %arg3[%567, %c0_194] : memref<10000x128xf32, #tpu.memory_space<vmem>>, vector<1x128xf32>
    %569 = arith.addi %2, %526 : i32
    %c7_i32_195 = arith.constant 7 : i32
    %570 = arith.addi %569, %c7_i32_195 : i32
    %571 = arith.index_cast %570 : i32 to index
    %572 = memref.load %arg2[%571] : memref<160xi32, #tpu.memory_space<smem>>
    %573 = arith.index_cast %572 : i32 to index
    %c0_196 = arith.constant 0 : index
    %574 = vector.load %arg3[%573, %c0_196] : memref<10000x128xf32, #tpu.memory_space<vmem>>, vector<1x128xf32>
    %575 = tpu.concatenate %532, %538, %544, %550, %556, %562, %568, %574 in 0 : vector<1x128xf32>, vector<1x128xf32>, vector<1x128xf32>, vector<1x128xf32>, vector<1x128xf32>, vector<1x128xf32>, vector<1x128xf32>, vector<1x128xf32> -> vector<8x128xf32>
    %576 = arith.index_cast %526 : i32 to index
    %c0_197 = arith.constant 0 : index
    %577 = vector.load %arg4[%576, %c0_197] : memref<80x128xf32, #tpu.memory_space<vmem>>, vector<8x128xf32>
    %578 = arith.addf %575, %577 : vector<8x128xf32>
    %c0_198 = arith.constant 0 : index
    %579 = arith.index_cast %526 : i32 to index
    %c0_199 = arith.constant 0 : index
    %580 = vector.load %arg5[%c0_198, %579, %c0_199] : memref<1x80x128xf32, #tpu.memory_space<vmem>>, vector<1x8x128xf32>
    %581 = vector.shape_cast %580 : vector<1x8x128xf32> to vector<8x128xf32>
    %582 = vector.shape_cast %578 : vector<8x128xf32> to vector<1x8x128xf32>
    tpu.vector_store %arg5[%c0_198, %579, %c0_199], %582 {strides = array<i32>} : memref<1x80x128xf32, #tpu.memory_space<vmem>>, vector<1x8x128xf32>,
    %c10_i32 = arith.constant 10 : i32
    return
  }
  func.func @transform_0(%arg0: i32, %arg1: i32, %arg2: memref<160xi32, #tpu.memory_space<smem>>) -> (i32, i32) {
    %c0_i32 = arith.constant 0 : i32
    %c0_i32_0 = arith.constant 0 : i32
    %c0_i32_1 = arith.constant 0 : i32
    return %c0_i32, %c0_i32_0 : i32, i32
  }
  func.func @transform_1(%arg0: i32, %arg1: i32, %arg2: memref<160xi32, #tpu.memory_space<smem>>) -> (i32, i32) {
    %c0_i32 = arith.constant 0 : i32
    %c0_i32_0 = arith.constant 0 : i32
    return %arg1, %c0_i32 : i32, i32
  }
  func.func @transform_2(%arg0: i32, %arg1: i32, %arg2: memref<160xi32, #tpu.memory_space<smem>>) -> (i32, i32, i32) {
    %c0_i32 = arith.constant 0 : i32
    %c0_i32_0 = arith.constant 0 : i32
    return %arg0, %arg1, %c0_i32 : i32, i32, i32
  }
}

</mosaic_0001>

<llo_original>
// kernel: tpu_custom_call.1
$region0: #{tpu_custom_call.1}
  #allocation0 [shape = 'u32[]', space=smem, size = 0x4, offset = 0x4, fixed_abs, tag = 'smem constant byte address 0x4 - core index']
  #allocation1 [shape = 'u32[144,128]{1,0:T(1,128)}', space=vmem, size = 0x12000, scoped, tag = 'internal scratch']
  #allocation2 [shape = 's32[1]{0}', space=sflag, size = 0x4, scoped, tag = 'scoped memory for tpu_custom_call.1']
  #allocation3 [shape = 'u8[1024]{0}', space=smem, size = 0x400, scoped, tag = 'prefetched SMEM operand 0']
  %s0 = inlined_call_operand.hbm [shape: s32[160], index: 0, kind: input, shape index: {}]
  %s1 = inlined_call_operand.hbm [shape: f32[10000,128], index: 1, kind: input, shape index: {}]
  %s2 = inlined_call_operand.hbm [shape: f32[80,128], index: 2, kind: input, shape index: {}]
  %s3 = inlined_call_operand.hbm [shape: f32[2,80,128], index: 3, kind: output, shape index: {}]
  %s4 = sld [smem:[#allocation0]]
  $region49: #{tpu_custom_call.1} parent=0
    _
  %s6 = ssub.s32 1, %s4
  %s7 = scalar_select 0, %s6, %s4
  %9 = dma.hbm_to_smem %s0, 32, [#allocation3], [#allocation2]
  %10 = dma.done [#allocation2], 32
  %11 = sfence
  $region1: #{tpu_custom_call.1} parent=0
    #allocation4 [shape = 'u8[5120000]{0}', space=vmem, size = 0x4e2000, scoped, tag = 'input window, operand 1, single buffered']
    #allocation5 [shape = 's32[2]{0}', space=sflag, size = 0x8, scoped, tag = 'scoped memory for tpu_custom_call.1']
    #allocation6 [shape = 's32[2]{0}', space=sflag, size = 0x8, scoped, tag = 'scoped memory for tpu_custom_call.1']
    #allocation7 [shape = 'u8[40960]{0}', space=vmem, size = 0xa000, scoped, tag = 'input window, operand 2, single buffered']
    #allocation8 [shape = 's32[1]{0}', space=sflag, size = 0x4, scoped, tag = 'scoped memory for tpu_custom_call.1']
    #allocation9 [shape = 'u8[81920]{0}', space=vmem, size = 0x14000, scoped, tag = 'output window, operand 0']
    %12 = vsyncpa [#allocation5], 0
    %13 = vsyncpa [#allocation8], 0
    %14 = vsyncpa [#allocation6], 0
    %s15 = scalar_lea.sflag [#allocation6], 1
    %16 = vsyncpa %s15, 0
    loop: start=0, step=1, limit=4
    $region2: #{tpu_custom_call.1} parent=1 // loop_pre_header
      _
    $region3: #{tpu_custom_call.1} parent=1 // loop_header
      %s18 = sphi 0, %s22
      %p19 = scmp.ge.s32.totalorder %s18, 4
      %s25 = sphi 0, %s37
      %s26 = sphi 0, %s33
      %s27 = sphi 0, %s25
      %s28 = sphi 0, %s26
      %s29 = sphi 0, %s27
      %s30 = sphi 0, %s28
      %s38 = sphi 0, %s38
      %s40 = sphi 0, %s38
      %s41 = sphi 0, %s40
      %s55 = sphi 0, %s41
      %s61 = sphi 0, %s63
      %s64 = sphi 0, %s61
      %s65 = sphi 0, %s64
      %s81 = sphi 0, %s65
      %s89 = sphi 0, %s91
      %s92 = sphi 0, %s89
      %s93 = sphi 0, %s92
      %s109 = sphi 0, %s93
    $region4: #{tpu_custom_call.1} parent=1 // loop_header_branch
      %21 = sbr.rel (%p19) target = $region8
    $region5: #{tpu_custom_call.1} parent=1 // loop_body
      %s23 = ssub.s32 %s18, 1
      %s24 = ssub.s32 %s18, 2
      %s31 = sadd.s32 1, %s26
      %p32 = scmp.ge.s32.totalorder %s31, 1
      %s33 = scalar_select %p32, 0, %s31
      %s34 = sadd.s32 1, %s25
      %s35 = scalar_select %p32, %s34, %s25
      %p36 = scmp.ge.s32.totalorder %s35, 2
      %s37 = scalar_select %p36, 0, %s35
      %s39 = sadd.s32 %s38, 1
      %p42 = scmp.eq.s32.totalorder %s18, 1
      %p43 = scmp.ne.s32.totalorder %s38, %s40
      %p44 = scmp.eq.s32.totalorder %s18, 0
      %p45 = por %p43, %p44
      %p46 = scmp.ne.s32.totalorder %s38, %s40
      %p47 = scmp.eq.s32.totalorder %s23, 1
      %p48 = por %p46, %p47
      %p49 = scmp.ne.s32.totalorder %s40, %s41
      %p50 = scmp.eq.s32.totalorder %s23, 0
      %p51 = por %p49, %p50
      %p52 = scmp.ne.s32.totalorder %s40, %s41
      %p53 = scmp.eq.s32.totalorder %s24, 1
      %p54 = por %p52, %p53
      %p56 = scmp.ne.s32.totalorder %s41, %s55
      %p57 = scmp.eq.s32.totalorder %s24, 0
      %p58 = por %p56, %p57
      %s59 = ssub.s32 %s26, %s33
      %p60 = scmp.eq.s32.totalorder %s59, 0
      %s62 = sadd.s32 %s61, 1
      %s63 = scalar_select %p60, %s61, %s62
      %p66 = pneg %p60
      %p67 = scmp.eq.s32.totalorder %s18, 1
      %p68 = por %p66, %p67
      %p69 = scmp.ne.s32.totalorder %s61, %s64
      %p70 = scmp.eq.s32.totalorder %s18, 0
      %p71 = por %p69, %p70
      %p72 = scmp.ne.s32.totalorder %s61, %s64
      %p73 = scmp.eq.s32.totalorder %s23, 1
      %p74 = por %p72, %p73
      %p75 = scmp.ne.s32.totalorder %s64, %s65
      %p76 = scmp.eq.s32.totalorder %s23, 0
      %p77 = por %p75, %p76
      %p78 = scmp.ne.s32.totalorder %s64, %s65
      %p79 = scmp.eq.s32.totalorder %s24, 1
      %p80 = por %p78, %p79
      %p82 = scmp.ne.s32.totalorder %s65, %s81
      %p83 = scmp.eq.s32.totalorder %s24, 0
      %p84 = por %p82, %p83
      %s85 = ssub.s32 %s25, %s37
      %s86 = ssub.s32 %s26, %s33
      %s87 = sor.u32 %s85, %s86
      %p88 = scmp.eq.s32.totalorder %s87, 0
      %s90 = sadd.s32 %s89, 1
      %s91 = scalar_select %p88, %s89, %s90
      %p94 = pneg %p88
      %p95 = scmp.eq.s32.totalorder %s18, 1
      %p96 = por %p94, %p95
      %p97 = scmp.ne.s32.totalorder %s89, %s92
      %p98 = scmp.eq.s32.totalorder %s18, 0
      %p99 = por %p97, %p98
      %p100 = scmp.ne.s32.totalorder %s89, %s92
      %p101 = scmp.eq.s32.totalorder %s23, 1
      %p102 = por %p100, %p101
      %p103 = scmp.ne.s32.totalorder %s92, %s93
      %p104 = scmp.eq.s32.totalorder %s23, 0
      %p105 = por %p103, %p104
      %p106 = scmp.ne.s32.totalorder %s92, %s93
      %p107 = scmp.eq.s32.totalorder %s24, 1
      %p108 = por %p106, %p107
      %p110 = scmp.ne.s32.totalorder %s93, %s109
      %p111 = scmp.eq.s32.totalorder %s24, 0
      %p112 = por %p110, %p111
      %p113 = scmp.le.s32.totalorder 1, %s18
      %p114 = scmp.lt.s32.totalorder %s18, 3
      %p115 = pnand %p113, %p114
      %p116 = pneg %p115
      // Predicated region
      $region9: #{tpu_custom_call.1} parent=5 // pred_check
        _
      $region10: #{tpu_custom_call.1} parent=5 // pred_check_branch
        %118 = sbr.rel (%p115) target = $region12
      $region11: #{tpu_custom_call.1} parent=5 // pred_region
        %s119 = ssub.s32 %s18, 1
        // Predicated region
        $region13: #{tpu_custom_call.1} parent=11 // pred_check
          %p120 = pneg %p51
        $region14: #{tpu_custom_call.1} parent=11 // pred_check_branch
          %122 = sbr.rel (%p120) target = $region16
        $region15: #{tpu_custom_call.1} parent=11 // pred_region
          %s124 = ssub.s32 160000, 160000
          %125 = vsyncadd [#allocation5], %s124
          %s126 = sshll.u32 [#allocation4], 4
          %s127 = int_to_ptr.vmem [resolvable:$true] %s126
          %132 = dma.hbm_to_vmem [thread:$0]  %s1, 160000, %s127, [#allocation5], 128, 128, 8
        $region16: #{tpu_custom_call.1} parent=11 // pred_fallthru
          _
        // Predicated region
        $region17: #{tpu_custom_call.1} parent=11 // pred_check
          %p133 = pneg %p77
        $region18: #{tpu_custom_call.1} parent=11 // pred_check_branch
          %135 = sbr.rel (%p133) target = $region20
        $region19: #{tpu_custom_call.1} parent=11 // pred_region
          %s136 = smul.u32 10, %s28
          %s138 = ssub.s32 1280, 1280
          %139 = vsyncadd [#allocation8], %s138
          %s140 = smul.addr %s136, 128
          %s141 = scalar_lea.hbm %s2, %s140
          %s142 = sshll.u32 [#allocation7], 4
          %s143 = int_to_ptr.vmem [resolvable:$true] %s142
          %148 = dma.hbm_to_vmem [thread:$0]  %s141, 1280, %s143, [#allocation8], 128, 128, 8
        $region20: #{tpu_custom_call.1} parent=11 // pred_fallthru
          _
      $region12: #{tpu_custom_call.1} parent=5 // pred_fallthru
        _
      %p149 = scmp.lt.s32.totalorder %s18, 2
      // Predicated region
      $region21: #{tpu_custom_call.1} parent=5 // pred_check
        %p150 = pneg %p149
      $region22: #{tpu_custom_call.1} parent=5 // pred_check_branch
        %152 = sbr.rel (%p150) target = $region24
      $region23: #{tpu_custom_call.1} parent=5 // pred_region
        _
      $region24: #{tpu_custom_call.1} parent=5 // pred_fallthru
        _
      %p153 = scmp.le.s32.totalorder 1, %s18
      %p154 = scmp.lt.s32.totalorder %s18, 3
      %p155 = pnand %p153, %p154
      %p156 = pneg %p155
      // Predicated region
      $region25: #{tpu_custom_call.1} parent=5 // pred_check
        _
      $region26: #{tpu_custom_call.1} parent=5 // pred_check_branch
        %158 = sbr.rel (%p155) target = $region28
      $region27: #{tpu_custom_call.1} parent=5 // pred_region
        %s159 = ssub.s32 %s18, 1
        // Predicated region
        $region29: #{tpu_custom_call.1} parent=27 // pred_check
          %p160 = pneg %p51
        $region30: #{tpu_custom_call.1} parent=27 // pred_check_branch
          %162 = sbr.rel (%p160) target = $region32
        $region31: #{tpu_custom_call.1} parent=27 // pred_region
          %163 = dma.done [#allocation5], 160000
        $region32: #{tpu_custom_call.1} parent=27 // pred_fallthru
          _
        // Predicated region
        $region33: #{tpu_custom_call.1} parent=27 // pred_check
          %p164 = pneg %p77
        $region34: #{tpu_custom_call.1} parent=27 // pred_check_branch
          %166 = sbr.rel (%p164) target = $region36
        $region35: #{tpu_custom_call.1} parent=27 // pred_region
          %167 = dma.done [#allocation8], 1280
        $region36: #{tpu_custom_call.1} parent=27 // pred_fallthru
          _
        %p168 = pneg %p51
        %p169 = pneg %p48
        %p170 = pneg %p77
        %p171 = pneg %p74
        %p172 = pneg %p105
        %p173 = pneg %p102
        %s174 = sand.u32 %s92, 1
        %s175 = scalar_lea.sflag [#allocation6], %s174
        %s176 = sand.u32 %s92, 1
        %s177 = smul.addr %s176, 80
        %s178 = scalar_lea.vmem [#allocation9], %s177
        %s179 = smul.u32 10, %s28
        %s180 = smul.u32 10, %s28
        %s181 = smul.u32 %s27, 80
        %s182 = smul.u32 %s28, 80
        %s183 = sadd.s32 %s181, %s182
        %s184 = sadd.s32 %s183, 0
        %s185 = sld [smem:[#allocation3 + %s184]]
        %s186 = scalar_lea.vmem [#allocation4], %s185
        %v187 = vld [vmem:[%s186] sm:$0x1]
        %s188 = sadd.s32 %s184, 1
        %s189 = sld [smem:[#allocation3 + %s188]]
        %s190 = scalar_lea.vmem [#allocation4], %s189
        %v191 = vld [vmem:[%s190] sm:$0x1]
        %s192 = sadd.s32 %s184, 2
        %s193 = sld [smem:[#allocation3 + %s192]]
        %s194 = scalar_lea.vmem [#allocation4], %s193
        %v195 = vld [vmem:[%s194] sm:$0x1]
        %s196 = sadd.s32 %s184, 3
        %s197 = sld [smem:[#allocation3 + %s196]]
        %s198 = scalar_lea.vmem [#allocation4], %s197
        %v199 = vld [vmem:[%s198] sm:$0x1]
        %s200 = sadd.s32 %s184, 4
        %s201 = sld [smem:[#allocation3 + %s200]]
        %s202 = scalar_lea.vmem [#allocation4], %s201
        %v203 = vld [vmem:[%s202] sm:$0x1]
        %s204 = sadd.s32 %s184, 5
        %s205 = sld [smem:[#allocation3 + %s204]]
        %s206 = scalar_lea.vmem [#allocation4], %s205
        %v207 = vld [vmem:[%s206] sm:$0x1]
        %s208 = sadd.s32 %s184, 6
        %s209 = sld [smem:[#allocation3 + %s208]]
        %s210 = scalar_lea.vmem [#allocation4], %s209
        %v211 = vld [vmem:[%s210] sm:$0x1]
        %s212 = sadd.s32 %s184, 7
        %s213 = sld [smem:[#allocation3 + %s212]]
        %s214 = scalar_lea.vmem [#allocation4], %s213
        %v215 = vld [vmem:[%s214] sm:$0x1]
        %v217 = vrot.slane %v191, 7
        %v220 = vrot.slane %v195, 6
        %v223 = vrot.slane %v199, 5
        %v226 = vrot.slane %v203, 4
        %v229 = vrot.slane %v207, 3
        %v232 = vrot.slane %v211, 2
        %v235 = vrot.slane %v215, 1
        %vm237 = vcmask 1040384
        %v238 = vsel %vm237, %v187, %v217
        %vm239 = vcmask 1041408
        %v240 = vsel %vm239, %v238, %v220
        %vm241 = vcmask 1042432
        %v242 = vsel %vm241, %v240, %v223
        %vm243 = vcmask 1043456
        %v244 = vsel %vm243, %v242, %v226
        %vm245 = vcmask 1044480
        %v246 = vsel %vm245, %v244, %v229
        %vm247 = vcmask 1045504
        %v248 = vsel %vm247, %v246, %v232
        %vm249 = vcmask 1046528
        %v250 = vsel %vm249, %v248, %v235
        %v251 = vld [vmem:[#allocation7] sm:$0xff]
        %v252 = vadd.f32 %v250, %v251
        %253 = vst [vmem:[%s178] sm:$0xff] %v252
        %s254 = sadd.s32 %s183, 8
        %s255 = sld [smem:[#allocation3 + %s254]]
        %s256 = scalar_lea.vmem [#allocation4], %s255
        %v257 = vld [vmem:[%s256] sm:$0x1]
        %s258 = sadd.s32 %s254, 1
        %s259 = sld [smem:[#allocation3 + %s258]]
        %s260 = scalar_lea.vmem [#allocation4], %s259
        %v261 = vld [vmem:[%s260] sm:$0x1]
        %s262 = sadd.s32 %s254, 2
        %s263 = sld [smem:[#allocation3 + %s262]]
        %s264 = scalar_lea.vmem [#allocation4], %s263
        %v265 = vld [vmem:[%s264] sm:$0x1]
        %s266 = sadd.s32 %s254, 3
        %s267 = sld [smem:[#allocation3 + %s266]]
        %s268 = scalar_lea.vmem [#allocation4], %s267
        %v269 = vld [vmem:[%s268] sm:$0x1]
        %s270 = sadd.s32 %s254, 4
        %s271 = sld [smem:[#allocation3 + %s270]]
        %s272 = scalar_lea.vmem [#allocation4], %s271
        %v273 = vld [vmem:[%s272] sm:$0x1]
        %s274 = sadd.s32 %s254, 5
        %s275 = sld [smem:[#allocation3 + %s274]]
        %s276 = scalar_lea.vmem [#allocation4], %s275
        %v277 = vld [vmem:[%s276] sm:$0x1]
        %s278 = sadd.s32 %s254, 6
        %s279 = sld [smem:[#allocation3 + %s278]]
        %s280 = scalar_lea.vmem [#allocation4], %s279
        %v281 = vld [vmem:[%s280] sm:$0x1]
        %s282 = sadd.s32 %s254, 7
        %s283 = sld [smem:[#allocation3 + %s282]]
        %s284 = scalar_lea.vmem [#allocation4], %s283
        %v285 = vld [vmem:[%s284] sm:$0x1]
        %v287 = vrot.slane %v261, 7
        %v290 = vrot.slane %v265, 6
        %v293 = vrot.slane %v269, 5
        %v296 = vrot.slane %v273, 4
        %v299 = vrot.slane %v277, 3
        %v302 = vrot.slane %v281, 2
        %v305 = vrot.slane %v285, 1
        %v307 = vsel %vm237, %v257, %v287
        %v308 = vsel %vm239, %v307, %v290
        %v309 = vsel %vm241, %v308, %v293
        %v310 = vsel %vm243, %v309, %v296
        %v311 = vsel %vm245, %v310, %v299
        %v312 = vsel %vm247, %v311, %v302
        %v313 = vsel %vm249, %v312, %v305
        %s314 = scalar_lea.vmem [#allocation7], 8
        %v315 = vld [vmem:[%s314] sm:$0xff]
        %v316 = vadd.f32 %v313, %v315
        %s317 = scalar_lea.vmem %s178, 8 [#allocation9]
        %318 = vst [vmem:[%s317] sm:$0xff] %v316
        %s319 = sadd.s32 %s183, 16
        %s320 = sld [smem:[#allocation3 + %s319]]
        %s321 = scalar_lea.vmem [#allocation4], %s320
        %v322 = vld [vmem:[%s321] sm:$0x1]
        %s323 = sadd.s32 %s319, 1
        %s324 = sld [smem:[#allocation3 + %s323]]
        %s325 = scalar_lea.vmem [#allocation4], %s324
        %v326 = vld [vmem:[%s325] sm:$0x1]
        %s327 = sadd.s32 %s319, 2
        %s328 = sld [smem:[#allocation3 + %s327]]
        %s329 = scalar_lea.vmem [#allocation4], %s328
        %v330 = vld [vmem:[%s329] sm:$0x1]
        %s331 = sadd.s32 %s319, 3
        %s332 = sld [smem:[#allocation3 + %s331]]
        %s333 = scalar_lea.vmem [#allocation4], %s332
        %v334 = vld [vmem:[%s333] sm:$0x1]
        %s335 = sadd.s32 %s319, 4
        %s336 = sld [smem:[#allocation3 + %s335]]
        %s337 = scalar_lea.vmem [#allocation4], %s336
        %v338 = vld [vmem:[%s337] sm:$0x1]
        %s339 = sadd.s32 %s319, 5
        %s340 = sld [smem:[#allocation3 + %s339]]
        %s341 = scalar_lea.vmem [#allocation4], %s340
        %v342 = vld [vmem:[%s341] sm:$0x1]
        %s343 = sadd.s32 %s319, 6
        %s344 = sld [smem:[#allocation3 + %s343]]
        %s345 = scalar_lea.vmem [#allocation4], %s344
        %v346 = vld [vmem:[%s345] sm:$0x1]
        %s347 = sadd.s32 %s319, 7
        %s348 = sld [smem:[#allocation3 + %s347]]
        %s349 = scalar_lea.vmem [#allocation4], %s348
        %v350 = vld [vmem:[%s349] sm:$0x1]
        %v352 = vrot.slane %v326, 7
        %v355 = vrot.slane %v330, 6
        %v358 = vrot.slane %v334, 5
        %v361 = vrot.slane %v338, 4
        %v364 = vrot.slane %v342, 3
        %v367 = vrot.slane %v346, 2
        %v370 = vrot.slane %v350, 1
        %v372 = vsel %vm237, %v322, %v352
        %v373 = vsel %vm239, %v372, %v355
        %v374 = vsel %vm241, %v373, %v358
        %v375 = vsel %vm243, %v374, %v361
        %v376 = vsel %vm245, %v375, %v364
        %v377 = vsel %vm247, %v376, %v367
        %v378 = vsel %vm249, %v377, %v370
        %s379 = scalar_lea.vmem [#allocation7], 16
        %v380 = vld [vmem:[%s379] sm:$0xff]
        %v381 = vadd.f32 %v378, %v380
        %s382 = scalar_lea.vmem %s178, 16 [#allocation9]
        %383 = vst [vmem:[%s382] sm:$0xff] %v381
        %s384 = sadd.s32 %s183, 24
        %s385 = sld [smem:[#allocation3 + %s384]]
        %s386 = scalar_lea.vmem [#allocation4], %s385
        %v387 = vld [vmem:[%s386] sm:$0x1]
        %s388 = sadd.s32 %s384, 1
        %s389 = sld [smem:[#allocation3 + %s388]]
        %s390 = scalar_lea.vmem [#allocation4], %s389
        %v391 = vld [vmem:[%s390] sm:$0x1]
        %s392 = sadd.s32 %s384, 2
        %s393 = sld [smem:[#allocation3 + %s392]]
        %s394 = scalar_lea.vmem [#allocation4], %s393
        %v395 = vld [vmem:[%s394] sm:$0x1]
        %s396 = sadd.s32 %s384, 3
        %s397 = sld [smem:[#allocation3 + %s396]]
        %s398 = scalar_lea.vmem [#allocation4], %s397
        %v399 = vld [vmem:[%s398] sm:$0x1]
        %s400 = sadd.s32 %s384, 4
        %s401 = sld [smem:[#allocation3 + %s400]]
        %s402 = scalar_lea.vmem [#allocation4], %s401
        %v403 = vld [vmem:[%s402] sm:$0x1]
        %s404 = sadd.s32 %s384, 5
        %s405 = sld [smem:[#allocation3 + %s404]]
        %s406 = scalar_lea.vmem [#allocation4], %s405
        %v407 = vld [vmem:[%s406] sm:$0x1]
        %s408 = sadd.s32 %s384, 6
        %s409 = sld [smem:[#allocation3 + %s408]]
        %s410 = scalar_lea.vmem [#allocation4], %s409
        %v411 = vld [vmem:[%s410] sm:$0x1]
        %s412 = sadd.s32 %s384, 7
        %s413 = sld [smem:[#allocation3 + %s412]]
        %s414 = scalar_lea.vmem [#allocation4], %s413
        %v415 = vld [vmem:[%s414] sm:$0x1]
        %v417 = vrot.slane %v391, 7
        %v420 = vrot.slane %v395, 6
        %v423 = vrot.slane %v399, 5
        %v426 = vrot.slane %v403, 4
        %v429 = vrot.slane %v407, 3
        %v432 = vrot.slane %v411, 2
        %v435 = vrot.slane %v415, 1
        %v437 = vsel %vm237, %v387, %v417
        %v438 = vsel %vm239, %v437, %v420
        %v439 = vsel %vm241, %v438, %v423
        %v440 = vsel %vm243, %v439, %v426
        %v441 = vsel %vm245, %v440, %v429
        %v442 = vsel %vm247, %v441, %v432
        %v443 = vsel %vm249, %v442, %v435
        %s444 = scalar_lea.vmem [#allocation7], 24
        %v445 = vld [vmem:[%s444] sm:$0xff]
        %v446 = vadd.f32 %v443, %v445
        %s447 = scalar_lea.vmem %s178, 24 [#allocation9]
        %448 = vst [vmem:[%s447] sm:$0xff] %v446
        %s449 = sadd.s32 %s183, 32
        %s450 = sld [smem:[#allocation3 + %s449]]
        %s451 = scalar_lea.vmem [#allocation4], %s450
        %v452 = vld [vmem:[%s451] sm:$0x1]
        %s453 = sadd.s32 %s449, 1
        %s454 = sld [smem:[#allocation3 + %s453]]
        %s455 = scalar_lea.vmem [#allocation4], %s454
        %v456 = vld [vmem:[%s455] sm:$0x1]
        %s457 = sadd.s32 %s449, 2
        %s458 = sld [smem:[#allocation3 + %s457]]
        %s459 = scalar_lea.vmem [#allocation4], %s458
        %v460 = vld [vmem:[%s459] sm:$0x1]
        %s461 = sadd.s32 %s449, 3
        %s462 = sld [smem:[#allocation3 + %s461]]
        %s463 = scalar_lea.vmem [#allocation4], %s462
        %v464 = vld [vmem:[%s463] sm:$0x1]
        %s465 = sadd.s32 %s449, 4
        %s466 = sld [smem:[#allocation3 + %s465]]
        %s467 = scalar_lea.vmem [#allocation4], %s466
        %v468 = vld [vmem:[%s467] sm:$0x1]
        %s469 = sadd.s32 %s449, 5
        %s470 = sld [smem:[#allocation3 + %s469]]
        %s471 = scalar_lea.vmem [#allocation4], %s470
        %v472 = vld [vmem:[%s471] sm:$0x1]
        %s473 = sadd.s32 %s449, 6
        %s474 = sld [smem:[#allocation3 + %s473]]
        %s475 = scalar_lea.vmem [#allocation4], %s474
        %v476 = vld [vmem:[%s475] sm:$0x1]
        %s477 = sadd.s32 %s449, 7
        %s478 = sld [smem:[#allocation3 + %s477]]
        %s479 = scalar_lea.vmem [#allocation4], %s478
        %v480 = vld [vmem:[%s479] sm:$0x1]
        %v482 = vrot.slane %v456, 7
        %v485 = vrot.slane %v460, 6
        %v488 = vrot.slane %v464, 5
        %v491 = vrot.slane %v468, 4
        %v494 = vrot.slane %v472, 3
        %v497 = vrot.slane %v476, 2
        %v500 = vrot.slane %v480, 1
        %v502 = vsel %vm237, %v452, %v482
        %v503 = vsel %vm239, %v502, %v485
        %v504 = vsel %vm241, %v503, %v488
        %v505 = vsel %vm243, %v504, %v491
        %v506 = vsel %vm245, %v505, %v494
        %v507 = vsel %vm247, %v506, %v497
        %v508 = vsel %vm249, %v507, %v500
        %s509 = scalar_lea.vmem [#allocation7], 32
        %v510 = vld [vmem:[%s509] sm:$0xff]
        %v511 = vadd.f32 %v508, %v510
        %s512 = scalar_lea.vmem %s178, 32 [#allocation9]
        %513 = vst [vmem:[%s512] sm:$0xff] %v511
        %s514 = sadd.s32 %s183, 40
        %s515 = sld [smem:[#allocation3 + %s514]]
        %s516 = scalar_lea.vmem [#allocation4], %s515
        %v517 = vld [vmem:[%s516] sm:$0x1]
        %s518 = sadd.s32 %s514, 1
        %s519 = sld [smem:[#allocation3 + %s518]]
        %s520 = scalar_lea.vmem [#allocation4], %s519
        %v521 = vld [vmem:[%s520] sm:$0x1]
        %s522 = sadd.s32 %s514, 2
        %s523 = sld [smem:[#allocation3 + %s522]]
        %s524 = scalar_lea.vmem [#allocation4], %s523
        %v525 = vld [vmem:[%s524] sm:$0x1]
        %s526 = sadd.s32 %s514, 3
        %s527 = sld [smem:[#allocation3 + %s526]]
        %s528 = scalar_lea.vmem [#allocation4], %s527
        %v529 = vld [vmem:[%s528] sm:$0x1]
        %s530 = sadd.s32 %s514, 4
        %s531 = sld [smem:[#allocation3 + %s530]]
        %s532 = scalar_lea.vmem [#allocation4], %s531
        %v533 = vld [vmem:[%s532] sm:$0x1]
        %s534 = sadd.s32 %s514, 5
        %s535 = sld [smem:[#allocation3 + %s534]]
        %s536 = scalar_lea.vmem [#allocation4], %s535
        %v537 = vld [vmem:[%s536] sm:$0x1]
        %s538 = sadd.s32 %s514, 6
        %s539 = sld [smem:[#allocation3 + %s538]]
        %s540 = scalar_lea.vmem [#allocation4], %s539
        %v541 = vld [vmem:[%s540] sm:$0x1]
        %s542 = sadd.s32 %s514, 7
        %s543 = sld [smem:[#allocation3 + %s542]]
        %s544 = scalar_lea.vmem [#allocation4], %s543
        %v545 = vld [vmem:[%s544] sm:$0x1]
        %v547 = vrot.slane %v521, 7
        %v550 = vrot.slane %v525, 6
        %v553 = vrot.slane %v529, 5
        %v556 = vrot.slane %v533, 4
        %v559 = vrot.slane %v537, 3
        %v562 = vrot.slane %v541, 2
        %v565 = vrot.slane %v545, 1
        %v567 = vsel %vm237, %v517, %v547
        %v568 = vsel %vm239, %v567, %v550
        %v569 = vsel %vm241, %v568, %v553
        %v570 = vsel %vm243, %v569, %v556
        %v571 = vsel %vm245, %v570, %v559
        %v572 = vsel %vm247, %v571, %v562
        %v573 = vsel %vm249, %v572, %v565
        %s574 = scalar_lea.vmem [#allocation7], 40
        %v575 = vld [vmem:[%s574] sm:$0xff]
        %v576 = vadd.f32 %v573, %v575
        %s577 = scalar_lea.vmem %s178, 40 [#allocation9]
        %578 = vst [vmem:[%s577] sm:$0xff] %v576
        %s579 = sadd.s32 %s183, 48
        %s580 = sld [smem:[#allocation3 + %s579]]
        %s581 = scalar_lea.vmem [#allocation4], %s580
        %v582 = vld [vmem:[%s581] sm:$0x1]
        %s583 = sadd.s32 %s579, 1
        %s584 = sld [smem:[#allocation3 + %s583]]
        %s585 = scalar_lea.vmem [#allocation4], %s584
        %v586 = vld [vmem:[%s585] sm:$0x1]
        %s587 = sadd.s32 %s579, 2
        %s588 = sld [smem:[#allocation3 + %s587]]
        %s589 = scalar_lea.vmem [#allocation4], %s588
        %v590 = vld [vmem:[%s589] sm:$0x1]
        %s591 = sadd.s32 %s579, 3
        %s592 = sld [smem:[#allocation3 + %s591]]
        %s593 = scalar_lea.vmem [#allocation4], %s592
        %v594 = vld [vmem:[%s593] sm:$0x1]
        %s595 = sadd.s32 %s579, 4
        %s596 = sld [smem:[#allocation3 + %s595]]
        %s597 = scalar_lea.vmem [#allocation4], %s596
        %v598 = vld [vmem:[%s597] sm:$0x1]
        %s599 = sadd.s32 %s579, 5
        %s600 = sld [smem:[#allocation3 + %s599]]
        %s601 = scalar_lea.vmem [#allocation4], %s600
        %v602 = vld [vmem:[%s601] sm:$0x1]
        %s603 = sadd.s32 %s579, 6
        %s604 = sld [smem:[#allocation3 + %s603]]
        %s605 = scalar_lea.vmem [#allocation4], %s604
        %v606 = vld [vmem:[%s605] sm:$0x1]
        %s607 = sadd.s32 %s579, 7
        %s608 = sld [smem:[#allocation3 + %s607]]
        %s609 = scalar_lea.vmem [#allocation4], %s608
        %v610 = vld [vmem:[%s609] sm:$0x1]
        %v612 = vrot.slane %v586, 7
        %v615 = vrot.slane %v590, 6
        %v618 = vrot.slane %v594, 5
        %v621 = vrot.slane %v598, 4
        %v624 = vrot.slane %v602, 3
        %v627 = vrot.slane %v606, 2
        %v630 = vrot.slane %v610, 1
        %v632 = vsel %vm237, %v582, %v612
        %v633 = vsel %vm239, %v632, %v615
        %v634 = vsel %vm241, %v633, %v618
        %v635 = vsel %vm243, %v634, %v621
        %v636 = vsel %vm245, %v635, %v624
        %v637 = vsel %vm247, %v636, %v627
        %v638 = vsel %vm249, %v637, %v630
        %s639 = scalar_lea.vmem [#allocation7], 48
        %v640 = vld [vmem:[%s639] sm:$0xff]
        %v641 = vadd.f32 %v638, %v640
        %s642 = scalar_lea.vmem %s178, 48 [#allocation9]
        %643 = vst [vmem:[%s642] sm:$0xff] %v641
        %s644 = sadd.s32 %s183, 56
        %s645 = sld [smem:[#allocation3 + %s644]]
        %s646 = scalar_lea.vmem [#allocation4], %s645
        %v647 = vld [vmem:[%s646] sm:$0x1]
        %s648 = sadd.s32 %s644, 1
        %s649 = sld [smem:[#allocation3 + %s648]]
        %s650 = scalar_lea.vmem [#allocation4], %s649
        %v651 = vld [vmem:[%s650] sm:$0x1]
        %s652 = sadd.s32 %s644, 2
        %s653 = sld [smem:[#allocation3 + %s652]]
        %s654 = scalar_lea.vmem [#allocation4], %s653
        %v655 = vld [vmem:[%s654] sm:$0x1]
        %s656 = sadd.s32 %s644, 3
        %s657 = sld [smem:[#allocation3 + %s656]]
        %s658 = scalar_lea.vmem [#allocation4], %s657
        %v659 = vld [vmem:[%s658] sm:$0x1]
        %s660 = sadd.s32 %s644, 4
        %s661 = sld [smem:[#allocation3 + %s660]]
        %s662 = scalar_lea.vmem [#allocation4], %s661
        %v663 = vld [vmem:[%s662] sm:$0x1]
        %s664 = sadd.s32 %s644, 5
        %s665 = sld [smem:[#allocation3 + %s664]]
        %s666 = scalar_lea.vmem [#allocation4], %s665
        %v667 = vld [vmem:[%s666] sm:$0x1]
        %s668 = sadd.s32 %s644, 6
        %s669 = sld [smem:[#allocation3 + %s668]]
        %s670 = scalar_lea.vmem [#allocation4], %s669
        %v671 = vld [vmem:[%s670] sm:$0x1]
        %s672 = sadd.s32 %s644, 7
        %s673 = sld [smem:[#allocation3 + %s672]]
        %s674 = scalar_lea.vmem [#allocation4], %s673
        %v675 = vld [vmem:[%s674] sm:$0x1]
        %v677 = vrot.slane %v651, 7
        %v680 = vrot.slane %v655, 6
        %v683 = vrot.slane %v659, 5
        %v686 = vrot.slane %v663, 4
        %v689 = vrot.slane %v667, 3
        %v692 = vrot.slane %v671, 2
        %v695 = vrot.slane %v675, 1
        %v697 = vsel %vm237, %v647, %v677
        %v698 = vsel %vm239, %v697, %v680
        %v699 = vsel %vm241, %v698, %v683
        %v700 = vsel %vm243, %v699, %v686
        %v701 = vsel %vm245, %v700, %v689
        %v702 = vsel %vm247, %v701, %v692
        %v703 = vsel %vm249, %v702, %v695
        %s704 = scalar_lea.vmem [#allocation7], 56
        %v705 = vld [vmem:[%s704] sm:$0xff]
        %v706 = vadd.f32 %v703, %v705
        %s707 = scalar_lea.vmem %s178, 56 [#allocation9]
        %708 = vst [vmem:[%s707] sm:$0xff] %v706
        %s709 = sadd.s32 %s183, 64
        %s710 = sld [smem:[#allocation3 + %s709]]
        %s711 = scalar_lea.vmem [#allocation4], %s710
        %v712 = vld [vmem:[%s711] sm:$0x1]
        %s713 = sadd.s32 %s709, 1
        %s714 = sld [smem:[#allocation3 + %s713]]
        %s715 = scalar_lea.vmem [#allocation4], %s714
        %v716 = vld [vmem:[%s715] sm:$0x1]
        %s717 = sadd.s32 %s709, 2
        %s718 = sld [smem:[#allocation3 + %s717]]
        %s719 = scalar_lea.vmem [#allocation4], %s718
        %v720 = vld [vmem:[%s719] sm:$0x1]
        %s721 = sadd.s32 %s709, 3
        %s722 = sld [smem:[#allocation3 + %s721]]
        %s723 = scalar_lea.vmem [#allocation4], %s722
        %v724 = vld [vmem:[%s723] sm:$0x1]
        %s725 = sadd.s32 %s709, 4
        %s726 = sld [smem:[#allocation3 + %s725]]
        %s727 = scalar_lea.vmem [#allocation4], %s726
        %v728 = vld [vmem:[%s727] sm:$0x1]
        %s729 = sadd.s32 %s709, 5
        %s730 = sld [smem:[#allocation3 + %s729]]
        %s731 = scalar_lea.vmem [#allocation4], %s730
        %v732 = vld [vmem:[%s731] sm:$0x1]
        %s733 = sadd.s32 %s709, 6
        %s734 = sld [smem:[#allocation3 + %s733]]
        %s735 = scalar_lea.vmem [#allocation4], %s734
        %v736 = vld [vmem:[%s735] sm:$0x1]
        %s737 = sadd.s32 %s709, 7
        %s738 = sld [smem:[#allocation3 + %s737]]
        %s739 = scalar_lea.vmem [#allocation4], %s738
        %v740 = vld [vmem:[%s739] sm:$0x1]
        %v742 = vrot.slane %v716, 7
        %v745 = vrot.slane %v720, 6
        %v748 = vrot.slane %v724, 5
        %v751 = vrot.slane %v728, 4
        %v754 = vrot.slane %v732, 3
        %v757 = vrot.slane %v736, 2
        %v760 = vrot.slane %v740, 1
        %v762 = vsel %vm237, %v712, %v742
        %v763 = vsel %vm239, %v762, %v745
        %v764 = vsel %vm241, %v763, %v748
        %v765 = vsel %vm243, %v764, %v751
        %v766 = vsel %vm245, %v765, %v754
        %v767 = vsel %vm247, %v766, %v757
        %v768 = vsel %vm249, %v767, %v760
        %s769 = scalar_lea.vmem [#allocation7], 64
        %v770 = vld [vmem:[%s769] sm:$0xff]
        %v771 = vadd.f32 %v768, %v770
        %s772 = scalar_lea.vmem %s178, 64 [#allocation9]
        %773 = vst [vmem:[%s772] sm:$0xff] %v771
        %s774 = sadd.s32 %s183, 72
        %s775 = sld [smem:[#allocation3 + %s774]]
        %s776 = scalar_lea.vmem [#allocation4], %s775
        %v777 = vld [vmem:[%s776] sm:$0x1]
        %s778 = sadd.s32 %s774, 1
        %s779 = sld [smem:[#allocation3 + %s778]]
        %s780 = scalar_lea.vmem [#allocation4], %s779
        %v781 = vld [vmem:[%s780] sm:$0x1]
        %s782 = sadd.s32 %s774, 2
        %s783 = sld [smem:[#allocation3 + %s782]]
        %s784 = scalar_lea.vmem [#allocation4], %s783
        %v785 = vld [vmem:[%s784] sm:$0x1]
        %s786 = sadd.s32 %s774, 3
        %s787 = sld [smem:[#allocation3 + %s786]]
        %s788 = scalar_lea.vmem [#allocation4], %s787
        %v789 = vld [vmem:[%s788] sm:$0x1]
        %s790 = sadd.s32 %s774, 4
        %s791 = sld [smem:[#allocation3 + %s790]]
        %s792 = scalar_lea.vmem [#allocation4], %s791
        %v793 = vld [vmem:[%s792] sm:$0x1]
        %s794 = sadd.s32 %s774, 5
        %s795 = sld [smem:[#allocation3 + %s794]]
        %s796 = scalar_lea.vmem [#allocation4], %s795
        %v797 = vld [vmem:[%s796] sm:$0x1]
        %s798 = sadd.s32 %s774, 6
        %s799 = sld [smem:[#allocation3 + %s798]]
        %s800 = scalar_lea.vmem [#allocation4], %s799
        %v801 = vld [vmem:[%s800] sm:$0x1]
        %s802 = sadd.s32 %s774, 7
        %s803 = sld [smem:[#allocation3 + %s802]]
        %s804 = scalar_lea.vmem [#allocation4], %s803
        %v805 = vld [vmem:[%s804] sm:$0x1]
        %v807 = vrot.slane %v781, 7
        %v810 = vrot.slane %v785, 6
        %v813 = vrot.slane %v789, 5
        %v816 = vrot.slane %v793, 4
        %v819 = vrot.slane %v797, 3
        %v822 = vrot.slane %v801, 2
        %v825 = vrot.slane %v805, 1
        %v827 = vsel %vm237, %v777, %v807
        %v828 = vsel %vm239, %v827, %v810
        %v829 = vsel %vm241, %v828, %v813
        %v830 = vsel %vm243, %v829, %v816
        %v831 = vsel %vm245, %v830, %v819
        %v832 = vsel %vm247, %v831, %v822
        %v833 = vsel %vm249, %v832, %v825
        %s834 = scalar_lea.vmem [#allocation7], 72
        %v835 = vld [vmem:[%s834] sm:$0xff]
        %v836 = vadd.f32 %v833, %v835
        %s837 = scalar_lea.vmem %s178, 72 [#allocation9]
        %838 = vst [vmem:[%s837] sm:$0xff] %v836
        %s839 = sand.u32 %s92, 1
        %s840 = scalar_lea.sflag [#allocation6], %s839
        %s841 = sand.u32 %s92, 1
        %s842 = smul.addr %s841, 80
        %s843 = scalar_lea.vmem [#allocation9], %s842
        // Predicated region
        $region37: #{tpu_custom_call.1} parent=27 // pred_check
          %p844 = pneg %p102
        $region38: #{tpu_custom_call.1} parent=27 // pred_check_branch
          %846 = sbr.rel (%p844) target = $region40
        $region39: #{tpu_custom_call.1} parent=27 // pred_region
          %s847 = smul.u32 10, %s28
          %s849 = ssub.s32 1280, 1280
          %850 = vsyncadd %s840, %s849
          %s851 = smul.addr %s27, 10
          %s852 = sadd.s32 %s847, %s851
          %s853 = smul.addr %s852, 128
          %s854 = scalar_lea.hbm %s3, %s853
          %s855 = sshll.u32 %s843, 4
          %s856 = int_to_ptr.vmem [resolvable:$true] %s855
          %861 = dma.vmem_to_hbm [thread:$0]  %s856, 1280, %s854, %s840, 128, 128, 8
        $region40: #{tpu_custom_call.1} parent=27 // pred_fallthru
          _
      $region28: #{tpu_custom_call.1} parent=5 // pred_fallthru
        _
      %p862 = scmp.le.s32.totalorder 2, %s18
      // Predicated region
      $region41: #{tpu_custom_call.1} parent=5 // pred_check
        %p863 = pneg %p862
      $region42: #{tpu_custom_call.1} parent=5 // pred_check_branch
        %865 = sbr.rel (%p863) target = $region44
      $region43: #{tpu_custom_call.1} parent=5 // pred_region
        %s866 = ssub.s32 %s18, 2
        // Predicated region
        $region45: #{tpu_custom_call.1} parent=43 // pred_check
          %p867 = pneg %p108
        $region46: #{tpu_custom_call.1} parent=43 // pred_check_branch
          %869 = sbr.rel (%p867) target = $region48
        $region47: #{tpu_custom_call.1} parent=43 // pred_region
          %s870 = sand.u32 %s93, 1
          %s871 = scalar_lea.sflag [#allocation6], %s870
          %s872 = sand.u32 %s93, 1
          %s873 = smul.addr %s872, 80
          %s874 = scalar_lea.vmem [#allocation9], %s873
          %875 = dma.done %s871, 1280
        $region48: #{tpu_custom_call.1} parent=43 // pred_fallthru
          _
      $region44: #{tpu_custom_call.1} parent=5 // pred_fallthru
        _
    $region6: #{tpu_custom_call.1} parent=1 // loop_footer
      %s22 = sadd.s32 1, %s18
    $region7: #{tpu_custom_call.1} parent=1 // loop_footer_branch
      %17 = sbr.rel target = $region3
    $region8: #{tpu_custom_call.1} parent=1 // loop_exit
      _
    %876 = vsyncpa [#allocation5], 1
    %s877 = scalar_lea.sflag [#allocation5], 1
    %878 = vsyncpa %s877, 1
    %879 = vsyncpa [#allocation8], 1
    %880 = vsyncpa [#allocation6], 1
    %s881 = scalar_lea.sflag [#allocation6], 1
    %882 = vsyncpa %s881, 1

// kernel: tpu_custom_call.1
$region0: #{tpu_custom_call.1}
  #allocation0 [shape = 'u32[]', space=smem, size = 0x4, offset = 0x4, fixed_abs, tag = 'smem constant byte address 0x4 - core index']
  #allocation1 [shape = 'u32[144,128]{1,0:T(1,128)}', space=vmem, size = 0x12000, scoped, tag = 'internal scratch']
  #allocation2 [shape = 's32[1]{0}', space=sflag, size = 0x4, scoped, tag = 'scoped memory for tpu_custom_call.1']
  #allocation3 [shape = 'u8[1024]{0}', space=smem, size = 0x400, scoped, tag = 'prefetched SMEM operand 0']
  %s0 = inlined_call_operand.hbm [shape: s32[160], index: 0, kind: input, shape index: {}]
  %s1 = inlined_call_operand.hbm [shape: f32[10000,128], index: 1, kind: input, shape index: {}]
  %s2 = inlined_call_operand.hbm [shape: f32[80,128], index: 2, kind: input, shape index: {}]
  %s3 = inlined_call_operand.hbm [shape: f32[2,80,128], index: 3, kind: output, shape index: {}]
  %s4 = sld [smem:[#allocation0]]
  $region49: #{tpu_custom_call.1} parent=0
    _
  %s6 = ssub.s32 1, %s4
  %s7 = scalar_select 0, %s6, %s4
  %9 = dma.hbm_to_smem %s0, 32, [#allocation3], [#allocation2]
  %10 = dma.done [#allocation2], 32
  %11 = sfence
  $region1: #{tpu_custom_call.1} parent=0
    #allocation4 [shape = 'u8[5120000]{0}', space=vmem, size = 0x4e2000, scoped, tag = 'input window, operand 1, single buffered']
    #allocation5 [shape = 's32[2]{0}', space=sflag, size = 0x8, scoped, tag = 'scoped memory for tpu_custom_call.1']
    #allocation6 [shape = 's32[2]{0}', space=sflag, size = 0x8, scoped, tag = 'scoped memory for tpu_custom_call.1']
    #allocation7 [shape = 'u8[40960]{0}', space=vmem, size = 0xa000, scoped, tag = 'input window, operand 2, single buffered']
    #allocation8 [shape = 's32[1]{0}', space=sflag, size = 0x4, scoped, tag = 'scoped memory for tpu_custom_call.1']
    #allocation9 [shape = 'u8[81920]{0}', space=vmem, size = 0x14000, scoped, tag = 'output window, operand 0']
    %12 = vsyncpa [#allocation5], 0
    %13 = vsyncpa [#allocation8], 0
    %14 = vsyncpa [#allocation6], 0
    %s15 = scalar_lea.sflag [#allocation6], 1
    %16 = vsyncpa %s15, 0
    loop: start=0, step=1, limit=4
    $region2: #{tpu_custom_call.1} parent=1 // loop_pre_header
      _
    $region3: #{tpu_custom_call.1} parent=1 // loop_header
      %s18 = sphi 0, %s22
      %p19 = scmp.ge.s32.totalorder %s18, 4
      %s25 = sphi 0, %s37
      %s26 = sphi 0, %s33
      %s27 = sphi 0, %s25
      %s28 = sphi 0, %s26
      %s29 = sphi 0, %s27
      %s30 = sphi 0, %s28
      %s38 = sphi 0, %s38
      %s40 = sphi 0, %s38
      %s41 = sphi 0, %s40
      %s55 = sphi 0, %s41
      %s61 = sphi 0, %s63
      %s64 = sphi 0, %s61
      %s65 = sphi 0, %s64
      %s81 = sphi 0, %s65
      %s89 = sphi 0, %s91
      %s92 = sphi 0, %s89
      %s93 = sphi 0, %s92
      %s109 = sphi 0, %s93
    $region4: #{tpu_custom_call.1} parent=1 // loop_header_branch
      %21 = sbr.rel (%p19) target = $region8
    $region5: #{tpu_custom_call.1} parent=1 // loop_body
      %s23 = ssub.s32 %s18, 1
      %s24 = ssub.s32 %s18, 2
      %s31 = sadd.s32 1, %s26
      %p32 = scmp.ge.s32.totalorder %s31, 1
      %s33 = scalar_select %p32, 0, %s31
      %s34 = sadd.s32 1, %s25
      %s35 = scalar_select %p32, %s34, %s25
      %p36 = scmp.ge.s32.totalorder %s35, 2
      %s37 = scalar_select %p36, 0, %s35
      %s39 = sadd.s32 %s38, 1
      %p42 = scmp.eq.s32.totalorder %s18, 1
      %p43 = scmp.ne.s32.totalorder %s38, %s40
      %p44 = scmp.eq.s32.totalorder %s18, 0
      %p45 = por %p43, %p44
      %p46 = scmp.ne.s32.totalorder %s38, %s40
      %p47 = scmp.eq.s32.totalorder %s23, 1
      %p48 = por %p46, %p47
      %p49 = scmp.ne.s32.totalorder %s40, %s41
      %p50 = scmp.eq.s32.totalorder %s23, 0
      %p51 = por %p49, %p50
      %p52 = scmp.ne.s32.totalorder %s40, %s41
      %p53 = scmp.eq.s32.totalorder %s24, 1
      %p54 = por %p52, %p53
      %p56 = scmp.ne.s32.totalorder %s41, %s55
      %p57 = scmp.eq.s32.totalorder %s24, 0
      %p58 = por %p56, %p57
      %s59 = ssub.s32 %s26, %s33
      %p60 = scmp.eq.s32.totalorder %s59, 0
      %s62 = sadd.s32 %s61, 1
      %s63 = scalar_select %p60, %s61, %s62
      %p66 = pneg %p60
      %p67 = scmp.eq.s32.totalorder %s18, 1
      %p68 = por %p66, %p67
      %p69 = scmp.ne.s32.totalorder %s61, %s64
      %p70 = scmp.eq.s32.totalorder %s18, 0
      %p71 = por %p69, %p70
      %p72 = scmp.ne.s32.totalorder %s61, %s64
      %p73 = scmp.eq.s32.totalorder %s23, 1
      %p74 = por %p72, %p73
      %p75 = scmp.ne.s32.totalorder %s64, %s65
      %p76 = scmp.eq.s32.totalorder %s23, 0
      %p77 = por %p75, %p76
      %p78 = scmp.ne.s32.totalorder %s64, %s65
      %p79 = scmp.eq.s32.totalorder %s24, 1
      %p80 = por %p78, %p79
      %p82 = scmp.ne.s32.totalorder %s65, %s81
      %p83 = scmp.eq.s32.totalorder %s24, 0
      %p84 = por %p82, %p83
      %s85 = ssub.s32 %s25, %s37
      %s86 = ssub.s32 %s26, %s33
      %s87 = sor.u32 %s85, %s86
      %p88 = scmp.eq.s32.totalorder %s87, 0
      %s90 = sadd.s32 %s89, 1
      %s91 = scalar_select %p88, %s89, %s90
      %p94 = pneg %p88
      %p95 = scmp.eq.s32.totalorder %s18, 1
      %p96 = por %p94, %p95
      %p97 = scmp.ne.s32.totalorder %s89, %s92
      %p98 = scmp.eq.s32.totalorder %s18, 0
      %p99 = por %p97, %p98
      %p100 = scmp.ne.s32.totalorder %s89, %s92
      %p101 = scmp.eq.s32.totalorder %s23, 1
      %p102 = por %p100, %p101
      %p103 = scmp.ne.s32.totalorder %s92, %s93
      %p104 = scmp.eq.s32.totalorder %s23, 0
      %p105 = por %p103, %p104
      %p106 = scmp.ne.s32.totalorder %s92, %s93
      %p107 = scmp.eq.s32.totalorder %s24, 1
      %p108 = por %p106, %p107
      %p110 = scmp.ne.s32.totalorder %s93, %s109
      %p111 = scmp.eq.s32.totalorder %s24, 0
      %p112 = por %p110, %p111
      %p113 = scmp.le.s32.totalorder 1, %s18
      %p114 = scmp.lt.s32.totalorder %s18, 3
      %p115 = pnand %p113, %p114
      %p116 = pneg %p115
      // Predicated region
      $region9: #{tpu_custom_call.1} parent=5 // pred_check
        _
      $region10: #{tpu_custom_call.1} parent=5 // pred_check_branch
        %118 = sbr.rel (%p115) target = $region12
      $region11: #{tpu_custom_call.1} parent=5 // pred_region
        %s119 = ssub.s32 %s18, 1
        // Predicated region
        $region13: #{tpu_custom_call.1} parent=11 // pred_check
          %p120 = pneg %p51
        $region14: #{tpu_custom_call.1} parent=11 // pred_check_branch
          %122 = sbr.rel (%p120) target = $region16
        $region15: #{tpu_custom_call.1} parent=11 // pred_region
          %s124 = ssub.s32 160000, 160000
          %125 = vsyncadd [#allocation5], %s124
          %s126 = sshll.u32 [#allocation4], 4
          %s127 = int_to_ptr.vmem [resolvable:$true] %s126
          %132 = dma.hbm_to_vmem [thread:$0]  %s1, 160000, %s127, [#allocation5], 128, 128, 8
        $region16: #{tpu_custom_call.1} parent=11 // pred_fallthru
          _
        // Predicated region
        $region17: #{tpu_custom_call.1} parent=11 // pred_check
          %p133 = pneg %p77
        $region18: #{tpu_custom_call.1} parent=11 // pred_check_branch
          %135 = sbr.rel (%p133) target = $region20
        $region19: #{tpu_custom_call.1} parent=11 // pred_region
          %s136 = smul.u32 10, %s28
          %s138 = ssub.s32 1280, 1280
          %139 = vsyncadd [#allocation8], %s138
          %s140 = smul.addr %s136, 128
          %s141 = scalar_lea.hbm %s2, %s140
          %s142 = sshll.u32 [#allocation7], 4
          %s143 = int_to_ptr.vmem [resolvable:$true] %s142
          %148 = dma.hbm_to_vmem [thread:$0]  %s141, 1280, %s143, [#allocation8], 128, 128, 8
        $region20: #{tpu_custom_call.1} parent=11 // pred_fallthru
          _
      $region12: #{tpu_custom_call.1} parent=5 // pred_fallthru
        _
      %p149 = scmp.lt.s32.totalorder %s18, 2
      // Predicated region
      $region21: #{tpu_custom_call.1} parent=5 // pred_check
        %p150 = pneg %p149
      $region22: #{tpu_custom_call.1} parent=5 // pred_check_branch
        %152 = sbr.rel (%p150) target = $region24
      $region23: #{tpu_custom_call.1} parent=5 // pred_region
        _
      $region24: #{tpu_custom_call.1} parent=5 // pred_fallthru
        _
      %p153 = scmp.le.s32.totalorder 1, %s18
      %p154 = scmp.lt.s32.totalorder %s18, 3
      %p155 = pnand %p153, %p154
      %p156 = pneg %p155
      // Predicated region
      $region25: #{tpu_custom_call.1} parent=5 // pred_check
        _
      $region26: #{tpu_custom_call.1} parent=5 // pred_check_branch
        %158 = sbr.rel (%p155) target = $region28
      $region27: #{tpu_custom_call.1} parent=5 // pred_region
        %s159 = ssub.s32 %s18, 1
        // Predicated region
        $region29: #{tpu_custom_call.1} parent=27 // pred_check
          %p160 = pneg %p51
        $region30: #{tpu_custom_call.1} parent=27 // pred_check_branch
          %162 = sbr.rel (%p160) target = $region32
        $region31: #{tpu_custom_call.1} parent=27 // pred_region
          %163 = dma.done [#allocation5], 160000
        $region32: #{tpu_custom_call.1} parent=27 // pred_fallthru
          _
        // Predicated region
        $region33: #{tpu_custom_call.1} parent=27 // pred_check
          %p164 = pneg %p77
        $region34: #{tpu_custom_call.1} parent=27 // pred_check_branch
          %166 = sbr.rel (%p164) target = $region36
        $region35: #{tpu_custom_call.1} parent=27 // pred_region
          %167 = dma.done [#allocation8], 1280
        $region36: #{tpu_custom_call.1} parent=27 // pred_fallthru
          _
        %p168 = pneg %p51
        %p169 = pneg %p48
        %p170 = pneg %p77
        %p171 = pneg %p74
        %p172 = pneg %p105
        %p173 = pneg %p102
        %s174 = sand.u32 %s92, 1
        %s175 = scalar_lea.sflag [#allocation6], %s174
        %s176 = sand.u32 %s92, 1
        %s177 = smul.addr %s176, 80
        %s178 = scalar_lea.vmem [#allocation9], %s177
        %s179 = smul.u32 10, %s28
        %s180 = smul.u32 10, %s28
        %s181 = smul.u32 %s27, 80
        %s182 = smul.u32 %s28, 80
        %s183 = sadd.s32 %s181, %s182
        %s184 = sadd.s32 %s183, 0
        %s185 = sld [smem:[#allocation3 + %s184]]
        %s186 = scalar_lea.vmem [#allocation4], %s185
        %v187 = vld [vmem:[%s186] sm:$0x1]
        %s188 = sadd.s32 %s184, 1
        %s189 = sld [smem:[#allocation3 + %s188]]
        %s190 = scalar_lea.vmem [#allocation4], %s189
        %v191 = vld [vmem:[%s190] sm:$0x1]
        %s192 = sadd.s32 %s184, 2
        %s193 = sld [smem:[#allocation3 + %s192]]
        %s194 = scalar_lea.vmem [#allocation4], %s193
        %v195 = vld [vmem:[%s194] sm:$0x1]
        %s196 = sadd.s32 %s184, 3
        %s197 = sld [smem:[#allocation3 + %s196]]
        %s198 = scalar_lea.vmem [#allocation4], %s197
        %v199 = vld [vmem:[%s198] sm:$0x1]
        %s200 = sadd.s32 %s184, 4
        %s201 = sld [smem:[#allocation3 + %s200]]
        %s202 = scalar_lea.vmem [#allocation4], %s201
        %v203 = vld [vmem:[%s202] sm:$0x1]
        %s204 = sadd.s32 %s184, 5
        %s205 = sld [smem:[#allocation3 + %s204]]
        %s206 = scalar_lea.vmem [#allocation4], %s205
        %v207 = vld [vmem:[%s206] sm:$0x1]
        %s208 = sadd.s32 %s184, 6
        %s209 = sld [smem:[#allocation3 + %s208]]
        %s210 = scalar_lea.vmem [#allocation4], %s209
        %v211 = vld [vmem:[%s210] sm:$0x1]
        %s212 = sadd.s32 %s184, 7
        %s213 = sld [smem:[#allocation3 + %s212]]
        %s214 = scalar_lea.vmem [#allocation4], %s213
        %v215 = vld [vmem:[%s214] sm:$0x1]
        %v217 = vrot.slane %v191, 7
        %v220 = vrot.slane %v195, 6
        %v223 = vrot.slane %v199, 5
        %v226 = vrot.slane %v203, 4
        %v229 = vrot.slane %v207, 3
        %v232 = vrot.slane %v211, 2
        %v235 = vrot.slane %v215, 1
        %vm237 = vcmask 1040384
        %v238 = vsel %vm237, %v187, %v217
        %vm239 = vcmask 1041408
        %v240 = vsel %vm239, %v238, %v220
        %vm241 = vcmask 1042432
        %v242 = vsel %vm241, %v240, %v223
        %vm243 = vcmask 1043456
        %v244 = vsel %vm243, %v242, %v226
        %vm245 = vcmask 1044480
        %v246 = vsel %vm245, %v244, %v229
        %vm247 = vcmask 1045504
        %v248 = vsel %vm247, %v246, %v232
        %vm249 = vcmask 1046528
        %v250 = vsel %vm249, %v248, %v235
        %v251 = vld [vmem:[#allocation7] sm:$0xff]
        %v252 = vadd.f32 %v250, %v251
        %253 = vst [vmem:[%s178] sm:$0xff] %v252
        %s254 = sadd.s32 %s183, 8
        %s255 = sld [smem:[#allocation3 + %s254]]
        %s256 = scalar_lea.vmem [#allocation4], %s255
        %v257 = vld [vmem:[%s256] sm:$0x1]
        %s258 = sadd.s32 %s254, 1
        %s259 = sld [smem:[#allocation3 + %s258]]
        %s260 = scalar_lea.vmem [#allocation4], %s259
        %v261 = vld [vmem:[%s260] sm:$0x1]
        %s262 = sadd.s32 %s254, 2
        %s263 = sld [smem:[#allocation3 + %s262]]
        %s264 = scalar_lea.vmem [#allocation4], %s263
        %v265 = vld [vmem:[%s264] sm:$0x1]
        %s266 = sadd.s32 %s254, 3
        %s267 = sld [smem:[#allocation3 + %s266]]
        %s268 = scalar_lea.vmem [#allocation4], %s267
        %v269 = vld [vmem:[%s268] sm:$0x1]
        %s270 = sadd.s32 %s254, 4
        %s271 = sld [smem:[#allocation3 + %s270]]
        %s272 = scalar_lea.vmem [#allocation4], %s271
        %v273 = vld [vmem:[%s272] sm:$0x1]
        %s274 = sadd.s32 %s254, 5
        %s275 = sld [smem:[#allocation3 + %s274]]
        %s276 = scalar_lea.vmem [#allocation4], %s275
        %v277 = vld [vmem:[%s276] sm:$0x1]
        %s278 = sadd.s32 %s254, 6
        %s279 = sld [smem:[#allocation3 + %s278]]
        %s280 = scalar_lea.vmem [#allocation4], %s279
        %v281 = vld [vmem:[%s280] sm:$0x1]
        %s282 = sadd.s32 %s254, 7
        %s283 = sld [smem:[#allocation3 + %s282]]
        %s284 = scalar_lea.vmem [#allocation4], %s283
        %v285 = vld [vmem:[%s284] sm:$0x1]
        %v287 = vrot.slane %v261, 7
        %v290 = vrot.slane %v265, 6
        %v293 = vrot.slane %v269, 5
        %v296 = vrot.slane %v273, 4
        %v299 = vrot.slane %v277, 3
        %v302 = vrot.slane %v281, 2
        %v305 = vrot.slane %v285, 1
        %v307 = vsel %vm237, %v257, %v287
        %v308 = vsel %vm239, %v307, %v290
        %v309 = vsel %vm241, %v308, %v293
        %v310 = vsel %vm243, %v309, %v296
        %v311 = vsel %vm245, %v310, %v299
        %v312 = vsel %vm247, %v311, %v302
        %v313 = vsel %vm249, %v312, %v305
        %s314 = scalar_lea.vmem [#allocation7], 8
        %v315 = vld [vmem:[%s314] sm:$0xff]
        %v316 = vadd.f32 %v313, %v315
        %s317 = scalar_lea.vmem %s178, 8 [#allocation9]
        %318 = vst [vmem:[%s317] sm:$0xff] %v316
        %s319 = sadd.s32 %s183, 16
        %s320 = sld [smem:[#allocation3 + %s319]]
        %s321 = scalar_lea.vmem [#allocation4], %s320
        %v322 = vld [vmem:[%s321] sm:$0x1]
        %s323 = sadd.s32 %s319, 1
        %s324 = sld [smem:[#allocation3 + %s323]]
        %s325 = scalar_lea.vmem [#allocation4], %s324
        %v326 = vld [vmem:[%s325] sm:$0x1]
        %s327 = sadd.s32 %s319, 2
        %s328 = sld [smem:[#allocation3 + %s327]]
        %s329 = scalar_lea.vmem [#allocation4], %s328
        %v330 = vld [vmem:[%s329] sm:$0x1]
        %s331 = sadd.s32 %s319, 3
        %s332 = sld [smem:[#allocation3 + %s331]]
        %s333 = scalar_lea.vmem [#allocation4], %s332
        %v334 = vld [vmem:[%s333] sm:$0x1]
        %s335 = sadd.s32 %s319, 4
        %s336 = sld [smem:[#allocation3 + %s335]]
        %s337 = scalar_lea.vmem [#allocation4], %s336
        %v338 = vld [vmem:[%s337] sm:$0x1]
        %s339 = sadd.s32 %s319, 5
        %s340 = sld [smem:[#allocation3 + %s339]]
        %s341 = scalar_lea.vmem [#allocation4], %s340
        %v342 = vld [vmem:[%s341] sm:$0x1]
        %s343 = sadd.s32 %s319, 6
        %s344 = sld [smem:[#allocation3 + %s343]]
        %s345 = scalar_lea.vmem [#allocation4], %s344
        %v346 = vld [vmem:[%s345] sm:$0x1]
        %s347 = sadd.s32 %s319, 7
        %s348 = sld [smem:[#allocation3 + %s347]]
        %s349 = scalar_lea.vmem [#allocation4], %s348
        %v350 = vld [vmem:[%s349] sm:$0x1]
        %v352 = vrot.slane %v326, 7
        %v355 = vrot.slane %v330, 6
        %v358 = vrot.slane %v334, 5
        %v361 = vrot.slane %v338, 4
        %v364 = vrot.slane %v342, 3
        %v367 = vrot.slane %v346, 2
        %v370 = vrot.slane %v350, 1
        %v372 = vsel %vm237, %v322, %v352
        %v373 = vsel %vm239, %v372, %v355
        %v374 = vsel %vm241, %v373, %v358
        %v375 = vsel %vm243, %v374, %v361
        %v376 = vsel %vm245, %v375, %v364
        %v377 = vsel %vm247, %v376, %v367
        %v378 = vsel %vm249, %v377, %v370
        %s379 = scalar_lea.vmem [#allocation7], 16
        %v380 = vld [vmem:[%s379] sm:$0xff]
        %v381 = vadd.f32 %v378, %v380
        %s382 = scalar_lea.vmem %s178, 16 [#allocation9]
        %383 = vst [vmem:[%s382] sm:$0xff] %v381
        %s384 = sadd.s32 %s183, 24
        %s385 = sld [smem:[#allocation3 + %s384]]
        %s386 = scalar_lea.vmem [#allocation4], %s385
        %v387 = vld [vmem:[%s386] sm:$0x1]
        %s388 = sadd.s32 %s384, 1
        %s389 = sld [smem:[#allocation3 + %s388]]
        %s390 = scalar_lea.vmem [#allocation4], %s389
        %v391 = vld [vmem:[%s390] sm:$0x1]
        %s392 = sadd.s32 %s384, 2
        %s393 = sld [smem:[#allocation3 + %s392]]
        %s394 = scalar_lea.vmem [#allocation4], %s393
        %v395 = vld [vmem:[%s394] sm:$0x1]
        %s396 = sadd.s32 %s384, 3
        %s397 = sld [smem:[#allocation3 + %s396]]
        %s398 = scalar_lea.vmem [#allocation4], %s397
        %v399 = vld [vmem:[%s398] sm:$0x1]
        %s400 = sadd.s32 %s384, 4
        %s401 = sld [smem:[#allocation3 + %s400]]
        %s402 = scalar_lea.vmem [#allocation4], %s401
        %v403 = vld [vmem:[%s402] sm:$0x1]
        %s404 = sadd.s32 %s384, 5
        %s405 = sld [smem:[#allocation3 + %s404]]
        %s406 = scalar_lea.vmem [#allocation4], %s405
        %v407 = vld [vmem:[%s406] sm:$0x1]
        %s408 = sadd.s32 %s384, 6
        %s409 = sld [smem:[#allocation3 + %s408]]
        %s410 = scalar_lea.vmem [#allocation4], %s409
        %v411 = vld [vmem:[%s410] sm:$0x1]
        %s412 = sadd.s32 %s384, 7
        %s413 = sld [smem:[#allocation3 + %s412]]
        %s414 = scalar_lea.vmem [#allocation4], %s413
        %v415 = vld [vmem:[%s414] sm:$0x1]
        %v417 = vrot.slane %v391, 7
        %v420 = vrot.slane %v395, 6
        %v423 = vrot.slane %v399, 5
        %v426 = vrot.slane %v403, 4
        %v429 = vrot.slane %v407, 3
        %v432 = vrot.slane %v411, 2
        %v435 = vrot.slane %v415, 1
        %v437 = vsel %vm237, %v387, %v417
        %v438 = vsel %vm239, %v437, %v420
        %v439 = vsel %vm241, %v438, %v423
        %v440 = vsel %vm243, %v439, %v426
        %v441 = vsel %vm245, %v440, %v429
        %v442 = vsel %vm247, %v441, %v432
        %v443 = vsel %vm249, %v442, %v435
        %s444 = scalar_lea.vmem [#allocation7], 24
        %v445 = vld [vmem:[%s444] sm:$0xff]
        %v446 = vadd.f32 %v443, %v445
        %s447 = scalar_lea.vmem %s178, 24 [#allocation9]
        %448 = vst [vmem:[%s447] sm:$0xff] %v446
        %s449 = sadd.s32 %s183, 32
        %s450 = sld [smem:[#allocation3 + %s449]]
        %s451 = scalar_lea.vmem [#allocation4], %s450
        %v452 = vld [vmem:[%s451] sm:$0x1]
        %s453 = sadd.s32 %s449, 1
        %s454 = sld [smem:[#allocation3 + %s453]]
        %s455 = scalar_lea.vmem [#allocation4], %s454
        %v456 = vld [vmem:[%s455] sm:$0x1]
        %s457 = sadd.s32 %s449, 2
        %s458 = sld [smem:[#allocation3 + %s457]]
        %s459 = scalar_lea.vmem [#allocation4], %s458
        %v460 = vld [vmem:[%s459] sm:$0x1]
        %s461 = sadd.s32 %s449, 3
        %s462 = sld [smem:[#allocation3 + %s461]]
        %s463 = scalar_lea.vmem [#allocation4], %s462
        %v464 = vld [vmem:[%s463] sm:$0x1]
        %s465 = sadd.s32 %s449, 4
        %s466 = sld [smem:[#allocation3 + %s465]]
        %s467 = scalar_lea.vmem [#allocation4], %s466
        %v468 = vld [vmem:[%s467] sm:$0x1]
        %s469 = sadd.s32 %s449, 5
        %s470 = sld [smem:[#allocation3 + %s469]]
        %s471 = scalar_lea.vmem [#allocation4], %s470
        %v472 = vld [vmem:[%s471] sm:$0x1]
        %s473 = sadd.s32 %s449, 6
        %s474 = sld [smem:[#allocation3 + %s473]]
        %s475 = scalar_lea.vmem [#allocation4], %s474
        %v476 = vld [vmem:[%s475] sm:$0x1]
        %s477 = sadd.s32 %s449, 7
        %s478 = sld [smem:[#allocation3 + %s477]]
        %s479 = scalar_lea.vmem [#allocation4], %s478
        %v480 = vld [vmem:[%s479] sm:$0x1]
        %v482 = vrot.slane %v456, 7
        %v485 = vrot.slane %v460, 6
        %v488 = vrot.slane %v464, 5
        %v491 = vrot.slane %v468, 4
        %v494 = vrot.slane %v472, 3
        %v497 = vrot.slane %v476, 2
        %v500 = vrot.slane %v480, 1
        %v502 = vsel %vm237, %v452, %v482
        %v503 = vsel %vm239, %v502, %v485
        %v504 = vsel %vm241, %v503, %v488
        %v505 = vsel %vm243, %v504, %v491
        %v506 = vsel %vm245, %v505, %v494
        %v507 = vsel %vm247, %v506, %v497
        %v508 = vsel %vm249, %v507, %v500
        %s509 = scalar_lea.vmem [#allocation7], 32
        %v510 = vld [vmem:[%s509] sm:$0xff]
        %v511 = vadd.f32 %v508, %v510
        %s512 = scalar_lea.vmem %s178, 32 [#allocation9]
        %513 = vst [vmem:[%s512] sm:$0xff] %v511
        %s514 = sadd.s32 %s183, 40
        %s515 = sld [smem:[#allocation3 + %s514]]
        %s516 = scalar_lea.vmem [#allocation4], %s515
        %v517 = vld [vmem:[%s516] sm:$0x1]
        %s518 = sadd.s32 %s514, 1
        %s519 = sld [smem:[#allocation3 + %s518]]
        %s520 = scalar_lea.vmem [#allocation4], %s519
        %v521 = vld [vmem:[%s520] sm:$0x1]
        %s522 = sadd.s32 %s514, 2
        %s523 = sld [smem:[#allocation3 + %s522]]
        %s524 = scalar_lea.vmem [#allocation4], %s523
        %v525 = vld [vmem:[%s524] sm:$0x1]
        %s526 = sadd.s32 %s514, 3
        %s527 = sld [smem:[#allocation3 + %s526]]
        %s528 = scalar_lea.vmem [#allocation4], %s527
        %v529 = vld [vmem:[%s528] sm:$0x1]
        %s530 = sadd.s32 %s514, 4
        %s531 = sld [smem:[#allocation3 + %s530]]
        %s532 = scalar_lea.vmem [#allocation4], %s531
        %v533 = vld [vmem:[%s532] sm:$0x1]
        %s534 = sadd.s32 %s514, 5
        %s535 = sld [smem:[#allocation3 + %s534]]
        %s536 = scalar_lea.vmem [#allocation4], %s535
        %v537 = vld [vmem:[%s536] sm:$0x1]
        %s538 = sadd.s32 %s514, 6
        %s539 = sld [smem:[#allocation3 + %s538]]
        %s540 = scalar_lea.vmem [#allocation4], %s539
        %v541 = vld [vmem:[%s540] sm:$0x1]
        %s542 = sadd.s32 %s514, 7
        %s543 = sld [smem:[#allocation3 + %s542]]
        %s544 = scalar_lea.vmem [#allocation4], %s543
        %v545 = vld [vmem:[%s544] sm:$0x1]
        %v547 = vrot.slane %v521, 7
        %v550 = vrot.slane %v525, 6
        %v553 = vrot.slane %v529, 5
        %v556 = vrot.slane %v533, 4
        %v559 = vrot.slane %v537, 3
        %v562 = vrot.slane %v541, 2
        %v565 = vrot.slane %v545, 1
        %v567 = vsel %vm237, %v517, %v547
        %v568 = vsel %vm239, %v567, %v550
        %v569 = vsel %vm241, %v568, %v553
        %v570 = vsel %vm243, %v569, %v556
        %v571 = vsel %vm245, %v570, %v559
        %v572 = vsel %vm247, %v571, %v562
        %v573 = vsel %vm249, %v572, %v565
        %s574 = scalar_lea.vmem [#allocation7], 40
        %v575 = vld [vmem:[%s574] sm:$0xff]
        %v576 = vadd.f32 %v573, %v575
        %s577 = scalar_lea.vmem %s178, 40 [#allocation9]
        %578 = vst [vmem:[%s577] sm:$0xff] %v576
        %s579 = sadd.s32 %s183, 48
        %s580 = sld [smem:[#allocation3 + %s579]]
        %s581 = scalar_lea.vmem [#allocation4], %s580
        %v582 = vld [vmem:[%s581] sm:$0x1]
        %s583 = sadd.s32 %s579, 1
        %s584 = sld [smem:[#allocation3 + %s583]]
        %s585 = scalar_lea.vmem [#allocation4], %s584
        %v586 = vld [vmem:[%s585] sm:$0x1]
        %s587 = sadd.s32 %s579, 2
        %s588 = sld [smem:[#allocation3 + %s587]]
        %s589 = scalar_lea.vmem [#allocation4], %s588
        %v590 = vld [vmem:[%s589] sm:$0x1]
        %s591 = sadd.s32 %s579, 3
        %s592 = sld [smem:[#allocation3 + %s591]]
        %s593 = scalar_lea.vmem [#allocation4], %s592
        %v594 = vld [vmem:[%s593] sm:$0x1]
        %s595 = sadd.s32 %s579, 4
        %s596 = sld [smem:[#allocation3 + %s595]]
        %s597 = scalar_lea.vmem [#allocation4], %s596
        %v598 = vld [vmem:[%s597] sm:$0x1]
        %s599 = sadd.s32 %s579, 5
        %s600 = sld [smem:[#allocation3 + %s599]]
        %s601 = scalar_lea.vmem [#allocation4], %s600
        %v602 = vld [vmem:[%s601] sm:$0x1]
        %s603 = sadd.s32 %s579, 6
        %s604 = sld [smem:[#allocation3 + %s603]]
        %s605 = scalar_lea.vmem [#allocation4], %s604
        %v606 = vld [vmem:[%s605] sm:$0x1]
        %s607 = sadd.s32 %s579, 7
        %s608 = sld [smem:[#allocation3 + %s607]]
        %s609 = scalar_lea.vmem [#allocation4], %s608
        %v610 = vld [vmem:[%s609] sm:$0x1]
        %v612 = vrot.slane %v586, 7
        %v615 = vrot.slane %v590, 6
        %v618 = vrot.slane %v594, 5
        %v621 = vrot.slane %v598, 4
        %v624 = vrot.slane %v602, 3
        %v627 = vrot.slane %v606, 2
        %v630 = vrot.slane %v610, 1
        %v632 = vsel %vm237, %v582, %v612
        %v633 = vsel %vm239, %v632, %v615
        %v634 = vsel %vm241, %v633, %v618
        %v635 = vsel %vm243, %v634, %v621
        %v636 = vsel %vm245, %v635, %v624
        %v637 = vsel %vm247, %v636, %v627
        %v638 = vsel %vm249, %v637, %v630
        %s639 = scalar_lea.vmem [#allocation7], 48
        %v640 = vld [vmem:[%s639] sm:$0xff]
        %v641 = vadd.f32 %v638, %v640
        %s642 = scalar_lea.vmem %s178, 48 [#allocation9]
        %643 = vst [vmem:[%s642] sm:$0xff] %v641
        %s644 = sadd.s32 %s183, 56
        %s645 = sld [smem:[#allocation3 + %s644]]
        %s646 = scalar_lea.vmem [#allocation4], %s645
        %v647 = vld [vmem:[%s646] sm:$0x1]
        %s648 = sadd.s32 %s644, 1
        %s649 = sld [smem:[#allocation3 + %s648]]
        %s650 = scalar_lea.vmem [#allocation4], %s649
        %v651 = vld [vmem:[%s650] sm:$0x1]
        %s652 = sadd.s32 %s644, 2
        %s653 = sld [smem:[#allocation3 + %s652]]
        %s654 = scalar_lea.vmem [#allocation4], %s653
        %v655 = vld [vmem:[%s654] sm:$0x1]
        %s656 = sadd.s32 %s644, 3
        %s657 = sld [smem:[#allocation3 + %s656]]
        %s658 = scalar_lea.vmem [#allocation4], %s657
        %v659 = vld [vmem:[%s658] sm:$0x1]
        %s660 = sadd.s32 %s644, 4
        %s661 = sld [smem:[#allocation3 + %s660]]
        %s662 = scalar_lea.vmem [#allocation4], %s661
        %v663 = vld [vmem:[%s662] sm:$0x1]
        %s664 = sadd.s32 %s644, 5
        %s665 = sld [smem:[#allocation3 + %s664]]
        %s666 = scalar_lea.vmem [#allocation4], %s665
        %v667 = vld [vmem:[%s666] sm:$0x1]
        %s668 = sadd.s32 %s644, 6
        %s669 = sld [smem:[#allocation3 + %s668]]
        %s670 = scalar_lea.vmem [#allocation4], %s669
        %v671 = vld [vmem:[%s670] sm:$0x1]
        %s672 = sadd.s32 %s644, 7
        %s673 = sld [smem:[#allocation3 + %s672]]
        %s674 = scalar_lea.vmem [#allocation4], %s673
        %v675 = vld [vmem:[%s674] sm:$0x1]
        %v677 = vrot.slane %v651, 7
        %v680 = vrot.slane %v655, 6
        %v683 = vrot.slane %v659, 5
        %v686 = vrot.slane %v663, 4
        %v689 = vrot.slane %v667, 3
        %v692 = vrot.slane %v671, 2
        %v695 = vrot.slane %v675, 1
        %v697 = vsel %vm237, %v647, %v677
        %v698 = vsel %vm239, %v697, %v680
        %v699 = vsel %vm241, %v698, %v683
        %v700 = vsel %vm243, %v699, %v686
        %v701 = vsel %vm245, %v700, %v689
        %v702 = vsel %vm247, %v701, %v692
        %v703 = vsel %vm249, %v702, %v695
        %s704 = scalar_lea.vmem [#allocation7], 56
        %v705 = vld [vmem:[%s704] sm:$0xff]
        %v706 = vadd.f32 %v703, %v705
        %s707 = scalar_lea.vmem %s178, 56 [#allocation9]
        %708 = vst [vmem:[%s707] sm:$0xff] %v706
        %s709 = sadd.s32 %s183, 64
        %s710 = sld [smem:[#allocation3 + %s709]]
        %s711 = scalar_lea.vmem [#allocation4], %s710
        %v712 = vld [vmem:[%s711] sm:$0x1]
        %s713 = sadd.s32 %s709, 1
        %s714 = sld [smem:[#allocation3 + %s713]]
        %s715 = scalar_lea.vmem [#allocation4], %s714
        %v716 = vld [vmem:[%s715] sm:$0x1]
        %s717 = sadd.s32 %s709, 2
        %s718 = sld [smem:[#allocation3 + %s717]]
        %s719 = scalar_lea.vmem [#allocation4], %s718
        %v720 = vld [vmem:[%s719] sm:$0x1]
        %s721 = sadd.s32 %s709, 3
        %s722 = sld [smem:[#allocation3 + %s721]]
        %s723 = scalar_lea.vmem [#allocation4], %s722
        %v724 = vld [vmem:[%s723] sm:$0x1]
        %s725 = sadd.s32 %s709, 4
        %s726 = sld [smem:[#allocation3 + %s725]]
        %s727 = scalar_lea.vmem [#allocation4], %s726
        %v728 = vld [vmem:[%s727] sm:$0x1]
        %s729 = sadd.s32 %s709, 5
        %s730 = sld [smem:[#allocation3 + %s729]]
        %s731 = scalar_lea.vmem [#allocation4], %s730
        %v732 = vld [vmem:[%s731] sm:$0x1]
        %s733 = sadd.s32 %s709, 6
        %s734 = sld [smem:[#allocation3 + %s733]]
        %s735 = scalar_lea.vmem [#allocation4], %s734
        %v736 = vld [vmem:[%s735] sm:$0x1]
        %s737 = sadd.s32 %s709, 7
        %s738 = sld [smem:[#allocation3 + %s737]]
        %s739 = scalar_lea.vmem [#allocation4], %s738
        %v740 = vld [vmem:[%s739] sm:$0x1]
        %v742 = vrot.slane %v716, 7
        %v745 = vrot.slane %v720, 6
        %v748 = vrot.slane %v724, 5
        %v751 = vrot.slane %v728, 4
        %v754 = vrot.slane %v732, 3
        %v757 = vrot.slane %v736, 2
        %v760 = vrot.slane %v740, 1
        %v762 = vsel %vm237, %v712, %v742
        %v763 = vsel %vm239, %v762, %v745
        %v764 = vsel %vm241, %v763, %v748
        %v765 = vsel %vm243, %v764, %v751
        %v766 = vsel %vm245, %v765, %v754
        %v767 = vsel %vm247, %v766, %v757
        %v768 = vsel %vm249, %v767, %v760
        %s769 = scalar_lea.vmem [#allocation7], 64
        %v770 = vld [vmem:[%s769] sm:$0xff]
        %v771 = vadd.f32 %v768, %v770
        %s772 = scalar_lea.vmem %s178, 64 [#allocation9]
        %773 = vst [vmem:[%s772] sm:$0xff] %v771
        %s774 = sadd.s32 %s183, 72
        %s775 = sld [smem:[#allocation3 + %s774]]
        %s776 = scalar_lea.vmem [#allocation4], %s775
        %v777 = vld [vmem:[%s776] sm:$0x1]
        %s778 = sadd.s32 %s774, 1
        %s779 = sld [smem:[#allocation3 + %s778]]
        %s780 = scalar_lea.vmem [#allocation4], %s779
        %v781 = vld [vmem:[%s780] sm:$0x1]
        %s782 = sadd.s32 %s774, 2
        %s783 = sld [smem:[#allocation3 + %s782]]
        %s784 = scalar_lea.vmem [#allocation4], %s783
        %v785 = vld [vmem:[%s784] sm:$0x1]
        %s786 = sadd.s32 %s774, 3
        %s787 = sld [smem:[#allocation3 + %s786]]
        %s788 = scalar_lea.vmem [#allocation4], %s787
        %v789 = vld [vmem:[%s788] sm:$0x1]
        %s790 = sadd.s32 %s774, 4
        %s791 = sld [smem:[#allocation3 + %s790]]
        %s792 = scalar_lea.vmem [#allocation4], %s791
        %v793 = vld [vmem:[%s792] sm:$0x1]
        %s794 = sadd.s32 %s774, 5
        %s795 = sld [smem:[#allocation3 + %s794]]
        %s796 = scalar_lea.vmem [#allocation4], %s795
        %v797 = vld [vmem:[%s796] sm:$0x1]
        %s798 = sadd.s32 %s774, 6
        %s799 = sld [smem:[#allocation3 + %s798]]
        %s800 = scalar_lea.vmem [#allocation4], %s799
        %v801 = vld [vmem:[%s800] sm:$0x1]
        %s802 = sadd.s32 %s774, 7
        %s803 = sld [smem:[#allocation3 + %s802]]
        %s804 = scalar_lea.vmem [#allocation4], %s803
        %v805 = vld [vmem:[%s804] sm:$0x1]
        %v807 = vrot.slane %v781, 7
        %v810 = vrot.slane %v785, 6
        %v813 = vrot.slane %v789, 5
        %v816 = vrot.slane %v793, 4
        %v819 = vrot.slane %v797, 3
        %v822 = vrot.slane %v801, 2
        %v825 = vrot.slane %v805, 1
        %v827 = vsel %vm237, %v777, %v807
        %v828 = vsel %vm239, %v827, %v810
        %v829 = vsel %vm241, %v828, %v813
        %v830 = vsel %vm243, %v829, %v816
        %v831 = vsel %vm245, %v830, %v819
        %v832 = vsel %vm247, %v831, %v822
        %v833 = vsel %vm249, %v832, %v825
        %s834 = scalar_lea.vmem [#allocation7], 72
        %v835 = vld [vmem:[%s834] sm:$0xff]
        %v836 = vadd.f32 %v833, %v835
        %s837 = scalar_lea.vmem %s178, 72 [#allocation9]
        %838 = vst [vmem:[%s837] sm:$0xff] %v836
        %s839 = sand.u32 %s92, 1
        %s840 = scalar_lea.sflag [#allocation6], %s839
        %s841 = sand.u32 %s92, 1
        %s842 = smul.addr %s841, 80
        %s843 = scalar_lea.vmem [#allocation9], %s842
        // Predicated region
        $region37: #{tpu_custom_call.1} parent=27 // pred_check
          %p844 = pneg %p102
        $region38: #{tpu_custom_call.1} parent=27 // pred_check_branch
          %846 = sbr.rel (%p844) target = $region40
        $region39: #{tpu_custom_call.1} parent=27 // pred_region
          %s847 = smul.u32 10, %s28
          %s849 = ssub.s32 1280, 1280
          %850 = vsyncadd %s840, %s849
          %s851 = smul.addr %s27, 10
          %s852 = sadd.s32 %s847, %s851
          %s853 = smul.addr %s852, 128
          %s854 = scalar_lea.hbm %s3, %s853
          %s855 = sshll.u32 %s843, 4
          %s856 = int_to_ptr.vmem [resolvable:$true] %s855
          %861 = dma.vmem_to_hbm [thread:$0]  %s856, 1280, %s854, %s840, 128, 128, 8
        $region40: #{tpu_custom_call.1} parent=27 // pred_fallthru
          _
      $region28: #{tpu_custom_call.1} parent=5 // pred_fallthru
        _
      %p862 = scmp.le.s32.totalorder 2, %s18
      // Predicated region
      $region41: #{tpu_custom_call.1} parent=5 // pred_check
        %p863 = pneg %p862
      $region42: #{tpu_custom_call.1} parent=5 // pred_check_branch
        %865 = sbr.rel (%p863) target = $region44
      $region43: #{tpu_custom_call.1} parent=5 // pred_region
        %s866 = ssub.s32 %s18, 2
        // Predicated region
        $region45: #{tpu_custom_call.1} parent=43 // pred_check
          %p867 = pneg %p108
        $region46: #{tpu_custom_call.1} parent=43 // pred_check_branch
          %869 = sbr.rel (%p867) target = $region48
        $region47: #{tpu_custom_call.1} parent=43 // pred_region
          %s870 = sand.u32 %s93, 1
          %s871 = scalar_lea.sflag [#allocation6], %s870
          %s872 = sand.u32 %s93, 1
          %s873 = smul.addr %s872, 80
          %s874 = scalar_lea.vmem [#allocation9], %s873
          %875 = dma.done %s871, 1280
        $region48: #{tpu_custom_call.1} parent=43 // pred_fallthru
          _
      $region44: #{tpu_custom_call.1} parent=5 // pred_fallthru
        _
    $region6: #{tpu_custom_call.1} parent=1 // loop_footer
      %s22 = sadd.s32 1, %s18
    $region7: #{tpu_custom_call.1} parent=1 // loop_footer_branch
      %17 = sbr.rel target = $region3
    $region8: #{tpu_custom_call.1} parent=1 // loop_exit
      _
    %876 = vsyncpa [#allocation5], 1
    %s877 = scalar_lea.sflag [#allocation5], 1
    %878 = vsyncpa %s877, 1
    %879 = vsyncpa [#allocation8], 1
    %880 = vsyncpa [#allocation6], 1
    %s881 = scalar_lea.sflag [#allocation6], 1
    %882 = vsyncpa %s881, 1

</llo_original>
